<compile_context>
chip_gen: v6e
topology: v6e:2x2x1
jax: 0.10.0
libtpu: 0.0.40
codegen_flags: <defaults>
</compile_context>

<pallas_src>
import functools
import math

import jax
import jax.numpy as jnp
from jax.experimental import pallas as pl
from jax.experimental.pallas import tpu as pltpu

EPS = 1e-6


def decoder_layer_kernel(
    x_ref, mem_ref, tmask_ref, smask_ref,
    sa_wqkv, sa_bqkv, sa_wo, sa_bo,
    ca_wq, ca_bq, ca_wkv, ca_bkv, ca_wo, ca_bo,
    ff_w1, ff_b1, ff_w2, ff_b2,
    ln_g, ln_b,
    out_ref,
    attn_buf,
    *, H,
):
  BB, T, D = x_ref.shape
  S = mem_ref.shape[1]
  DK = D // H
  scale = 1.0 / math.sqrt(DK)

  # Flatten batch into rows: lane dim stays D, projections/LN/FF run batch-wide.
  x = x_ref[...].reshape(BB * T, D)
  mem = mem_ref[...].reshape(BB * S, D)

  def bf(a):
    return a.astype(jnp.bfloat16)

  def mm(a, w_ref):  # bf16 MXU matmul, f32 accumulation
    return jnp.dot(bf(a), w_ref[...], preferred_element_type=jnp.float32)

  def layer_norm(v, idx):
    g = ln_g[idx:idx + 1, :]
    b = ln_b[idx:idx + 1, :]
    mean = jnp.mean(v, axis=-1, keepdims=True)
    # torch .std() default is unbiased (Bessel-corrected)
    var = jnp.sum((v - mean) ** 2, axis=-1, keepdims=True) * (1.0 / (D - 1))
    inv = 1.0 / (jnp.sqrt(var) + EPS)          # (N,1) only; broadcast-multiply below
    return g * ((v - mean) * inv) + b

  def attention(q_src, kv_src, q_col, k_col, v_col, s_len, mask_ref, wo, bo):
    """Multi-head attention: heads land in attn_buf, single Wo matmul at the end."""
    for b in range(BB):
      mask0 = mask_ref[b] == 0.0               # hoisted compare, reused across heads
      q0, k0 = b * T, b * s_len
      for h in range(H):
        qh = q_src[q0:q0 + T, q_col + h * DK:q_col + (h + 1) * DK]
        kh = kv_src[k0:k0 + s_len, k_col + h * DK:k_col + (h + 1) * DK]
        vh = kv_src[k0:k0 + s_len, v_col + h * DK:v_col + (h + 1) * DK]
        s = jax.lax.dot_general(               # q @ k^T without materializing k.T
            bf(qh), bf(kh), (((1,), (1,)), ((), ())),
            preferred_element_type=jnp.float32) * scale
        s = jnp.where(mask0, -1e9, s)          # masked_fill(mask == 0, -1e9)
        s = s - jnp.max(s, axis=-1, keepdims=True)
        e = jnp.exp(s)
        p = e * pl.reciprocal(jnp.sum(e, axis=-1, keepdims=True), approx=True)
        oh = jnp.dot(bf(p), bf(vh), preferred_element_type=jnp.float32)
        attn_buf[b * T:(b + 1) * T, h * DK:(h + 1) * DK] = oh
    return mm(attn_buf[...], wo) + bo[...]     # one full-width output projection

  # sublayer 0: masked self-attention (fused QKV projection)
  xn = layer_norm(x, 0)
  qkv = mm(xn, sa_wqkv) + sa_bqkv[...]                     # (BB*T, 3D)
  x = x + attention(qkv, qkv, 0, D, 2 * D, T, tmask_ref, sa_wo, sa_bo)

  # sublayer 1: source (cross) attention (fused KV projection)
  xn = layer_norm(x, 1)
  q = mm(xn, ca_wq) + ca_bq[...]                           # (BB*T, D)
  kv = mm(mem, ca_wkv) + ca_bkv[...]                       # (BB*S, 2D)
  x = x + attention(q, kv, 0, 0, D, S, smask_ref, ca_wo, ca_bo)

  # sublayer 2: position-wise feed-forward
  xn = layer_norm(x, 2)
  h1 = jnp.maximum(mm(xn, ff_w1) + ff_b1[...], 0.0)
  x = x + mm(h1, ff_w2) + ff_b2[...]

  out_ref[...] = x.reshape(BB, T, D)


PARAM_ORDER = [
    "sa_wq", "sa_bq", "sa_wk", "sa_bk", "sa_wv", "sa_bv", "sa_wo", "sa_bo",
    "ca_wq", "ca_bq", "ca_wk", "ca_bk", "ca_wv", "ca_bv", "ca_wo", "ca_bo",
    "ff_w1", "ff_b1", "ff_w2", "ff_b2",
    "ln1_g", "ln1_b", "ln2_g", "ln2_b", "ln3_g", "ln3_b",
]

PACKED_ORDER = [
    "sa_wqkv", "sa_bqkv", "sa_wo", "sa_bo",
    "ca_wq", "ca_bq", "ca_wkv", "ca_bkv", "ca_wo", "ca_bo",
    "ff_w1", "ff_b1", "ff_w2", "ff_b2",
    "ln_g", "ln_b",
]


def pack_params(p):
  """Fuse QKV / KV weights, cast matmul weights to bf16, pack LN params."""
  bf = lambda a: a.astype(jnp.bfloat16)
  return {
      "sa_wqkv": bf(jnp.concatenate([p["sa_wq"], p["sa_wk"], p["sa_wv"]], axis=1)),
      "sa_bqkv": jnp.concatenate([p["sa_bq"], p["sa_bk"], p["sa_bv"]], axis=1),
      "sa_wo": bf(p["sa_wo"]), "sa_bo": p["sa_bo"],
      "ca_wq": bf(p["ca_wq"]), "ca_bq": p["ca_bq"],
      "ca_wkv": bf(jnp.concatenate([p["ca_wk"], p["ca_wv"]], axis=1)),
      "ca_bkv": jnp.concatenate([p["ca_bk"], p["ca_bv"]], axis=1),
      "ca_wo": bf(p["ca_wo"]), "ca_bo": p["ca_bo"],
      "ff_w1": bf(p["ff_w1"]), "ff_b1": p["ff_b1"],
      "ff_w2": bf(p["ff_w2"]), "ff_b2": p["ff_b2"],
      "ln_g": jnp.concatenate([p["ln1_g"], p["ln2_g"], p["ln3_g"]], axis=0),
      "ln_b": jnp.concatenate([p["ln1_b"], p["ln2_b"], p["ln3_b"]], axis=0),
  }


def decoder_layer(x, memory, tgt_mask, src_mask, params, *, H, block_b=None):
  B, T, D = x.shape
  S = memory.shape[1]
  if block_b is None:
    block_b = B                 # small batches: whole batch in one grid step
  assert B % block_b == 0
  packed = pack_params(params)
  weights = [packed[n] for n in PACKED_ORDER]

  in_specs = [
      pl.BlockSpec((block_b, T, D), lambda b: (b, 0, 0)),
      pl.BlockSpec((block_b, S, D), lambda b: (b, 0, 0)),
      pl.BlockSpec((block_b, T, T), lambda b: (b, 0, 0)),
      pl.BlockSpec((block_b, T, S), lambda b: (b, 0, 0)),
  ] + [pl.BlockSpec(w.shape, lambda b: (0, 0)) for w in weights]

  return pl.pallas_call(
      functools.partial(decoder_layer_kernel, H=H),
      grid=(B // block_b,),
      in_specs=in_specs,
      out_specs=pl.BlockSpec((block_b, T, D), lambda b: (b, 0, 0)),
      out_shape=jax.ShapeDtypeStruct((B, T, D), jnp.float32),
      scratch_shapes=[pltpu.VMEM((block_b * T, D), jnp.float32)],
      compiler_params=pltpu.CompilerParams(
          dimension_semantics=("parallel",)),      # batch steps are independent
  )(x, memory, tgt_mask, src_mask, *weights)


def init_params(key, D, Dff):
  ks = jax.random.split(key, 32)
  i = iter(range(32))
  p = {}

  def nrm(k, shape, scale=0.1):
    return scale * jax.random.normal(k, shape, jnp.float32)

  for pre in ("sa_", "ca_"):
    for name in ("wq", "wk", "wv", "wo"):
      p[pre + name] = nrm(ks[next(i)], (D, D))
      p[pre + "b" + name[1]] = nrm(ks[next(i)], (1, D), 0.05)
  p["ff_w1"] = nrm(ks[next(i)], (D, Dff))
  p["ff_b1"] = nrm(ks[next(i)], (1, Dff), 0.05)
  p["ff_w2"] = nrm(ks[next(i)], (Dff, D))
  p["ff_b2"] = nrm(ks[next(i)], (1, D), 0.05)
  for n in (1, 2, 3):
    p[f"ln{n}_g"] = 1.0 + nrm(ks[next(i)], (1, D), 0.05)
    p[f"ln{n}_b"] = nrm(ks[next(i)], (1, D), 0.05)
  return p


def reference(x, memory, tmask, smask, p, *, H):
  D = x.shape[-1]
  DK = D // H

  def ln(v, g, b):
    mean = v.mean(-1, keepdims=True)
    var = ((v - mean) ** 2).sum(-1, keepdims=True) / (v.shape[-1] - 1)
    return g * (v - mean) / (jnp.sqrt(var) + EPS) + b

  def mha(q_in, kv_in, mask, pre):
    q = q_in @ p[pre + "wq"] + p[pre + "bq"]
    k = kv_in @ p[pre + "wk"] + p[pre + "bk"]
    v = kv_in @ p[pre + "wv"] + p[pre + "bv"]
    B, T, _ = q.shape
    S = k.shape[1]
    qh = q.reshape(B, T, H, DK).transpose(0, 2, 1, 3)
    kh = k.reshape(B, S, H, DK).transpose(0, 2, 1, 3)
    vh = v.reshape(B, S, H, DK).transpose(0, 2, 1, 3)
    sc = jnp.einsum("bhtd,bhsd->bhts", qh, kh) / math.sqrt(DK)
    sc = jnp.where(mask[:, None, :, :] == 0.0, -1e9, sc)
    pr = jax.nn.softmax(sc, axis=-1)
    o = jnp.einsum("bhts,bhsd->bhtd", pr, vh).transpose(0, 2, 1, 3).reshape(B, T, D)
    return o @ p[pre + "wo"] + p[pre + "bo"]

  xn = ln(x, p["ln1_g"], p["ln1_b"])
  x = x + mha(xn, xn, tmask, "sa_")
  xn = ln(x, p["ln2_g"], p["ln2_b"])
  x = x + mha(xn, memory, smask, "ca_")
  xn = ln(x, p["ln3_g"], p["ln3_b"])
  h1 = jnp.maximum(xn @ p["ff_w1"] + p["ff_b1"], 0.0)
  return x + h1 @ p["ff_w2"] + p["ff_b2"]


if __name__ == "__main__":
  B, T, S, D, Dff, H = 2, 8, 8, 32, 64, 4

  key = jax.random.PRNGKey(0)
  kx, km, kp = jax.random.split(key, 3)
  x = jax.random.normal(kx, (B, T, D), jnp.float32)
  memory = jax.random.normal(km, (B, S, D), jnp.float32)

  # target mask: causal; source mask: pad out last 2 memory slots of batch 1.
  tgt_mask = jnp.broadcast_to(jnp.tril(jnp.ones((T, T), jnp.float32)), (B, T, T))
  src_mask = jnp.ones((B, T, S), jnp.float32).at[1, :, S - 2:].set(0.0)

  params = init_params(kp, D, Dff)

  out = decoder_layer(x, memory, tgt_mask, src_mask, params, H=H)
  out = jax.block_until_ready(out)

  ref = reference(x, memory, tgt_mask, src_mask, params, H=H)
  err = float(jnp.max(jnp.abs(out - ref)))
  assert out.shape == (B, T, D)
  # bf16 MXU inputs -> loosened tolerance vs. the all-f32 reference.
  assert jnp.allclose(out, ref, rtol=5e-2, atol=5e-2), err

  # TODO(synk): dropout is identity (eval mode); training-mode dropout would need pltpu PRNG.
  print("KERNEL_OK")
</pallas_src>

<mosaic_0001>
module attributes {stable_mosaic.version = 11 : i64} {
  func.func @decoder_layer_kernel(%arg0: i32, %arg1: memref<2x8x32xf32, #tpu.memory_space<vmem>>, %arg2: memref<2x8x32xf32, #tpu.memory_space<vmem>>, %arg3: memref<2x8x8xf32, #tpu.memory_space<vmem>>, %arg4: memref<2x8x8xf32, #tpu.memory_space<vmem>>, %arg5: memref<32x96xbf16, #tpu.memory_space<vmem>>, %arg6: memref<1x96xf32, #tpu.memory_space<vmem>>, %arg7: memref<32x32xbf16, #tpu.memory_space<vmem>>, %arg8: memref<1x32xf32, #tpu.memory_space<vmem>>, %arg9: memref<32x32xbf16, #tpu.memory_space<vmem>>, %arg10: memref<1x32xf32, #tpu.memory_space<vmem>>, %arg11: memref<32x64xbf16, #tpu.memory_space<vmem>>, %arg12: memref<1x64xf32, #tpu.memory_space<vmem>>, %arg13: memref<32x32xbf16, #tpu.memory_space<vmem>>, %arg14: memref<1x32xf32, #tpu.memory_space<vmem>>, %arg15: memref<32x64xbf16, #tpu.memory_space<vmem>>, %arg16: memref<1x64xf32, #tpu.memory_space<vmem>>, %arg17: memref<64x32xbf16, #tpu.memory_space<vmem>>, %arg18: memref<1x32xf32, #tpu.memory_space<vmem>>, %arg19: memref<3x32xf32, #tpu.memory_space<vmem>>, %arg20: memref<3x32xf32, #tpu.memory_space<vmem>>, %arg21: memref<2x8x32xf32, #tpu.memory_space<vmem>>, %arg22: memref<16x32xf32, #tpu.memory_space<vmem>>) attributes {dimension_semantics = [#tpu.dimension_semantics<parallel>], iteration_bounds = array<i64: 1>, scalar_prefetch = 0 : i64, scratch_operands = 1 : i64, tpu.core_type = #tpu.core_type<tc>, window_params = [{transform_indices = @transform_0, window_bounds = array<i64: 2, 8, 32>}, {transform_indices = @transform_1, window_bounds = array<i64: 2, 8, 32>}, {transform_indices = @transform_2, window_bounds = array<i64: 2, 8, 8>}, {transform_indices = @transform_3, window_bounds = array<i64: 2, 8, 8>}, {pipeline_mode = #tpu.pipeline_mode<synchronous>, transform_indices = @transform_4, window_bounds = array<i64: 32, 96>}, {pipeline_mode = #tpu.pipeline_mode<synchronous>, transform_indices = @transform_5, window_bounds = array<i64: 1, 96>}, {pipeline_mode = #tpu.pipeline_mode<synchronous>, transform_indices = @transform_6, window_bounds = array<i64: 32, 32>}, {pipeline_mode = #tpu.pipeline_mode<synchronous>, transform_indices = @transform_7, window_bounds = array<i64: 1, 32>}, {pipeline_mode = #tpu.pipeline_mode<synchronous>, transform_indices = @transform_8, window_bounds = array<i64: 32, 32>}, {pipeline_mode = #tpu.pipeline_mode<synchronous>, transform_indices = @transform_9, window_bounds = array<i64: 1, 32>}, {pipeline_mode = #tpu.pipeline_mode<synchronous>, transform_indices = @transform_10, window_bounds = array<i64: 32, 64>}, {pipeline_mode = #tpu.pipeline_mode<synchronous>, transform_indices = @transform_11, window_bounds = array<i64: 1, 64>}, {pipeline_mode = #tpu.pipeline_mode<synchronous>, transform_indices = @transform_12, window_bounds = array<i64: 32, 32>}, {pipeline_mode = #tpu.pipeline_mode<synchronous>, transform_indices = @transform_13, window_bounds = array<i64: 1, 32>}, {pipeline_mode = #tpu.pipeline_mode<synchronous>, transform_indices = @transform_14, window_bounds = array<i64: 32, 64>}, {pipeline_mode = #tpu.pipeline_mode<synchronous>, transform_indices = @transform_15, window_bounds = array<i64: 1, 64>}, {pipeline_mode = #tpu.pipeline_mode<synchronous>, transform_indices = @transform_16, window_bounds = array<i64: 64, 32>}, {pipeline_mode = #tpu.pipeline_mode<synchronous>, transform_indices = @transform_17, window_bounds = array<i64: 1, 32>}, {pipeline_mode = #tpu.pipeline_mode<synchronous>, transform_indices = @transform_18, window_bounds = array<i64: 3, 32>}, {pipeline_mode = #tpu.pipeline_mode<synchronous>, transform_indices = @transform_19, window_bounds = array<i64: 3, 32>}, {transform_indices = @transform_20, window_bounds = array<i64: 2, 8, 32>}]} {
    %c0 = arith.constant 0 : index
    %c0_0 = arith.constant 0 : index
    %c0_1 = arith.constant 0 : index
    %0 = vector.load %arg1[%c0, %c0_0, %c0_1] : memref<2x8x32xf32, #tpu.memory_space<vmem>>, vector<2x8x32xf32>
    %1 = vector.shape_cast %0 : vector<2x8x32xf32> to vector<16x32xf32>
    %c0_2 = arith.constant 0 : index
    %c0_3 = arith.constant 0 : index
    %c0_4 = arith.constant 0 : index
    %2 = vector.load %arg2[%c0_2, %c0_3, %c0_4] : memref<2x8x32xf32, #tpu.memory_space<vmem>>, vector<2x8x32xf32>
    %3 = vector.shape_cast %2 : vector<2x8x32xf32> to vector<16x32xf32>
    %c0_5 = arith.constant 0 : index
    %c0_6 = arith.constant 0 : index
    %4 = vector.load %arg19[%c0_5, %c0_6] : memref<3x32xf32, #tpu.memory_space<vmem>>, vector<1x32xf32>
    %c0_7 = arith.constant 0 : index
    %c0_8 = arith.constant 0 : index
    %5 = vector.load %arg20[%c0_7, %c0_8] : memref<3x32xf32, #tpu.memory_space<vmem>>, vector<1x32xf32>
    %cst = arith.constant dense<0.000000e+00> : vector<16xf32>
    %6 = vector.multi_reduction <add>, %1, %cst [1] : vector<16x32xf32> to vector<16xf32>
    %7 = vector.shape_cast %6 : vector<16xf32> to vector<16x1xf32>
    %cst_9 = arith.constant 3.200000e+01 : f32
    %8 = vector.broadcast %cst_9 : f32 to vector<16x1xf32>
    %9 = arith.divf %7, %8 : vector<16x1xf32>
    %10 = vector.broadcast %9 : vector<16x1xf32> to vector<16x32xf32>
    %11 = arith.subf %1, %10 : vector<16x32xf32>
    %12 = arith.mulf %11, %11 : vector<16x32xf32>
    %cst_10 = arith.constant dense<0.000000e+00> : vector<16xf32>
    %13 = vector.multi_reduction <add>, %12, %cst_10 [1] : vector<16x32xf32> to vector<16xf32>
    %14 = vector.shape_cast %13 : vector<16xf32> to vector<16x1xf32>
    %cst_11 = arith.constant 0.0322580636 : f32
    %15 = vector.broadcast %cst_11 : f32 to vector<16x1xf32>
    %16 = arith.mulf %14, %15 : vector<16x1xf32>
    %17 = math.sqrt %16 : vector<16x1xf32>
    %cst_12 = arith.constant 9.99999997E-7 : f32
    %18 = vector.broadcast %cst_12 : f32 to vector<16x1xf32>
    %19 = arith.addf %17, %18 : vector<16x1xf32>
    %cst_13 = arith.constant 1.000000e+00 : f32
    %20 = vector.broadcast %cst_13 : f32 to vector<16x1xf32>
    %21 = arith.divf %20, %19 : vector<16x1xf32>
    %22 = vector.broadcast %9 : vector<16x1xf32> to vector<16x32xf32>
    %23 = arith.subf %1, %22 : vector<16x32xf32>
    %24 = vector.broadcast %21 : vector<16x1xf32> to vector<16x32xf32>
    %25 = arith.mulf %23, %24 : vector<16x32xf32>
    %26 = vector.broadcast %4 : vector<1x32xf32> to vector<16x32xf32>
    %27 = arith.mulf %26, %25 : vector<16x32xf32>
    %28 = vector.broadcast %5 : vector<1x32xf32> to vector<16x32xf32>
    %29 = arith.addf %27, %28 : vector<16x32xf32>
    %30 = arith.truncf %29 : vector<16x32xf32> to vector<16x32xbf16>
    %c0_14 = arith.constant 0 : index
    %c0_15 = arith.constant 0 : index
    %31 = vector.load %arg5[%c0_14, %c0_15] : memref<32x96xbf16, #tpu.memory_space<vmem>>, vector<32x96xbf16>
    %cst_16 = arith.constant dense<0.000000e+00> : vector<16x96xf32>
    %32 = tpu.matmul %30, %31, %cst_16 {dimension_numbers = #tpu.dot_dimension_numbers<[1], [0], [0], [1], [0, 0, 1, 1], [], []>} : vector<16x32xbf16>, vector<32x96xbf16>, vector<16x96xf32> -> vector<16x96xf32>
    %c0_17 = arith.constant 0 : index
    %c0_18 = arith.constant 0 : index
    %33 = vector.load %arg6[%c0_17, %c0_18] : memref<1x96xf32, #tpu.memory_space<vmem>>, vector<1x96xf32>
    %34 = vector.broadcast %33 : vector<1x96xf32> to vector<16x96xf32>
    %35 = arith.addf %32, %34 : vector<16x96xf32>
    %c0_19 = arith.constant 0 : index
    %c0_20 = arith.constant 0 : index
    %c0_21 = arith.constant 0 : index
    %36 = vector.load %arg3[%c0_19, %c0_20, %c0_21] : memref<2x8x8xf32, #tpu.memory_space<vmem>>, vector<1x8x8xf32>
    %37 = vector.shape_cast %36 : vector<1x8x8xf32> to vector<8x8xf32>
    %cst_22 = arith.constant 0.000000e+00 : f32
    %38 = vector.broadcast %cst_22 : f32 to vector<8x8xf32>
    %39 = arith.cmpf oeq, %37, %38 : vector<8x8xf32>
    %40 = vector.extract_strided_slice %35 {offsets = [0, 0], sizes = [8, 8], strides = [1, 1]} : vector<16x96xf32> to vector<8x8xf32>
    %41 = vector.extract_strided_slice %35 {offsets = [0, 32], sizes = [8, 8], strides = [1, 1]} : vector<16x96xf32> to vector<8x8xf32>
    %42 = vector.extract_strided_slice %35 {offsets = [0, 64], sizes = [8, 8], strides = [1, 1]} : vector<16x96xf32> to vector<8x8xf32>
    %43 = arith.truncf %40 : vector<8x8xf32> to vector<8x8xbf16>
    %44 = arith.truncf %41 : vector<8x8xf32> to vector<8x8xbf16>
    %cst_23 = arith.constant dense<0.000000e+00> : vector<8x8xf32>
    %45 = tpu.matmul %43, %44, %cst_23 {dimension_numbers = #tpu.dot_dimension_numbers<[1], [1], [0], [0], [0, 0, 1, 0], [], []>} : vector<8x8xbf16>, vector<8x8xbf16>, vector<8x8xf32> -> vector<8x8xf32>
    %cst_24 = arith.constant 0.353553385 : f32
    %46 = vector.broadcast %cst_24 : f32 to vector<8x8xf32>
    %47 = arith.mulf %45, %46 : vector<8x8xf32>
    %cst_25 = arith.constant -1.000000e+09 : f32
    %48 = vector.broadcast %cst_25 : f32 to vector<8x8xf32>
    %49 = arith.select %39, %48, %47 : vector<8x8xi1>, vector<8x8xf32>
    %cst_26 = arith.constant dense<0xFF800000> : vector<8xf32>
    %50 = vector.multi_reduction <maximumf>, %49, %cst_26 [1] : vector<8x8xf32> to vector<8xf32>
    %51 = vector.shape_cast %50 : vector<8xf32> to vector<8x1xf32>
    %52 = vector.broadcast %51 : vector<8x1xf32> to vector<8x8xf32>
    %53 = arith.subf %49, %52 : vector<8x8xf32>
    %54 = math.exp %53 : vector<8x8xf32>
    %cst_27 = arith.constant dense<0.000000e+00> : vector<8xf32>
    %55 = vector.multi_reduction <add>, %54, %cst_27 [1] : vector<8x8xf32> to vector<8xf32>
    %56 = vector.shape_cast %55 : vector<8xf32> to vector<8x1xf32>
    %57 = tpu.reciprocal %56 {approx = true} : vector<8x1xf32> -> vector<8x1xf32>
    %58 = vector.broadcast %57 : vector<8x1xf32> to vector<8x8xf32>
    %59 = arith.mulf %54, %58 : vector<8x8xf32>
    %60 = arith.truncf %59 : vector<8x8xf32> to vector<8x8xbf16>
    %61 = arith.truncf %42 : vector<8x8xf32> to vector<8x8xbf16>
    %cst_28 = arith.constant dense<0.000000e+00> : vector<8x8xf32>
    %62 = tpu.matmul %60, %61, %cst_28 {dimension_numbers = #tpu.dot_dimension_numbers<[1], [0], [0], [1], [0, 0, 1, 1], [], []>} : vector<8x8xbf16>, vector<8x8xbf16>, vector<8x8xf32> -> vector<8x8xf32>
    %c0_29 = arith.constant 0 : index
    %c0_30 = arith.constant 0 : index
    %63 = vector.load %arg22[%c0_29, %c0_30] : memref<16x32xf32, #tpu.memory_space<vmem>>, vector<8x8xf32>
    tpu.vector_store %arg22[%c0_29, %c0_30], %62 {strides = array<i32>} : memref<16x32xf32, #tpu.memory_space<vmem>>, vector<8x8xf32>,
    %64 = vector.extract_strided_slice %35 {offsets = [0, 8], sizes = [8, 8], strides = [1, 1]} : vector<16x96xf32> to vector<8x8xf32>
    %65 = vector.extract_strided_slice %35 {offsets = [0, 40], sizes = [8, 8], strides = [1, 1]} : vector<16x96xf32> to vector<8x8xf32>
    %66 = vector.extract_strided_slice %35 {offsets = [0, 72], sizes = [8, 8], strides = [1, 1]} : vector<16x96xf32> to vector<8x8xf32>
    %67 = arith.truncf %64 : vector<8x8xf32> to vector<8x8xbf16>
    %68 = arith.truncf %65 : vector<8x8xf32> to vector<8x8xbf16>
    %cst_31 = arith.constant dense<0.000000e+00> : vector<8x8xf32>
    %69 = tpu.matmul %67, %68, %cst_31 {dimension_numbers = #tpu.dot_dimension_numbers<[1], [1], [0], [0], [0, 0, 1, 0], [], []>} : vector<8x8xbf16>, vector<8x8xbf16>, vector<8x8xf32> -> vector<8x8xf32>
    %cst_32 = arith.constant 0.353553385 : f32
    %70 = vector.broadcast %cst_32 : f32 to vector<8x8xf32>
    %71 = arith.mulf %69, %70 : vector<8x8xf32>
    %cst_33 = arith.constant -1.000000e+09 : f32
    %72 = vector.broadcast %cst_33 : f32 to vector<8x8xf32>
    %73 = arith.select %39, %72, %71 : vector<8x8xi1>, vector<8x8xf32>
    %cst_34 = arith.constant dense<0xFF800000> : vector<8xf32>
    %74 = vector.multi_reduction <maximumf>, %73, %cst_34 [1] : vector<8x8xf32> to vector<8xf32>
    %75 = vector.shape_cast %74 : vector<8xf32> to vector<8x1xf32>
    %76 = vector.broadcast %75 : vector<8x1xf32> to vector<8x8xf32>
    %77 = arith.subf %73, %76 : vector<8x8xf32>
    %78 = math.exp %77 : vector<8x8xf32>
    %cst_35 = arith.constant dense<0.000000e+00> : vector<8xf32>
    %79 = vector.multi_reduction <add>, %78, %cst_35 [1] : vector<8x8xf32> to vector<8xf32>
    %80 = vector.shape_cast %79 : vector<8xf32> to vector<8x1xf32>
    %81 = tpu.reciprocal %80 {approx = true} : vector<8x1xf32> -> vector<8x1xf32>
    %82 = vector.broadcast %81 : vector<8x1xf32> to vector<8x8xf32>
    %83 = arith.mulf %78, %82 : vector<8x8xf32>
    %84 = arith.truncf %83 : vector<8x8xf32> to vector<8x8xbf16>
    %85 = arith.truncf %66 : vector<8x8xf32> to vector<8x8xbf16>
    %cst_36 = arith.constant dense<0.000000e+00> : vector<8x8xf32>
    %86 = tpu.matmul %84, %85, %cst_36 {dimension_numbers = #tpu.dot_dimension_numbers<[1], [0], [0], [1], [0, 0, 1, 1], [], []>} : vector<8x8xbf16>, vector<8x8xbf16>, vector<8x8xf32> -> vector<8x8xf32>
    %c0_37 = arith.constant 0 : index
    %c8 = arith.constant 8 : index
    %87 = vector.load %arg22[%c0_37, %c8] : memref<16x32xf32, #tpu.memory_space<vmem>>, vector<8x8xf32>
    tpu.vector_store %arg22[%c0_37, %c8], %86 {strides = array<i32>} : memref<16x32xf32, #tpu.memory_space<vmem>>, vector<8x8xf32>,
    %88 = vector.extract_strided_slice %35 {offsets = [0, 16], sizes = [8, 8], strides = [1, 1]} : vector<16x96xf32> to vector<8x8xf32>
    %89 = vector.extract_strided_slice %35 {offsets = [0, 48], sizes = [8, 8], strides = [1, 1]} : vector<16x96xf32> to vector<8x8xf32>
    %90 = vector.extract_strided_slice %35 {offsets = [0, 80], sizes = [8, 8], strides = [1, 1]} : vector<16x96xf32> to vector<8x8xf32>
    %91 = arith.truncf %88 : vector<8x8xf32> to vector<8x8xbf16>
    %92 = arith.truncf %89 : vector<8x8xf32> to vector<8x8xbf16>
    %cst_38 = arith.constant dense<0.000000e+00> : vector<8x8xf32>
    %93 = tpu.matmul %91, %92, %cst_38 {dimension_numbers = #tpu.dot_dimension_numbers<[1], [1], [0], [0], [0, 0, 1, 0], [], []>} : vector<8x8xbf16>, vector<8x8xbf16>, vector<8x8xf32> -> vector<8x8xf32>
    %cst_39 = arith.constant 0.353553385 : f32
    %94 = vector.broadcast %cst_39 : f32 to vector<8x8xf32>
    %95 = arith.mulf %93, %94 : vector<8x8xf32>
    %cst_40 = arith.constant -1.000000e+09 : f32
    %96 = vector.broadcast %cst_40 : f32 to vector<8x8xf32>
    %97 = arith.select %39, %96, %95 : vector<8x8xi1>, vector<8x8xf32>
    %cst_41 = arith.constant dense<0xFF800000> : vector<8xf32>
    %98 = vector.multi_reduction <maximumf>, %97, %cst_41 [1] : vector<8x8xf32> to vector<8xf32>
    %99 = vector.shape_cast %98 : vector<8xf32> to vector<8x1xf32>
    %100 = vector.broadcast %99 : vector<8x1xf32> to vector<8x8xf32>
    %101 = arith.subf %97, %100 : vector<8x8xf32>
    %102 = math.exp %101 : vector<8x8xf32>
    %cst_42 = arith.constant dense<0.000000e+00> : vector<8xf32>
    %103 = vector.multi_reduction <add>, %102, %cst_42 [1] : vector<8x8xf32> to vector<8xf32>
    %104 = vector.shape_cast %103 : vector<8xf32> to vector<8x1xf32>
    %105 = tpu.reciprocal %104 {approx = true} : vector<8x1xf32> -> vector<8x1xf32>
    %106 = vector.broadcast %105 : vector<8x1xf32> to vector<8x8xf32>
    %107 = arith.mulf %102, %106 : vector<8x8xf32>
    %108 = arith.truncf %107 : vector<8x8xf32> to vector<8x8xbf16>
    %109 = arith.truncf %90 : vector<8x8xf32> to vector<8x8xbf16>
    %cst_43 = arith.constant dense<0.000000e+00> : vector<8x8xf32>
    %110 = tpu.matmul %108, %109, %cst_43 {dimension_numbers = #tpu.dot_dimension_numbers<[1], [0], [0], [1], [0, 0, 1, 1], [], []>} : vector<8x8xbf16>, vector<8x8xbf16>, vector<8x8xf32> -> vector<8x8xf32>
    %c0_44 = arith.constant 0 : index
    %c16 = arith.constant 16 : index
    %111 = vector.load %arg22[%c0_44, %c16] : memref<16x32xf32, #tpu.memory_space<vmem>>, vector<8x8xf32>
    tpu.vector_store %arg22[%c0_44, %c16], %110 {strides = array<i32>} : memref<16x32xf32, #tpu.memory_space<vmem>>, vector<8x8xf32>,
    %112 = vector.extract_strided_slice %35 {offsets = [0, 24], sizes = [8, 8], strides = [1, 1]} : vector<16x96xf32> to vector<8x8xf32>
    %113 = vector.extract_strided_slice %35 {offsets = [0, 56], sizes = [8, 8], strides = [1, 1]} : vector<16x96xf32> to vector<8x8xf32>
    %114 = vector.extract_strided_slice %35 {offsets = [0, 88], sizes = [8, 8], strides = [1, 1]} : vector<16x96xf32> to vector<8x8xf32>
    %115 = arith.truncf %112 : vector<8x8xf32> to vector<8x8xbf16>
    %116 = arith.truncf %113 : vector<8x8xf32> to vector<8x8xbf16>
    %cst_45 = arith.constant dense<0.000000e+00> : vector<8x8xf32>
    %117 = tpu.matmul %115, %116, %cst_45 {dimension_numbers = #tpu.dot_dimension_numbers<[1], [1], [0], [0], [0, 0, 1, 0], [], []>} : vector<8x8xbf16>, vector<8x8xbf16>, vector<8x8xf32> -> vector<8x8xf32>
    %cst_46 = arith.constant 0.353553385 : f32
    %118 = vector.broadcast %cst_46 : f32 to vector<8x8xf32>
    %119 = arith.mulf %117, %118 : vector<8x8xf32>
    %cst_47 = arith.constant -1.000000e+09 : f32
    %120 = vector.broadcast %cst_47 : f32 to vector<8x8xf32>
    %121 = arith.select %39, %120, %119 : vector<8x8xi1>, vector<8x8xf32>
    %cst_48 = arith.constant dense<0xFF800000> : vector<8xf32>
    %122 = vector.multi_reduction <maximumf>, %121, %cst_48 [1] : vector<8x8xf32> to vector<8xf32>
    %123 = vector.shape_cast %122 : vector<8xf32> to vector<8x1xf32>
    %124 = vector.broadcast %123 : vector<8x1xf32> to vector<8x8xf32>
    %125 = arith.subf %121, %124 : vector<8x8xf32>
    %126 = math.exp %125 : vector<8x8xf32>
    %cst_49 = arith.constant dense<0.000000e+00> : vector<8xf32>
    %127 = vector.multi_reduction <add>, %126, %cst_49 [1] : vector<8x8xf32> to vector<8xf32>
    %128 = vector.shape_cast %127 : vector<8xf32> to vector<8x1xf32>
    %129 = tpu.reciprocal %128 {approx = true} : vector<8x1xf32> -> vector<8x1xf32>
    %130 = vector.broadcast %129 : vector<8x1xf32> to vector<8x8xf32>
    %131 = arith.mulf %126, %130 : vector<8x8xf32>
    %132 = arith.truncf %131 : vector<8x8xf32> to vector<8x8xbf16>
    %133 = arith.truncf %114 : vector<8x8xf32> to vector<8x8xbf16>
    %cst_50 = arith.constant dense<0.000000e+00> : vector<8x8xf32>
    %134 = tpu.matmul %132, %133, %cst_50 {dimension_numbers = #tpu.dot_dimension_numbers<[1], [0], [0], [1], [0, 0, 1, 1], [], []>} : vector<8x8xbf16>, vector<8x8xbf16>, vector<8x8xf32> -> vector<8x8xf32>
    %c0_51 = arith.constant 0 : index
    %c24 = arith.constant 24 : index
    %135 = vector.load %arg22[%c0_51, %c24] : memref<16x32xf32, #tpu.memory_space<vmem>>, vector<8x8xf32>
    tpu.vector_store %arg22[%c0_51, %c24], %134 {strides = array<i32>} : memref<16x32xf32, #tpu.memory_space<vmem>>, vector<8x8xf32>,
    %c1 = arith.constant 1 : index
    %c0_52 = arith.constant 0 : index
    %c0_53 = arith.constant 0 : index
    %136 = vector.load %arg3[%c1, %c0_52, %c0_53] : memref<2x8x8xf32, #tpu.memory_space<vmem>>, vector<1x8x8xf32>
    %137 = vector.shape_cast %136 : vector<1x8x8xf32> to vector<8x8xf32>
    %cst_54 = arith.constant 0.000000e+00 : f32
    %138 = vector.broadcast %cst_54 : f32 to vector<8x8xf32>
    %139 = arith.cmpf oeq, %137, %138 : vector<8x8xf32>
    %140 = vector.extract_strided_slice %35 {offsets = [8, 0], sizes = [8, 8], strides = [1, 1]} : vector<16x96xf32> to vector<8x8xf32>
    %141 = vector.extract_strided_slice %35 {offsets = [8, 32], sizes = [8, 8], strides = [1, 1]} : vector<16x96xf32> to vector<8x8xf32>
    %142 = vector.extract_strided_slice %35 {offsets = [8, 64], sizes = [8, 8], strides = [1, 1]} : vector<16x96xf32> to vector<8x8xf32>
    %143 = arith.truncf %140 : vector<8x8xf32> to vector<8x8xbf16>
    %144 = arith.truncf %141 : vector<8x8xf32> to vector<8x8xbf16>
    %cst_55 = arith.constant dense<0.000000e+00> : vector<8x8xf32>
    %145 = tpu.matmul %143, %144, %cst_55 {dimension_numbers = #tpu.dot_dimension_numbers<[1], [1], [0], [0], [0, 0, 1, 0], [], []>} : vector<8x8xbf16>, vector<8x8xbf16>, vector<8x8xf32> -> vector<8x8xf32>
    %cst_56 = arith.constant 0.353553385 : f32
    %146 = vector.broadcast %cst_56 : f32 to vector<8x8xf32>
    %147 = arith.mulf %145, %146 : vector<8x8xf32>
    %cst_57 = arith.constant -1.000000e+09 : f32
    %148 = vector.broadcast %cst_57 : f32 to vector<8x8xf32>
    %149 = arith.select %139, %148, %147 : vector<8x8xi1>, vector<8x8xf32>
    %cst_58 = arith.constant dense<0xFF800000> : vector<8xf32>
    %150 = vector.multi_reduction <maximumf>, %149, %cst_58 [1] : vector<8x8xf32> to vector<8xf32>
    %151 = vector.shape_cast %150 : vector<8xf32> to vector<8x1xf32>
    %152 = vector.broadcast %151 : vector<8x1xf32> to vector<8x8xf32>
    %153 = arith.subf %149, %152 : vector<8x8xf32>
    %154 = math.exp %153 : vector<8x8xf32>
    %cst_59 = arith.constant dense<0.000000e+00> : vector<8xf32>
    %155 = vector.multi_reduction <add>, %154, %cst_59 [1] : vector<8x8xf32> to vector<8xf32>
    %156 = vector.shape_cast %155 : vector<8xf32> to vector<8x1xf32>
    %157 = tpu.reciprocal %156 {approx = true} : vector<8x1xf32> -> vector<8x1xf32>
    %158 = vector.broadcast %157 : vector<8x1xf32> to vector<8x8xf32>
    %159 = arith.mulf %154, %158 : vector<8x8xf32>
    %160 = arith.truncf %159 : vector<8x8xf32> to vector<8x8xbf16>
    %161 = arith.truncf %142 : vector<8x8xf32> to vector<8x8xbf16>
    %cst_60 = arith.constant dense<0.000000e+00> : vector<8x8xf32>
    %162 = tpu.matmul %160, %161, %cst_60 {dimension_numbers = #tpu.dot_dimension_numbers<[1], [0], [0], [1], [0, 0, 1, 1], [], []>} : vector<8x8xbf16>, vector<8x8xbf16>, vector<8x8xf32> -> vector<8x8xf32>
    %c8_61 = arith.constant 8 : index
    %c0_62 = arith.constant 0 : index
    %163 = vector.load %arg22[%c8_61, %c0_62] : memref<16x32xf32, #tpu.memory_space<vmem>>, vector<8x8xf32>
    tpu.vector_store %arg22[%c8_61, %c0_62], %162 {strides = array<i32>} : memref<16x32xf32, #tpu.memory_space<vmem>>, vector<8x8xf32>,
    %164 = vector.extract_strided_slice %35 {offsets = [8, 8], sizes = [8, 8], strides = [1, 1]} : vector<16x96xf32> to vector<8x8xf32>
    %165 = vector.extract_strided_slice %35 {offsets = [8, 40], sizes = [8, 8], strides = [1, 1]} : vector<16x96xf32> to vector<8x8xf32>
    %166 = vector.extract_strided_slice %35 {offsets = [8, 72], sizes = [8, 8], strides = [1, 1]} : vector<16x96xf32> to vector<8x8xf32>
    %167 = arith.truncf %164 : vector<8x8xf32> to vector<8x8xbf16>
    %168 = arith.truncf %165 : vector<8x8xf32> to vector<8x8xbf16>
    %cst_63 = arith.constant dense<0.000000e+00> : vector<8x8xf32>
    %169 = tpu.matmul %167, %168, %cst_63 {dimension_numbers = #tpu.dot_dimension_numbers<[1], [1], [0], [0], [0, 0, 1, 0], [], []>} : vector<8x8xbf16>, vector<8x8xbf16>, vector<8x8xf32> -> vector<8x8xf32>
    %cst_64 = arith.constant 0.353553385 : f32
    %170 = vector.broadcast %cst_64 : f32 to vector<8x8xf32>
    %171 = arith.mulf %169, %170 : vector<8x8xf32>
    %cst_65 = arith.constant -1.000000e+09 : f32
    %172 = vector.broadcast %cst_65 : f32 to vector<8x8xf32>
    %173 = arith.select %139, %172, %171 : vector<8x8xi1>, vector<8x8xf32>
    %cst_66 = arith.constant dense<0xFF800000> : vector<8xf32>
    %174 = vector.multi_reduction <maximumf>, %173, %cst_66 [1] : vector<8x8xf32> to vector<8xf32>
    %175 = vector.shape_cast %174 : vector<8xf32> to vector<8x1xf32>
    %176 = vector.broadcast %175 : vector<8x1xf32> to vector<8x8xf32>
    %177 = arith.subf %173, %176 : vector<8x8xf32>
    %178 = math.exp %177 : vector<8x8xf32>
    %cst_67 = arith.constant dense<0.000000e+00> : vector<8xf32>
    %179 = vector.multi_reduction <add>, %178, %cst_67 [1] : vector<8x8xf32> to vector<8xf32>
    %180 = vector.shape_cast %179 : vector<8xf32> to vector<8x1xf32>
    %181 = tpu.reciprocal %180 {approx = true} : vector<8x1xf32> -> vector<8x1xf32>
    %182 = vector.broadcast %181 : vector<8x1xf32> to vector<8x8xf32>
    %183 = arith.mulf %178, %182 : vector<8x8xf32>
    %184 = arith.truncf %183 : vector<8x8xf32> to vector<8x8xbf16>
    %185 = arith.truncf %166 : vector<8x8xf32> to vector<8x8xbf16>
    %cst_68 = arith.constant dense<0.000000e+00> : vector<8x8xf32>
    %186 = tpu.matmul %184, %185, %cst_68 {dimension_numbers = #tpu.dot_dimension_numbers<[1], [0], [0], [1], [0, 0, 1, 1], [], []>} : vector<8x8xbf16>, vector<8x8xbf16>, vector<8x8xf32> -> vector<8x8xf32>
    %c8_69 = arith.constant 8 : index
    %c8_70 = arith.constant 8 : index
    %187 = vector.load %arg22[%c8_69, %c8_70] : memref<16x32xf32, #tpu.memory_space<vmem>>, vector<8x8xf32>
    tpu.vector_store %arg22[%c8_69, %c8_70], %186 {strides = array<i32>} : memref<16x32xf32, #tpu.memory_space<vmem>>, vector<8x8xf32>,
    %188 = vector.extract_strided_slice %35 {offsets = [8, 16], sizes = [8, 8], strides = [1, 1]} : vector<16x96xf32> to vector<8x8xf32>
    %189 = vector.extract_strided_slice %35 {offsets = [8, 48], sizes = [8, 8], strides = [1, 1]} : vector<16x96xf32> to vector<8x8xf32>
    %190 = vector.extract_strided_slice %35 {offsets = [8, 80], sizes = [8, 8], strides = [1, 1]} : vector<16x96xf32> to vector<8x8xf32>
    %191 = arith.truncf %188 : vector<8x8xf32> to vector<8x8xbf16>
    %192 = arith.truncf %189 : vector<8x8xf32> to vector<8x8xbf16>
    %cst_71 = arith.constant dense<0.000000e+00> : vector<8x8xf32>
    %193 = tpu.matmul %191, %192, %cst_71 {dimension_numbers = #tpu.dot_dimension_numbers<[1], [1], [0], [0], [0, 0, 1, 0], [], []>} : vector<8x8xbf16>, vector<8x8xbf16>, vector<8x8xf32> -> vector<8x8xf32>
    %cst_72 = arith.constant 0.353553385 : f32
    %194 = vector.broadcast %cst_72 : f32 to vector<8x8xf32>
    %195 = arith.mulf %193, %194 : vector<8x8xf32>
    %cst_73 = arith.constant -1.000000e+09 : f32
    %196 = vector.broadcast %cst_73 : f32 to vector<8x8xf32>
    %197 = arith.select %139, %196, %195 : vector<8x8xi1>, vector<8x8xf32>
    %cst_74 = arith.constant dense<0xFF800000> : vector<8xf32>
    %198 = vector.multi_reduction <maximumf>, %197, %cst_74 [1] : vector<8x8xf32> to vector<8xf32>
    %199 = vector.shape_cast %198 : vector<8xf32> to vector<8x1xf32>
    %200 = vector.broadcast %199 : vector<8x1xf32> to vector<8x8xf32>
    %201 = arith.subf %197, %200 : vector<8x8xf32>
    %202 = math.exp %201 : vector<8x8xf32>
    %cst_75 = arith.constant dense<0.000000e+00> : vector<8xf32>
    %203 = vector.multi_reduction <add>, %202, %cst_75 [1] : vector<8x8xf32> to vector<8xf32>
    %204 = vector.shape_cast %203 : vector<8xf32> to vector<8x1xf32>
    %205 = tpu.reciprocal %204 {approx = true} : vector<8x1xf32> -> vector<8x1xf32>
    %206 = vector.broadcast %205 : vector<8x1xf32> to vector<8x8xf32>
    %207 = arith.mulf %202, %206 : vector<8x8xf32>
    %208 = arith.truncf %207 : vector<8x8xf32> to vector<8x8xbf16>
    %209 = arith.truncf %190 : vector<8x8xf32> to vector<8x8xbf16>
    %cst_76 = arith.constant dense<0.000000e+00> : vector<8x8xf32>
    %210 = tpu.matmul %208, %209, %cst_76 {dimension_numbers = #tpu.dot_dimension_numbers<[1], [0], [0], [1], [0, 0, 1, 1], [], []>} : vector<8x8xbf16>, vector<8x8xbf16>, vector<8x8xf32> -> vector<8x8xf32>
    %c8_77 = arith.constant 8 : index
    %c16_78 = arith.constant 16 : index
    %211 = vector.load %arg22[%c8_77, %c16_78] : memref<16x32xf32, #tpu.memory_space<vmem>>, vector<8x8xf32>
    tpu.vector_store %arg22[%c8_77, %c16_78], %210 {strides = array<i32>} : memref<16x32xf32, #tpu.memory_space<vmem>>, vector<8x8xf32>,
    %212 = vector.extract_strided_slice %35 {offsets = [8, 24], sizes = [8, 8], strides = [1, 1]} : vector<16x96xf32> to vector<8x8xf32>
    %213 = vector.extract_strided_slice %35 {offsets = [8, 56], sizes = [8, 8], strides = [1, 1]} : vector<16x96xf32> to vector<8x8xf32>
    %214 = vector.extract_strided_slice %35 {offsets = [8, 88], sizes = [8, 8], strides = [1, 1]} : vector<16x96xf32> to vector<8x8xf32>
    %215 = arith.truncf %212 : vector<8x8xf32> to vector<8x8xbf16>
    %216 = arith.truncf %213 : vector<8x8xf32> to vector<8x8xbf16>
    %cst_79 = arith.constant dense<0.000000e+00> : vector<8x8xf32>
    %217 = tpu.matmul %215, %216, %cst_79 {dimension_numbers = #tpu.dot_dimension_numbers<[1], [1], [0], [0], [0, 0, 1, 0], [], []>} : vector<8x8xbf16>, vector<8x8xbf16>, vector<8x8xf32> -> vector<8x8xf32>
    %cst_80 = arith.constant 0.353553385 : f32
    %218 = vector.broadcast %cst_80 : f32 to vector<8x8xf32>
    %219 = arith.mulf %217, %218 : vector<8x8xf32>
    %cst_81 = arith.constant -1.000000e+09 : f32
    %220 = vector.broadcast %cst_81 : f32 to vector<8x8xf32>
    %221 = arith.select %139, %220, %219 : vector<8x8xi1>, vector<8x8xf32>
    %cst_82 = arith.constant dense<0xFF800000> : vector<8xf32>
    %222 = vector.multi_reduction <maximumf>, %221, %cst_82 [1] : vector<8x8xf32> to vector<8xf32>
    %223 = vector.shape_cast %222 : vector<8xf32> to vector<8x1xf32>
    %224 = vector.broadcast %223 : vector<8x1xf32> to vector<8x8xf32>
    %225 = arith.subf %221, %224 : vector<8x8xf32>
    %226 = math.exp %225 : vector<8x8xf32>
    %cst_83 = arith.constant dense<0.000000e+00> : vector<8xf32>
    %227 = vector.multi_reduction <add>, %226, %cst_83 [1] : vector<8x8xf32> to vector<8xf32>
    %228 = vector.shape_cast %227 : vector<8xf32> to vector<8x1xf32>
    %229 = tpu.reciprocal %228 {approx = true} : vector<8x1xf32> -> vector<8x1xf32>
    %230 = vector.broadcast %229 : vector<8x1xf32> to vector<8x8xf32>
    %231 = arith.mulf %226, %230 : vector<8x8xf32>
    %232 = arith.truncf %231 : vector<8x8xf32> to vector<8x8xbf16>
    %233 = arith.truncf %214 : vector<8x8xf32> to vector<8x8xbf16>
    %cst_84 = arith.constant dense<0.000000e+00> : vector<8x8xf32>
    %234 = tpu.matmul %232, %233, %cst_84 {dimension_numbers = #tpu.dot_dimension_numbers<[1], [0], [0], [1], [0, 0, 1, 1], [], []>} : vector<8x8xbf16>, vector<8x8xbf16>, vector<8x8xf32> -> vector<8x8xf32>
    %c8_85 = arith.constant 8 : index
    %c24_86 = arith.constant 24 : index
    %235 = vector.load %arg22[%c8_85, %c24_86] : memref<16x32xf32, #tpu.memory_space<vmem>>, vector<8x8xf32>
    tpu.vector_store %arg22[%c8_85, %c24_86], %234 {strides = array<i32>} : memref<16x32xf32, #tpu.memory_space<vmem>>, vector<8x8xf32>,
    %c0_87 = arith.constant 0 : index
    %c0_88 = arith.constant 0 : index
    %236 = vector.load %arg22[%c0_87, %c0_88] : memref<16x32xf32, #tpu.memory_space<vmem>>, vector<16x32xf32>
    %237 = arith.truncf %236 : vector<16x32xf32> to vector<16x32xbf16>
    %c0_89 = arith.constant 0 : index
    %c0_90 = arith.constant 0 : index
    %238 = vector.load %arg7[%c0_89, %c0_90] : memref<32x32xbf16, #tpu.memory_space<vmem>>, vector<32x32xbf16>
    %cst_91 = arith.constant dense<0.000000e+00> : vector<16x32xf32>
    %239 = tpu.matmul %237, %238, %cst_91 {dimension_numbers = #tpu.dot_dimension_numbers<[1], [0], [0], [1], [0, 0, 1, 1], [], []>} : vector<16x32xbf16>, vector<32x32xbf16>, vector<16x32xf32> -> vector<16x32xf32>
    %c0_92 = arith.constant 0 : index
    %c0_93 = arith.constant 0 : index
    %240 = vector.load %arg8[%c0_92, %c0_93] : memref<1x32xf32, #tpu.memory_space<vmem>>, vector<1x32xf32>
    %241 = vector.broadcast %240 : vector<1x32xf32> to vector<16x32xf32>
    %242 = arith.addf %239, %241 : vector<16x32xf32>
    %243 = arith.addf %1, %242 : vector<16x32xf32>
    %c1_94 = arith.constant 1 : index
    %c0_95 = arith.constant 0 : index
    %244 = vector.load %arg19[%c1_94, %c0_95] : memref<3x32xf32, #tpu.memory_space<vmem>>, vector<1x32xf32>
    %c1_96 = arith.constant 1 : index
    %c0_97 = arith.constant 0 : index
    %245 = vector.load %arg20[%c1_96, %c0_97] : memref<3x32xf32, #tpu.memory_space<vmem>>, vector<1x32xf32>
    %cst_98 = arith.constant dense<0.000000e+00> : vector<16xf32>
    %246 = vector.multi_reduction <add>, %243, %cst_98 [1] : vector<16x32xf32> to vector<16xf32>
    %247 = vector.shape_cast %246 : vector<16xf32> to vector<16x1xf32>
    %cst_99 = arith.constant 3.200000e+01 : f32
    %248 = vector.broadcast %cst_99 : f32 to vector<16x1xf32>
    %249 = arith.divf %247, %248 : vector<16x1xf32>
    %250 = vector.broadcast %249 : vector<16x1xf32> to vector<16x32xf32>
    %251 = arith.subf %243, %250 : vector<16x32xf32>
    %252 = arith.mulf %251, %251 : vector<16x32xf32>
    %cst_100 = arith.constant dense<0.000000e+00> : vector<16xf32>
    %253 = vector.multi_reduction <add>, %252, %cst_100 [1] : vector<16x32xf32> to vector<16xf32>
    %254 = vector.shape_cast %253 : vector<16xf32> to vector<16x1xf32>
    %cst_101 = arith.constant 0.0322580636 : f32
    %255 = vector.broadcast %cst_101 : f32 to vector<16x1xf32>
    %256 = arith.mulf %254, %255 : vector<16x1xf32>
    %257 = math.sqrt %256 : vector<16x1xf32>
    %cst_102 = arith.constant 9.99999997E-7 : f32
    %258 = vector.broadcast %cst_102 : f32 to vector<16x1xf32>
    %259 = arith.addf %257, %258 : vector<16x1xf32>
    %cst_103 = arith.constant 1.000000e+00 : f32
    %260 = vector.broadcast %cst_103 : f32 to vector<16x1xf32>
    %261 = arith.divf %260, %259 : vector<16x1xf32>
    %262 = vector.broadcast %249 : vector<16x1xf32> to vector<16x32xf32>
    %263 = arith.subf %243, %262 : vector<16x32xf32>
    %264 = vector.broadcast %261 : vector<16x1xf32> to vector<16x32xf32>
    %265 = arith.mulf %263, %264 : vector<16x32xf32>
    %266 = vector.broadcast %244 : vector<1x32xf32> to vector<16x32xf32>
    %267 = arith.mulf %266, %265 : vector<16x32xf32>
    %268 = vector.broadcast %245 : vector<1x32xf32> to vector<16x32xf32>
    %269 = arith.addf %267, %268 : vector<16x32xf32>
    %270 = arith.truncf %269 : vector<16x32xf32> to vector<16x32xbf16>
    %c0_104 = arith.constant 0 : index
    %c0_105 = arith.constant 0 : index
    %271 = vector.load %arg9[%c0_104, %c0_105] : memref<32x32xbf16, #tpu.memory_space<vmem>>, vector<32x32xbf16>
    %cst_106 = arith.constant dense<0.000000e+00> : vector<16x32xf32>
    %272 = tpu.matmul %270, %271, %cst_106 {dimension_numbers = #tpu.dot_dimension_numbers<[1], [0], [0], [1], [0, 0, 1, 1], [], []>} : vector<16x32xbf16>, vector<32x32xbf16>, vector<16x32xf32> -> vector<16x32xf32>
    %c0_107 = arith.constant 0 : index
    %c0_108 = arith.constant 0 : index
    %273 = vector.load %arg10[%c0_107, %c0_108] : memref<1x32xf32, #tpu.memory_space<vmem>>, vector<1x32xf32>
    %274 = vector.broadcast %273 : vector<1x32xf32> to vector<16x32xf32>
    %275 = arith.addf %272, %274 : vector<16x32xf32>
    %276 = arith.truncf %3 : vector<16x32xf32> to vector<16x32xbf16>
    %c0_109 = arith.constant 0 : index
    %c0_110 = arith.constant 0 : index
    %277 = vector.load %arg11[%c0_109, %c0_110] : memref<32x64xbf16, #tpu.memory_space<vmem>>, vector<32x64xbf16>
    %cst_111 = arith.constant dense<0.000000e+00> : vector<16x64xf32>
    %278 = tpu.matmul %276, %277, %cst_111 {dimension_numbers = #tpu.dot_dimension_numbers<[1], [0], [0], [1], [0, 0, 1, 1], [], []>} : vector<16x32xbf16>, vector<32x64xbf16>, vector<16x64xf32> -> vector<16x64xf32>
    %c0_112 = arith.constant 0 : index
    %c0_113 = arith.constant 0 : index
    %279 = vector.load %arg12[%c0_112, %c0_113] : memref<1x64xf32, #tpu.memory_space<vmem>>, vector<1x64xf32>
    %280 = vector.broadcast %279 : vector<1x64xf32> to vector<16x64xf32>
    %281 = arith.addf %278, %280 : vector<16x64xf32>
    %c0_114 = arith.constant 0 : index
    %c0_115 = arith.constant 0 : index
    %c0_116 = arith.constant 0 : index
    %282 = vector.load %arg4[%c0_114, %c0_115, %c0_116] : memref<2x8x8xf32, #tpu.memory_space<vmem>>, vector<1x8x8xf32>
    %283 = vector.shape_cast %282 : vector<1x8x8xf32> to vector<8x8xf32>
    %cst_117 = arith.constant 0.000000e+00 : f32
    %284 = vector.broadcast %cst_117 : f32 to vector<8x8xf32>
    %285 = arith.cmpf oeq, %283, %284 : vector<8x8xf32>
    %286 = vector.extract_strided_slice %275 {offsets = [0, 0], sizes = [8, 8], strides = [1, 1]} : vector<16x32xf32> to vector<8x8xf32>
    %287 = vector.extract_strided_slice %281 {offsets = [0, 0], sizes = [8, 8], strides = [1, 1]} : vector<16x64xf32> to vector<8x8xf32>
    %288 = vector.extract_strided_slice %281 {offsets = [0, 32], sizes = [8, 8], strides = [1, 1]} : vector<16x64xf32> to vector<8x8xf32>
    %289 = arith.truncf %286 : vector<8x8xf32> to vector<8x8xbf16>
    %290 = arith.truncf %287 : vector<8x8xf32> to vector<8x8xbf16>
    %cst_118 = arith.constant dense<0.000000e+00> : vector<8x8xf32>
    %291 = tpu.matmul %289, %290, %cst_118 {dimension_numbers = #tpu.dot_dimension_numbers<[1], [1], [0], [0], [0, 0, 1, 0], [], []>} : vector<8x8xbf16>, vector<8x8xbf16>, vector<8x8xf32> -> vector<8x8xf32>
    %cst_119 = arith.constant 0.353553385 : f32
    %292 = vector.broadcast %cst_119 : f32 to vector<8x8xf32>
    %293 = arith.mulf %291, %292 : vector<8x8xf32>
    %cst_120 = arith.constant -1.000000e+09 : f32
    %294 = vector.broadcast %cst_120 : f32 to vector<8x8xf32>
    %295 = arith.select %285, %294, %293 : vector<8x8xi1>, vector<8x8xf32>
    %cst_121 = arith.constant dense<0xFF800000> : vector<8xf32>
    %296 = vector.multi_reduction <maximumf>, %295, %cst_121 [1] : vector<8x8xf32> to vector<8xf32>
    %297 = vector.shape_cast %296 : vector<8xf32> to vector<8x1xf32>
    %298 = vector.broadcast %297 : vector<8x1xf32> to vector<8x8xf32>
    %299 = arith.subf %295, %298 : vector<8x8xf32>
    %300 = math.exp %299 : vector<8x8xf32>
    %cst_122 = arith.constant dense<0.000000e+00> : vector<8xf32>
    %301 = vector.multi_reduction <add>, %300, %cst_122 [1] : vector<8x8xf32> to vector<8xf32>
    %302 = vector.shape_cast %301 : vector<8xf32> to vector<8x1xf32>
    %303 = tpu.reciprocal %302 {approx = true} : vector<8x1xf32> -> vector<8x1xf32>
    %304 = vector.broadcast %303 : vector<8x1xf32> to vector<8x8xf32>
    %305 = arith.mulf %300, %304 : vector<8x8xf32>
    %306 = arith.truncf %305 : vector<8x8xf32> to vector<8x8xbf16>
    %307 = arith.truncf %288 : vector<8x8xf32> to vector<8x8xbf16>
    %cst_123 = arith.constant dense<0.000000e+00> : vector<8x8xf32>
    %308 = tpu.matmul %306, %307, %cst_123 {dimension_numbers = #tpu.dot_dimension_numbers<[1], [0], [0], [1], [0, 0, 1, 1], [], []>} : vector<8x8xbf16>, vector<8x8xbf16>, vector<8x8xf32> -> vector<8x8xf32>
    %c0_124 = arith.constant 0 : index
    %c0_125 = arith.constant 0 : index
    %309 = vector.load %arg22[%c0_124, %c0_125] : memref<16x32xf32, #tpu.memory_space<vmem>>, vector<8x8xf32>
    tpu.vector_store %arg22[%c0_124, %c0_125], %308 {strides = array<i32>} : memref<16x32xf32, #tpu.memory_space<vmem>>, vector<8x8xf32>,
    %310 = vector.extract_strided_slice %275 {offsets = [0, 8], sizes = [8, 8], strides = [1, 1]} : vector<16x32xf32> to vector<8x8xf32>
    %311 = vector.extract_strided_slice %281 {offsets = [0, 8], sizes = [8, 8], strides = [1, 1]} : vector<16x64xf32> to vector<8x8xf32>
    %312 = vector.extract_strided_slice %281 {offsets = [0, 40], sizes = [8, 8], strides = [1, 1]} : vector<16x64xf32> to vector<8x8xf32>
    %313 = arith.truncf %310 : vector<8x8xf32> to vector<8x8xbf16>
    %314 = arith.truncf %311 : vector<8x8xf32> to vector<8x8xbf16>
    %cst_126 = arith.constant dense<0.000000e+00> : vector<8x8xf32>
    %315 = tpu.matmul %313, %314, %cst_126 {dimension_numbers = #tpu.dot_dimension_numbers<[1], [1], [0], [0], [0, 0, 1, 0], [], []>} : vector<8x8xbf16>, vector<8x8xbf16>, vector<8x8xf32> -> vector<8x8xf32>
    %cst_127 = arith.constant 0.353553385 : f32
    %316 = vector.broadcast %cst_127 : f32 to vector<8x8xf32>
    %317 = arith.mulf %315, %316 : vector<8x8xf32>
    %cst_128 = arith.constant -1.000000e+09 : f32
    %318 = vector.broadcast %cst_128 : f32 to vector<8x8xf32>
    %319 = arith.select %285, %318, %317 : vector<8x8xi1>, vector<8x8xf32>
    %cst_129 = arith.constant dense<0xFF800000> : vector<8xf32>
    %320 = vector.multi_reduction <maximumf>, %319, %cst_129 [1] : vector<8x8xf32> to vector<8xf32>
    %321 = vector.shape_cast %320 : vector<8xf32> to vector<8x1xf32>
    %322 = vector.broadcast %321 : vector<8x1xf32> to vector<8x8xf32>
    %323 = arith.subf %319, %322 : vector<8x8xf32>
    %324 = math.exp %323 : vector<8x8xf32>
    %cst_130 = arith.constant dense<0.000000e+00> : vector<8xf32>
    %325 = vector.multi_reduction <add>, %324, %cst_130 [1] : vector<8x8xf32> to vector<8xf32>
    %326 = vector.shape_cast %325 : vector<8xf32> to vector<8x1xf32>
    %327 = tpu.reciprocal %326 {approx = true} : vector<8x1xf32> -> vector<8x1xf32>
    %328 = vector.broadcast %327 : vector<8x1xf32> to vector<8x8xf32>
    %329 = arith.mulf %324, %328 : vector<8x8xf32>
    %330 = arith.truncf %329 : vector<8x8xf32> to vector<8x8xbf16>
    %331 = arith.truncf %312 : vector<8x8xf32> to vector<8x8xbf16>
    %cst_131 = arith.constant dense<0.000000e+00> : vector<8x8xf32>
    %332 = tpu.matmul %330, %331, %cst_131 {dimension_numbers = #tpu.dot_dimension_numbers<[1], [0], [0], [1], [0, 0, 1, 1], [], []>} : vector<8x8xbf16>, vector<8x8xbf16>, vector<8x8xf32> -> vector<8x8xf32>
    %c0_132 = arith.constant 0 : index
    %c8_133 = arith.constant 8 : index
    %333 = vector.load %arg22[%c0_132, %c8_133] : memref<16x32xf32, #tpu.memory_space<vmem>>, vector<8x8xf32>
    tpu.vector_store %arg22[%c0_132, %c8_133], %332 {strides = array<i32>} : memref<16x32xf32, #tpu.memory_space<vmem>>, vector<8x8xf32>,
    %334 = vector.extract_strided_slice %275 {offsets = [0, 16], sizes = [8, 8], strides = [1, 1]} : vector<16x32xf32> to vector<8x8xf32>
    %335 = vector.extract_strided_slice %281 {offsets = [0, 16], sizes = [8, 8], strides = [1, 1]} : vector<16x64xf32> to vector<8x8xf32>
    %336 = vector.extract_strided_slice %281 {offsets = [0, 48], sizes = [8, 8], strides = [1, 1]} : vector<16x64xf32> to vector<8x8xf32>
    %337 = arith.truncf %334 : vector<8x8xf32> to vector<8x8xbf16>
    %338 = arith.truncf %335 : vector<8x8xf32> to vector<8x8xbf16>
    %cst_134 = arith.constant dense<0.000000e+00> : vector<8x8xf32>
    %339 = tpu.matmul %337, %338, %cst_134 {dimension_numbers = #tpu.dot_dimension_numbers<[1], [1], [0], [0], [0, 0, 1, 0], [], []>} : vector<8x8xbf16>, vector<8x8xbf16>, vector<8x8xf32> -> vector<8x8xf32>
    %cst_135 = arith.constant 0.353553385 : f32
    %340 = vector.broadcast %cst_135 : f32 to vector<8x8xf32>
    %341 = arith.mulf %339, %340 : vector<8x8xf32>
    %cst_136 = arith.constant -1.000000e+09 : f32
    %342 = vector.broadcast %cst_136 : f32 to vector<8x8xf32>
    %343 = arith.select %285, %342, %341 : vector<8x8xi1>, vector<8x8xf32>
    %cst_137 = arith.constant dense<0xFF800000> : vector<8xf32>
    %344 = vector.multi_reduction <maximumf>, %343, %cst_137 [1] : vector<8x8xf32> to vector<8xf32>
    %345 = vector.shape_cast %344 : vector<8xf32> to vector<8x1xf32>
    %346 = vector.broadcast %345 : vector<8x1xf32> to vector<8x8xf32>
    %347 = arith.subf %343, %346 : vector<8x8xf32>
    %348 = math.exp %347 : vector<8x8xf32>
    %cst_138 = arith.constant dense<0.000000e+00> : vector<8xf32>
    %349 = vector.multi_reduction <add>, %348, %cst_138 [1] : vector<8x8xf32> to vector<8xf32>
    %350 = vector.shape_cast %349 : vector<8xf32> to vector<8x1xf32>
    %351 = tpu.reciprocal %350 {approx = true} : vector<8x1xf32> -> vector<8x1xf32>
    %352 = vector.broadcast %351 : vector<8x1xf32> to vector<8x8xf32>
    %353 = arith.mulf %348, %352 : vector<8x8xf32>
    %354 = arith.truncf %353 : vector<8x8xf32> to vector<8x8xbf16>
    %355 = arith.truncf %336 : vector<8x8xf32> to vector<8x8xbf16>
    %cst_139 = arith.constant dense<0.000000e+00> : vector<8x8xf32>
    %356 = tpu.matmul %354, %355, %cst_139 {dimension_numbers = #tpu.dot_dimension_numbers<[1], [0], [0], [1], [0, 0, 1, 1], [], []>} : vector<8x8xbf16>, vector<8x8xbf16>, vector<8x8xf32> -> vector<8x8xf32>
    %c0_140 = arith.constant 0 : index
    %c16_141 = arith.constant 16 : index
    %357 = vector.load %arg22[%c0_140, %c16_141] : memref<16x32xf32, #tpu.memory_space<vmem>>, vector<8x8xf32>
    tpu.vector_store %arg22[%c0_140, %c16_141], %356 {strides = array<i32>} : memref<16x32xf32, #tpu.memory_space<vmem>>, vector<8x8xf32>,
    %358 = vector.extract_strided_slice %275 {offsets = [0, 24], sizes = [8, 8], strides = [1, 1]} : vector<16x32xf32> to vector<8x8xf32>
    %359 = vector.extract_strided_slice %281 {offsets = [0, 24], sizes = [8, 8], strides = [1, 1]} : vector<16x64xf32> to vector<8x8xf32>
    %360 = vector.extract_strided_slice %281 {offsets = [0, 56], sizes = [8, 8], strides = [1, 1]} : vector<16x64xf32> to vector<8x8xf32>
    %361 = arith.truncf %358 : vector<8x8xf32> to vector<8x8xbf16>
    %362 = arith.truncf %359 : vector<8x8xf32> to vector<8x8xbf16>
    %cst_142 = arith.constant dense<0.000000e+00> : vector<8x8xf32>
    %363 = tpu.matmul %361, %362, %cst_142 {dimension_numbers = #tpu.dot_dimension_numbers<[1], [1], [0], [0], [0, 0, 1, 0], [], []>} : vector<8x8xbf16>, vector<8x8xbf16>, vector<8x8xf32> -> vector<8x8xf32>
    %cst_143 = arith.constant 0.353553385 : f32
    %364 = vector.broadcast %cst_143 : f32 to vector<8x8xf32>
    %365 = arith.mulf %363, %364 : vector<8x8xf32>
    %cst_144 = arith.constant -1.000000e+09 : f32
    %366 = vector.broadcast %cst_144 : f32 to vector<8x8xf32>
    %367 = arith.select %285, %366, %365 : vector<8x8xi1>, vector<8x8xf32>
    %cst_145 = arith.constant dense<0xFF800000> : vector<8xf32>
    %368 = vector.multi_reduction <maximumf>, %367, %cst_145 [1] : vector<8x8xf32> to vector<8xf32>
    %369 = vector.shape_cast %368 : vector<8xf32> to vector<8x1xf32>
    %370 = vector.broadcast %369 : vector<8x1xf32> to vector<8x8xf32>
    %371 = arith.subf %367, %370 : vector<8x8xf32>
    %372 = math.exp %371 : vector<8x8xf32>
    %cst_146 = arith.constant dense<0.000000e+00> : vector<8xf32>
    %373 = vector.multi_reduction <add>, %372, %cst_146 [1] : vector<8x8xf32> to vector<8xf32>
    %374 = vector.shape_cast %373 : vector<8xf32> to vector<8x1xf32>
    %375 = tpu.reciprocal %374 {approx = true} : vector<8x1xf32> -> vector<8x1xf32>
    %376 = vector.broadcast %375 : vector<8x1xf32> to vector<8x8xf32>
    %377 = arith.mulf %372, %376 : vector<8x8xf32>
    %378 = arith.truncf %377 : vector<8x8xf32> to vector<8x8xbf16>
    %379 = arith.truncf %360 : vector<8x8xf32> to vector<8x8xbf16>
    %cst_147 = arith.constant dense<0.000000e+00> : vector<8x8xf32>
    %380 = tpu.matmul %378, %379, %cst_147 {dimension_numbers = #tpu.dot_dimension_numbers<[1], [0], [0], [1], [0, 0, 1, 1], [], []>} : vector<8x8xbf16>, vector<8x8xbf16>, vector<8x8xf32> -> vector<8x8xf32>
    %c0_148 = arith.constant 0 : index
    %c24_149 = arith.constant 24 : index
    %381 = vector.load %arg22[%c0_148, %c24_149] : memref<16x32xf32, #tpu.memory_space<vmem>>, vector<8x8xf32>
    tpu.vector_store %arg22[%c0_148, %c24_149], %380 {strides = array<i32>} : memref<16x32xf32, #tpu.memory_space<vmem>>, vector<8x8xf32>,
    %c1_150 = arith.constant 1 : index
    %c0_151 = arith.constant 0 : index
    %c0_152 = arith.constant 0 : index
    %382 = vector.load %arg4[%c1_150, %c0_151, %c0_152] : memref<2x8x8xf32, #tpu.memory_space<vmem>>, vector<1x8x8xf32>
    %383 = vector.shape_cast %382 : vector<1x8x8xf32> to vector<8x8xf32>
    %cst_153 = arith.constant 0.000000e+00 : f32
    %384 = vector.broadcast %cst_153 : f32 to vector<8x8xf32>
    %385 = arith.cmpf oeq, %383, %384 : vector<8x8xf32>
    %386 = vector.extract_strided_slice %275 {offsets = [8, 0], sizes = [8, 8], strides = [1, 1]} : vector<16x32xf32> to vector<8x8xf32>
    %387 = vector.extract_strided_slice %281 {offsets = [8, 0], sizes = [8, 8], strides = [1, 1]} : vector<16x64xf32> to vector<8x8xf32>
    %388 = vector.extract_strided_slice %281 {offsets = [8, 32], sizes = [8, 8], strides = [1, 1]} : vector<16x64xf32> to vector<8x8xf32>
    %389 = arith.truncf %386 : vector<8x8xf32> to vector<8x8xbf16>
    %390 = arith.truncf %387 : vector<8x8xf32> to vector<8x8xbf16>
    %cst_154 = arith.constant dense<0.000000e+00> : vector<8x8xf32>
    %391 = tpu.matmul %389, %390, %cst_154 {dimension_numbers = #tpu.dot_dimension_numbers<[1], [1], [0], [0], [0, 0, 1, 0], [], []>} : vector<8x8xbf16>, vector<8x8xbf16>, vector<8x8xf32> -> vector<8x8xf32>
    %cst_155 = arith.constant 0.353553385 : f32
    %392 = vector.broadcast %cst_155 : f32 to vector<8x8xf32>
    %393 = arith.mulf %391, %392 : vector<8x8xf32>
    %cst_156 = arith.constant -1.000000e+09 : f32
    %394 = vector.broadcast %cst_156 : f32 to vector<8x8xf32>
    %395 = arith.select %385, %394, %393 : vector<8x8xi1>, vector<8x8xf32>
    %cst_157 = arith.constant dense<0xFF800000> : vector<8xf32>
    %396 = vector.multi_reduction <maximumf>, %395, %cst_157 [1] : vector<8x8xf32> to vector<8xf32>
    %397 = vector.shape_cast %396 : vector<8xf32> to vector<8x1xf32>
    %398 = vector.broadcast %397 : vector<8x1xf32> to vector<8x8xf32>
    %399 = arith.subf %395, %398 : vector<8x8xf32>
    %400 = math.exp %399 : vector<8x8xf32>
    %cst_158 = arith.constant dense<0.000000e+00> : vector<8xf32>
    %401 = vector.multi_reduction <add>, %400, %cst_158 [1] : vector<8x8xf32> to vector<8xf32>
    %402 = vector.shape_cast %401 : vector<8xf32> to vector<8x1xf32>
    %403 = tpu.reciprocal %402 {approx = true} : vector<8x1xf32> -> vector<8x1xf32>
    %404 = vector.broadcast %403 : vector<8x1xf32> to vector<8x8xf32>
    %405 = arith.mulf %400, %404 : vector<8x8xf32>
    %406 = arith.truncf %405 : vector<8x8xf32> to vector<8x8xbf16>
    %407 = arith.truncf %388 : vector<8x8xf32> to vector<8x8xbf16>
    %cst_159 = arith.constant dense<0.000000e+00> : vector<8x8xf32>
    %408 = tpu.matmul %406, %407, %cst_159 {dimension_numbers = #tpu.dot_dimension_numbers<[1], [0], [0], [1], [0, 0, 1, 1], [], []>} : vector<8x8xbf16>, vector<8x8xbf16>, vector<8x8xf32> -> vector<8x8xf32>
    %c8_160 = arith.constant 8 : index
    %c0_161 = arith.constant 0 : index
    %409 = vector.load %arg22[%c8_160, %c0_161] : memref<16x32xf32, #tpu.memory_space<vmem>>, vector<8x8xf32>
    tpu.vector_store %arg22[%c8_160, %c0_161], %408 {strides = array<i32>} : memref<16x32xf32, #tpu.memory_space<vmem>>, vector<8x8xf32>,
    %410 = vector.extract_strided_slice %275 {offsets = [8, 8], sizes = [8, 8], strides = [1, 1]} : vector<16x32xf32> to vector<8x8xf32>
    %411 = vector.extract_strided_slice %281 {offsets = [8, 8], sizes = [8, 8], strides = [1, 1]} : vector<16x64xf32> to vector<8x8xf32>
    %412 = vector.extract_strided_slice %281 {offsets = [8, 40], sizes = [8, 8], strides = [1, 1]} : vector<16x64xf32> to vector<8x8xf32>
    %413 = arith.truncf %410 : vector<8x8xf32> to vector<8x8xbf16>
    %414 = arith.truncf %411 : vector<8x8xf32> to vector<8x8xbf16>
    %cst_162 = arith.constant dense<0.000000e+00> : vector<8x8xf32>
    %415 = tpu.matmul %413, %414, %cst_162 {dimension_numbers = #tpu.dot_dimension_numbers<[1], [1], [0], [0], [0, 0, 1, 0], [], []>} : vector<8x8xbf16>, vector<8x8xbf16>, vector<8x8xf32> -> vector<8x8xf32>
    %cst_163 = arith.constant 0.353553385 : f32
    %416 = vector.broadcast %cst_163 : f32 to vector<8x8xf32>
    %417 = arith.mulf %415, %416 : vector<8x8xf32>
    %cst_164 = arith.constant -1.000000e+09 : f32
    %418 = vector.broadcast %cst_164 : f32 to vector<8x8xf32>
    %419 = arith.select %385, %418, %417 : vector<8x8xi1>, vector<8x8xf32>
    %cst_165 = arith.constant dense<0xFF800000> : vector<8xf32>
    %420 = vector.multi_reduction <maximumf>, %419, %cst_165 [1] : vector<8x8xf32> to vector<8xf32>
    %421 = vector.shape_cast %420 : vector<8xf32> to vector<8x1xf32>
    %422 = vector.broadcast %421 : vector<8x1xf32> to vector<8x8xf32>
    %423 = arith.subf %419, %422 : vector<8x8xf32>
    %424 = math.exp %423 : vector<8x8xf32>
    %cst_166 = arith.constant dense<0.000000e+00> : vector<8xf32>
    %425 = vector.multi_reduction <add>, %424, %cst_166 [1] : vector<8x8xf32> to vector<8xf32>
    %426 = vector.shape_cast %425 : vector<8xf32> to vector<8x1xf32>
    %427 = tpu.reciprocal %426 {approx = true} : vector<8x1xf32> -> vector<8x1xf32>
    %428 = vector.broadcast %427 : vector<8x1xf32> to vector<8x8xf32>
    %429 = arith.mulf %424, %428 : vector<8x8xf32>
    %430 = arith.truncf %429 : vector<8x8xf32> to vector<8x8xbf16>
    %431 = arith.truncf %412 : vector<8x8xf32> to vector<8x8xbf16>
    %cst_167 = arith.constant dense<0.000000e+00> : vector<8x8xf32>
    %432 = tpu.matmul %430, %431, %cst_167 {dimension_numbers = #tpu.dot_dimension_numbers<[1], [0], [0], [1], [0, 0, 1, 1], [], []>} : vector<8x8xbf16>, vector<8x8xbf16>, vector<8x8xf32> -> vector<8x8xf32>
    %c8_168 = arith.constant 8 : index
    %c8_169 = arith.constant 8 : index
    %433 = vector.load %arg22[%c8_168, %c8_169] : memref<16x32xf32, #tpu.memory_space<vmem>>, vector<8x8xf32>
    tpu.vector_store %arg22[%c8_168, %c8_169], %432 {strides = array<i32>} : memref<16x32xf32, #tpu.memory_space<vmem>>, vector<8x8xf32>,
    %434 = vector.extract_strided_slice %275 {offsets = [8, 16], sizes = [8, 8], strides = [1, 1]} : vector<16x32xf32> to vector<8x8xf32>
    %435 = vector.extract_strided_slice %281 {offsets = [8, 16], sizes = [8, 8], strides = [1, 1]} : vector<16x64xf32> to vector<8x8xf32>
    %436 = vector.extract_strided_slice %281 {offsets = [8, 48], sizes = [8, 8], strides = [1, 1]} : vector<16x64xf32> to vector<8x8xf32>
    %437 = arith.truncf %434 : vector<8x8xf32> to vector<8x8xbf16>
    %438 = arith.truncf %435 : vector<8x8xf32> to vector<8x8xbf16>
    %cst_170 = arith.constant dense<0.000000e+00> : vector<8x8xf32>
    %439 = tpu.matmul %437, %438, %cst_170 {dimension_numbers = #tpu.dot_dimension_numbers<[1], [1], [0], [0], [0, 0, 1, 0], [], []>} : vector<8x8xbf16>, vector<8x8xbf16>, vector<8x8xf32> -> vector<8x8xf32>
    %cst_171 = arith.constant 0.353553385 : f32
    %440 = vector.broadcast %cst_171 : f32 to vector<8x8xf32>
    %441 = arith.mulf %439, %440 : vector<8x8xf32>
    %cst_172 = arith.constant -1.000000e+09 : f32
    %442 = vector.broadcast %cst_172 : f32 to vector<8x8xf32>
    %443 = arith.select %385, %442, %441 : vector<8x8xi1>, vector<8x8xf32>
    %cst_173 = arith.constant dense<0xFF800000> : vector<8xf32>
    %444 = vector.multi_reduction <maximumf>, %443, %cst_173 [1] : vector<8x8xf32> to vector<8xf32>
    %445 = vector.shape_cast %444 : vector<8xf32> to vector<8x1xf32>
    %446 = vector.broadcast %445 : vector<8x1xf32> to vector<8x8xf32>
    %447 = arith.subf %443, %446 : vector<8x8xf32>
    %448 = math.exp %447 : vector<8x8xf32>
    %cst_174 = arith.constant dense<0.000000e+00> : vector<8xf32>
    %449 = vector.multi_reduction <add>, %448, %cst_174 [1] : vector<8x8xf32> to vector<8xf32>
    %450 = vector.shape_cast %449 : vector<8xf32> to vector<8x1xf32>
    %451 = tpu.reciprocal %450 {approx = true} : vector<8x1xf32> -> vector<8x1xf32>
    %452 = vector.broadcast %451 : vector<8x1xf32> to vector<8x8xf32>
    %453 = arith.mulf %448, %452 : vector<8x8xf32>
    %454 = arith.truncf %453 : vector<8x8xf32> to vector<8x8xbf16>
    %455 = arith.truncf %436 : vector<8x8xf32> to vector<8x8xbf16>
    %cst_175 = arith.constant dense<0.000000e+00> : vector<8x8xf32>
    %456 = tpu.matmul %454, %455, %cst_175 {dimension_numbers = #tpu.dot_dimension_numbers<[1], [0], [0], [1], [0, 0, 1, 1], [], []>} : vector<8x8xbf16>, vector<8x8xbf16>, vector<8x8xf32> -> vector<8x8xf32>
    %c8_176 = arith.constant 8 : index
    %c16_177 = arith.constant 16 : index
    %457 = vector.load %arg22[%c8_176, %c16_177] : memref<16x32xf32, #tpu.memory_space<vmem>>, vector<8x8xf32>
    tpu.vector_store %arg22[%c8_176, %c16_177], %456 {strides = array<i32>} : memref<16x32xf32, #tpu.memory_space<vmem>>, vector<8x8xf32>,
    %458 = vector.extract_strided_slice %275 {offsets = [8, 24], sizes = [8, 8], strides = [1, 1]} : vector<16x32xf32> to vector<8x8xf32>
    %459 = vector.extract_strided_slice %281 {offsets = [8, 24], sizes = [8, 8], strides = [1, 1]} : vector<16x64xf32> to vector<8x8xf32>
    %460 = vector.extract_strided_slice %281 {offsets = [8, 56], sizes = [8, 8], strides = [1, 1]} : vector<16x64xf32> to vector<8x8xf32>
    %461 = arith.truncf %458 : vector<8x8xf32> to vector<8x8xbf16>
    %462 = arith.truncf %459 : vector<8x8xf32> to vector<8x8xbf16>
    %cst_178 = arith.constant dense<0.000000e+00> : vector<8x8xf32>
    %463 = tpu.matmul %461, %462, %cst_178 {dimension_numbers = #tpu.dot_dimension_numbers<[1], [1], [0], [0], [0, 0, 1, 0], [], []>} : vector<8x8xbf16>, vector<8x8xbf16>, vector<8x8xf32> -> vector<8x8xf32>
    %cst_179 = arith.constant 0.353553385 : f32
    %464 = vector.broadcast %cst_179 : f32 to vector<8x8xf32>
    %465 = arith.mulf %463, %464 : vector<8x8xf32>
    %cst_180 = arith.constant -1.000000e+09 : f32
    %466 = vector.broadcast %cst_180 : f32 to vector<8x8xf32>
    %467 = arith.select %385, %466, %465 : vector<8x8xi1>, vector<8x8xf32>
    %cst_181 = arith.constant dense<0xFF800000> : vector<8xf32>
    %468 = vector.multi_reduction <maximumf>, %467, %cst_181 [1] : vector<8x8xf32> to vector<8xf32>
    %469 = vector.shape_cast %468 : vector<8xf32> to vector<8x1xf32>
    %470 = vector.broadcast %469 : vector<8x1xf32> to vector<8x8xf32>
    %471 = arith.subf %467, %470 : vector<8x8xf32>
    %472 = math.exp %471 : vector<8x8xf32>
    %cst_182 = arith.constant dense<0.000000e+00> : vector<8xf32>
    %473 = vector.multi_reduction <add>, %472, %cst_182 [1] : vector<8x8xf32> to vector<8xf32>
    %474 = vector.shape_cast %473 : vector<8xf32> to vector<8x1xf32>
    %475 = tpu.reciprocal %474 {approx = true} : vector<8x1xf32> -> vector<8x1xf32>
    %476 = vector.broadcast %475 : vector<8x1xf32> to vector<8x8xf32>
    %477 = arith.mulf %472, %476 : vector<8x8xf32>
    %478 = arith.truncf %477 : vector<8x8xf32> to vector<8x8xbf16>
    %479 = arith.truncf %460 : vector<8x8xf32> to vector<8x8xbf16>
    %cst_183 = arith.constant dense<0.000000e+00> : vector<8x8xf32>
    %480 = tpu.matmul %478, %479, %cst_183 {dimension_numbers = #tpu.dot_dimension_numbers<[1], [0], [0], [1], [0, 0, 1, 1], [], []>} : vector<8x8xbf16>, vector<8x8xbf16>, vector<8x8xf32> -> vector<8x8xf32>
    %c8_184 = arith.constant 8 : index
    %c24_185 = arith.constant 24 : index
    %481 = vector.load %arg22[%c8_184, %c24_185] : memref<16x32xf32, #tpu.memory_space<vmem>>, vector<8x8xf32>
    tpu.vector_store %arg22[%c8_184, %c24_185], %480 {strides = array<i32>} : memref<16x32xf32, #tpu.memory_space<vmem>>, vector<8x8xf32>,
    %c0_186 = arith.constant 0 : index
    %c0_187 = arith.constant 0 : index
    %482 = vector.load %arg22[%c0_186, %c0_187] : memref<16x32xf32, #tpu.memory_space<vmem>>, vector<16x32xf32>
    %483 = arith.truncf %482 : vector<16x32xf32> to vector<16x32xbf16>
    %c0_188 = arith.constant 0 : index
    %c0_189 = arith.constant 0 : index
    %484 = vector.load %arg13[%c0_188, %c0_189] : memref<32x32xbf16, #tpu.memory_space<vmem>>, vector<32x32xbf16>
    %cst_190 = arith.constant dense<0.000000e+00> : vector<16x32xf32>
    %485 = tpu.matmul %483, %484, %cst_190 {dimension_numbers = #tpu.dot_dimension_numbers<[1], [0], [0], [1], [0, 0, 1, 1], [], []>} : vector<16x32xbf16>, vector<32x32xbf16>, vector<16x32xf32> -> vector<16x32xf32>
    %c0_191 = arith.constant 0 : index
    %c0_192 = arith.constant 0 : index
    %486 = vector.load %arg14[%c0_191, %c0_192] : memref<1x32xf32, #tpu.memory_space<vmem>>, vector<1x32xf32>
    %487 = vector.broadcast %486 : vector<1x32xf32> to vector<16x32xf32>
    %488 = arith.addf %485, %487 : vector<16x32xf32>
    %489 = arith.addf %243, %488 : vector<16x32xf32>
    %c2 = arith.constant 2 : index
    %c0_193 = arith.constant 0 : index
    %490 = vector.load %arg19[%c2, %c0_193] : memref<3x32xf32, #tpu.memory_space<vmem>>, vector<1x32xf32>
    %c2_194 = arith.constant 2 : index
    %c0_195 = arith.constant 0 : index
    %491 = vector.load %arg20[%c2_194, %c0_195] : memref<3x32xf32, #tpu.memory_space<vmem>>, vector<1x32xf32>
    %cst_196 = arith.constant dense<0.000000e+00> : vector<16xf32>
    %492 = vector.multi_reduction <add>, %489, %cst_196 [1] : vector<16x32xf32> to vector<16xf32>
    %493 = vector.shape_cast %492 : vector<16xf32> to vector<16x1xf32>
    %cst_197 = arith.constant 3.200000e+01 : f32
    %494 = vector.broadcast %cst_197 : f32 to vector<16x1xf32>
    %495 = arith.divf %493, %494 : vector<16x1xf32>
    %496 = vector.broadcast %495 : vector<16x1xf32> to vector<16x32xf32>
    %497 = arith.subf %489, %496 : vector<16x32xf32>
    %498 = arith.mulf %497, %497 : vector<16x32xf32>
    %cst_198 = arith.constant dense<0.000000e+00> : vector<16xf32>
    %499 = vector.multi_reduction <add>, %498, %cst_198 [1] : vector<16x32xf32> to vector<16xf32>
    %500 = vector.shape_cast %499 : vector<16xf32> to vector<16x1xf32>
    %cst_199 = arith.constant 0.0322580636 : f32
    %501 = vector.broadcast %cst_199 : f32 to vector<16x1xf32>
    %502 = arith.mulf %500, %501 : vector<16x1xf32>
    %503 = math.sqrt %502 : vector<16x1xf32>
    %cst_200 = arith.constant 9.99999997E-7 : f32
    %504 = vector.broadcast %cst_200 : f32 to vector<16x1xf32>
    %505 = arith.addf %503, %504 : vector<16x1xf32>
    %cst_201 = arith.constant 1.000000e+00 : f32
    %506 = vector.broadcast %cst_201 : f32 to vector<16x1xf32>
    %507 = arith.divf %506, %505 : vector<16x1xf32>
    %508 = vector.broadcast %495 : vector<16x1xf32> to vector<16x32xf32>
    %509 = arith.subf %489, %508 : vector<16x32xf32>
    %510 = vector.broadcast %507 : vector<16x1xf32> to vector<16x32xf32>
    %511 = arith.mulf %509, %510 : vector<16x32xf32>
    %512 = vector.broadcast %490 : vector<1x32xf32> to vector<16x32xf32>
    %513 = arith.mulf %512, %511 : vector<16x32xf32>
    %514 = vector.broadcast %491 : vector<1x32xf32> to vector<16x32xf32>
    %515 = arith.addf %513, %514 : vector<16x32xf32>
    %516 = arith.truncf %515 : vector<16x32xf32> to vector<16x32xbf16>
    %c0_202 = arith.constant 0 : index
    %c0_203 = arith.constant 0 : index
    %517 = vector.load %arg15[%c0_202, %c0_203] : memref<32x64xbf16, #tpu.memory_space<vmem>>, vector<32x64xbf16>
    %cst_204 = arith.constant dense<0.000000e+00> : vector<16x64xf32>
    %518 = tpu.matmul %516, %517, %cst_204 {dimension_numbers = #tpu.dot_dimension_numbers<[1], [0], [0], [1], [0, 0, 1, 1], [], []>} : vector<16x32xbf16>, vector<32x64xbf16>, vector<16x64xf32> -> vector<16x64xf32>
    %c0_205 = arith.constant 0 : index
    %c0_206 = arith.constant 0 : index
    %519 = vector.load %arg16[%c0_205, %c0_206] : memref<1x64xf32, #tpu.memory_space<vmem>>, vector<1x64xf32>
    %520 = vector.broadcast %519 : vector<1x64xf32> to vector<16x64xf32>
    %521 = arith.addf %518, %520 : vector<16x64xf32>
    %cst_207 = arith.constant 0.000000e+00 : f32
    %522 = vector.broadcast %cst_207 : f32 to vector<16x64xf32>
    %523 = arith.maximumf %521, %522 : vector<16x64xf32>
    %524 = arith.truncf %523 : vector<16x64xf32> to vector<16x64xbf16>
    %c0_208 = arith.constant 0 : index
    %c0_209 = arith.constant 0 : index
    %525 = vector.load %arg17[%c0_208, %c0_209] : memref<64x32xbf16, #tpu.memory_space<vmem>>, vector<64x32xbf16>
    %cst_210 = arith.constant dense<0.000000e+00> : vector<16x32xf32>
    %526 = tpu.matmul %524, %525, %cst_210 {dimension_numbers = #tpu.dot_dimension_numbers<[1], [0], [0], [1], [0, 0, 1, 1], [], []>} : vector<16x64xbf16>, vector<64x32xbf16>, vector<16x32xf32> -> vector<16x32xf32>
    %527 = arith.addf %489, %526 : vector<16x32xf32>
    %c0_211 = arith.constant 0 : index
    %c0_212 = arith.constant 0 : index
    %528 = vector.load %arg18[%c0_211, %c0_212] : memref<1x32xf32, #tpu.memory_space<vmem>>, vector<1x32xf32>
    %529 = vector.broadcast %528 : vector<1x32xf32> to vector<16x32xf32>
    %530 = arith.addf %527, %529 : vector<16x32xf32>
    %531 = vector.shape_cast %530 : vector<16x32xf32> to vector<2x8x32xf32>
    %c0_213 = arith.constant 0 : index
    %c0_214 = arith.constant 0 : index
    %c0_215 = arith.constant 0 : index
    %532 = vector.load %arg21[%c0_213, %c0_214, %c0_215] : memref<2x8x32xf32, #tpu.memory_space<vmem>>, vector<2x8x32xf32>
    tpu.vector_store %arg21[%c0_213, %c0_214, %c0_215], %531 {strides = array<i32>} : memref<2x8x32xf32, #tpu.memory_space<vmem>>, vector<2x8x32xf32>,
    return
  }
  func.func @transform_0(%arg0: i32) -> (i32, i32, i32) {
    %c0_i32 = arith.constant 0 : i32
    %c0_i32_0 = arith.constant 0 : i32
    %c0_i32_1 = arith.constant 0 : i32
    return %arg0, %c0_i32, %c0_i32_0 : i32, i32, i32
  }
  func.func @transform_1(%arg0: i32) -> (i32, i32, i32) {
    %c0_i32 = arith.constant 0 : i32
    %c0_i32_0 = arith.constant 0 : i32
    %c0_i32_1 = arith.constant 0 : i32
    return %arg0, %c0_i32, %c0_i32_0 : i32, i32, i32
  }
  func.func @transform_2(%arg0: i32) -> (i32, i32, i32) {
    %c0_i32 = arith.constant 0 : i32
    %c0_i32_0 = arith.constant 0 : i32
    %c0_i32_1 = arith.constant 0 : i32
    return %arg0, %c0_i32, %c0_i32_0 : i32, i32, i32
  }
  func.func @transform_3(%arg0: i32) -> (i32, i32, i32) {
    %c0_i32 = arith.constant 0 : i32
    %c0_i32_0 = arith.constant 0 : i32
    %c0_i32_1 = arith.constant 0 : i32
    return %arg0, %c0_i32, %c0_i32_0 : i32, i32, i32
  }
  func.func @transform_4(%arg0: i32) -> (i32, i32) {
    %c0_i32 = arith.constant 0 : i32
    %c0_i32_0 = arith.constant 0 : i32
    %c0_i32_1 = arith.constant 0 : i32
    return %c0_i32, %c0_i32_0 : i32, i32
  }
  func.func @transform_5(%arg0: i32) -> (i32, i32) {
    %c0_i32 = arith.constant 0 : i32
    %c0_i32_0 = arith.constant 0 : i32
    %c0_i32_1 = arith.constant 0 : i32
    return %c0_i32, %c0_i32_0 : i32, i32
  }
  func.func @transform_6(%arg0: i32) -> (i32, i32) {
    %c0_i32 = arith.constant 0 : i32
    %c0_i32_0 = arith.constant 0 : i32
    %c0_i32_1 = arith.constant 0 : i32
    return %c0_i32, %c0_i32_0 : i32, i32
  }
  func.func @transform_7(%arg0: i32) -> (i32, i32) {
    %c0_i32 = arith.constant 0 : i32
    %c0_i32_0 = arith.constant 0 : i32
    %c0_i32_1 = arith.constant 0 : i32
    return %c0_i32, %c0_i32_0 : i32, i32
  }
  func.func @transform_8(%arg0: i32) -> (i32, i32) {
    %c0_i32 = arith.constant 0 : i32
    %c0_i32_0 = arith.constant 0 : i32
    %c0_i32_1 = arith.constant 0 : i32
    return %c0_i32, %c0_i32_0 : i32, i32
  }
  func.func @transform_9(%arg0: i32) -> (i32, i32) {
    %c0_i32 = arith.constant 0 : i32
    %c0_i32_0 = arith.constant 0 : i32
    %c0_i32_1 = arith.constant 0 : i32
    return %c0_i32, %c0_i32_0 : i32, i32
  }
  func.func @transform_10(%arg0: i32) -> (i32, i32) {
    %c0_i32 = arith.constant 0 : i32
    %c0_i32_0 = arith.constant 0 : i32
    %c0_i32_1 = arith.constant 0 : i32
    return %c0_i32, %c0_i32_0 : i32, i32
  }
  func.func @transform_11(%arg0: i32) -> (i32, i32) {
    %c0_i32 = arith.constant 0 : i32
    %c0_i32_0 = arith.constant 0 : i32
    %c0_i32_1 = arith.constant 0 : i32
    return %c0_i32, %c0_i32_0 : i32, i32
  }
  func.func @transform_12(%arg0: i32) -> (i32, i32) {
    %c0_i32 = arith.constant 0 : i32
    %c0_i32_0 = arith.constant 0 : i32
    %c0_i32_1 = arith.constant 0 : i32
    return %c0_i32, %c0_i32_0 : i32, i32
  }
  func.func @transform_13(%arg0: i32) -> (i32, i32) {
    %c0_i32 = arith.constant 0 : i32
    %c0_i32_0 = arith.constant 0 : i32
    %c0_i32_1 = arith.constant 0 : i32
    return %c0_i32, %c0_i32_0 : i32, i32
  }
  func.func @transform_14(%arg0: i32) -> (i32, i32) {
    %c0_i32 = arith.constant 0 : i32
    %c0_i32_0 = arith.constant 0 : i32
    %c0_i32_1 = arith.constant 0 : i32
    return %c0_i32, %c0_i32_0 : i32, i32
  }
  func.func @transform_15(%arg0: i32) -> (i32, i32) {
    %c0_i32 = arith.constant 0 : i32
    %c0_i32_0 = arith.constant 0 : i32
    %c0_i32_1 = arith.constant 0 : i32
    return %c0_i32, %c0_i32_0 : i32, i32
  }
  func.func @transform_16(%arg0: i32) -> (i32, i32) {
    %c0_i32 = arith.constant 0 : i32
    %c0_i32_0 = arith.constant 0 : i32
    %c0_i32_1 = arith.constant 0 : i32
    return %c0_i32, %c0_i32_0 : i32, i32
  }
  func.func @transform_17(%arg0: i32) -> (i32, i32) {
    %c0_i32 = arith.constant 0 : i32
    %c0_i32_0 = arith.constant 0 : i32
    %c0_i32_1 = arith.constant 0 : i32
    return %c0_i32, %c0_i32_0 : i32, i32
  }
  func.func @transform_18(%arg0: i32) -> (i32, i32) {
    %c0_i32 = arith.constant 0 : i32
    %c0_i32_0 = arith.constant 0 : i32
    %c0_i32_1 = arith.constant 0 : i32
    return %c0_i32, %c0_i32_0 : i32, i32
  }
  func.func @transform_19(%arg0: i32) -> (i32, i32) {
    %c0_i32 = arith.constant 0 : i32
    %c0_i32_0 = arith.constant 0 : i32
    %c0_i32_1 = arith.constant 0 : i32
    return %c0_i32, %c0_i32_0 : i32, i32
  }
  func.func @transform_20(%arg0: i32) -> (i32, i32, i32) {
    %c0_i32 = arith.constant 0 : i32
    %c0_i32_0 = arith.constant 0 : i32
    %c0_i32_1 = arith.constant 0 : i32
    return %arg0, %c0_i32, %c0_i32_0 : i32, i32, i32
  }
}

</mosaic_0001>

<llo_original>
// kernel: tpu_custom_call.1
$region0: #{tpu_custom_call.1}
  #allocation0 [shape = 'u32[]', space=smem, size = 0x4, offset = 0x4, fixed_abs, tag = 'smem constant byte address 0x4 - core index']
  #allocation1 [shape = 'u32[144,128]{1,0:T(1,128)}', space=vmem, size = 0x12000, scoped, tag = 'internal scratch']
  #allocation2 [shape = 'f32[16,32]{1,0:T(8,128)}', space=vmem, size = 0x2000, scoped, tag = 'scratch operand']
  %s0 = inlined_call_operand.vmem [shape: f32[2,8,32], index: 0, kind: input, shape index: {}]
  %s1 = inlined_call_operand.vmem [shape: f32[2,8,32], index: 1, kind: input, shape index: {}]
  %s2 = inlined_call_operand.vmem [shape: f32[2,8,8], index: 2, kind: input, shape index: {}]
  %s3 = inlined_call_operand.hbm [shape: f32[2,8,8], index: 3, kind: input, shape index: {}]
  %s4 = inlined_call_operand.hbm [shape: bf16[32,96], index: 4, kind: input, shape index: {}]
  %s5 = inlined_call_operand.hbm [shape: f32[1,96], index: 5, kind: input, shape index: {}]
  %s6 = inlined_call_operand.hbm [shape: bf16[32,32], index: 6, kind: input, shape index: {}]
  %s7 = inlined_call_operand.hbm [shape: f32[1,32], index: 7, kind: input, shape index: {}]
  %s8 = inlined_call_operand.hbm [shape: bf16[32,32], index: 8, kind: input, shape index: {}]
  %s9 = inlined_call_operand.hbm [shape: f32[1,32], index: 9, kind: input, shape index: {}]
  %s10 = inlined_call_operand.vmem [shape: bf16[32,64], index: 10, kind: input, shape index: {}]
  %s11 = inlined_call_operand.hbm [shape: f32[1,64], index: 11, kind: input, shape index: {}]
  %s12 = inlined_call_operand.hbm [shape: bf16[32,32], index: 12, kind: input, shape index: {}]
  %s13 = inlined_call_operand.vmem [shape: f32[1,32], index: 13, kind: input, shape index: {}]
  %s14 = inlined_call_operand.hbm [shape: bf16[32,64], index: 14, kind: input, shape index: {}]
  %s15 = inlined_call_operand.vmem [shape: f32[1,64], index: 15, kind: input, shape index: {}]
  %s16 = inlined_call_operand.vmem [shape: bf16[64,32], index: 16, kind: input, shape index: {}]
  %s17 = inlined_call_operand.vmem [shape: f32[1,32], index: 17, kind: input, shape index: {}]
  %s18 = inlined_call_operand.vmem [shape: f32[3,32], index: 18, kind: input, shape index: {}]
  %s19 = inlined_call_operand.vmem [shape: f32[3,32], index: 19, kind: input, shape index: {}]
  %s20 = inlined_call_operand.hbm [shape: f32[2,8,32], index: 20, kind: output, shape index: {}]
  %s21 = sld [smem:[#allocation0]]
  $region130: #{tpu_custom_call.1} parent=0
    _
  %s23 = ssub.s32 1, %s21
  %s24 = scalar_select 0, %s23, %s21
  $region1: #{tpu_custom_call.1} parent=0
    #allocation3 [shape = 'u8[8192]{0}', space=vmem, size = 0x2000, scoped, tag = 'input window, operand 3, single buffered']
    #allocation4 [shape = 's32[1]{0}', space=sflag, size = 0x4, scoped, tag = 'scoped memory for tpu_custom_call.1']
    #allocation5 [shape = 's32[1]{0}', space=sflag, size = 0x4, scoped, tag = 'scoped memory for tpu_custom_call.1']
    #allocation6 [shape = 'u8[8192]{0}', space=vmem, size = 0x2000, scoped, tag = 'input window, operand 4, single buffered']
    #allocation7 [shape = 's32[1]{0}', space=sflag, size = 0x4, scoped, tag = 'scoped memory for tpu_custom_call.1']
    #allocation8 [shape = 'u8[512]{0}', space=vmem, size = 0x400, scoped, tag = 'input window, operand 5, single buffered']
    #allocation9 [shape = 'u8[8192]{0}', space=vmem, size = 0x2000, scoped, tag = 'input window, operand 6, single buffered']
    #allocation10 [shape = 's32[1]{0}', space=sflag, size = 0x4, scoped, tag = 'scoped memory for tpu_custom_call.1']
    #allocation11 [shape = 'u8[512]{0}', space=vmem, size = 0x400, scoped, tag = 'input window, operand 7, single buffered']
    #allocation12 [shape = 'u8[8192]{0}', space=vmem, size = 0x2000, scoped, tag = 'input window, operand 8, single buffered']
    #allocation13 [shape = 's32[1]{0}', space=sflag, size = 0x4, scoped, tag = 'scoped memory for tpu_custom_call.1']
    #allocation14 [shape = 'u8[512]{0}', space=vmem, size = 0x400, scoped, tag = 'input window, operand 9, single buffered']
    #allocation15 [shape = 'u8[512]{0}', space=vmem, size = 0x400, scoped, tag = 'input window, operand 11, single buffered']
    #allocation16 [shape = 's32[1]{0}', space=sflag, size = 0x4, scoped, tag = 'scoped memory for tpu_custom_call.1']
    #allocation17 [shape = 'u8[8192]{0}', space=vmem, size = 0x2000, scoped, tag = 'input window, operand 12, single buffered']
    #allocation18 [shape = 'u8[8192]{0}', space=vmem, size = 0x2000, scoped, tag = 'input window, operand 14, single buffered']
    #allocation19 [shape = 's32[1]{0}', space=sflag, size = 0x4, scoped, tag = 'scoped memory for tpu_custom_call.1']
    #allocation20 [shape = 'u8[8192]{0}', space=vmem, size = 0x2000, scoped, tag = 'output window, operand 0, single buffered']
    %25 = vsyncpa [#allocation4], 0
    %26 = vsyncpa [#allocation7], 0
    %27 = vsyncpa [#allocation10], 0
    %28 = vsyncpa [#allocation13], 0
    %29 = vsyncpa [#allocation16], 0
    %30 = vsyncpa [#allocation19], 0
    %31 = vsyncpa [#allocation5], 0
    // Predicated region
    $region2: #{tpu_custom_call.1} parent=1 // pred_check
      _
    $region3: #{tpu_custom_call.1} parent=1 // pred_check_branch
      %33 = sbr.rel (0) target = $region5
    $region4: #{tpu_custom_call.1} parent=1 // pred_region
      _
    $region5: #{tpu_custom_call.1} parent=1 // pred_fallthru
      _
    // Predicated region
    $region6: #{tpu_custom_call.1} parent=1 // pred_check
      _
    $region7: #{tpu_custom_call.1} parent=1 // pred_check_branch
      %35 = sbr.rel (0) target = $region9
    $region8: #{tpu_custom_call.1} parent=1 // pred_region
      _
    $region9: #{tpu_custom_call.1} parent=1 // pred_fallthru
      _
    // Predicated region
    $region10: #{tpu_custom_call.1} parent=1 // pred_check
      _
    $region11: #{tpu_custom_call.1} parent=1 // pred_check_branch
      %37 = sbr.rel (0) target = $region13
    $region12: #{tpu_custom_call.1} parent=1 // pred_region
      _
    $region13: #{tpu_custom_call.1} parent=1 // pred_fallthru
      _
    // Predicated region
    $region14: #{tpu_custom_call.1} parent=1 // pred_check
      _
    $region15: #{tpu_custom_call.1} parent=1 // pred_check_branch
      %39 = sbr.rel (0) target = $region17
    $region16: #{tpu_custom_call.1} parent=1 // pred_region
      %s41 = ssub.s32 256, 256
      %42 = vsyncadd [#allocation4], %s41
      %s43 = sshll.u32 [#allocation3], 4
      %s44 = int_to_ptr.vmem [resolvable:$true] %s43
      %49 = dma.hbm_to_vmem [thread:$0]  %s3, 256, %s44, [#allocation4], 128, 128, 8
    $region17: #{tpu_custom_call.1} parent=1 // pred_fallthru
      _
    // Predicated region
    $region18: #{tpu_custom_call.1} parent=1 // pred_check
      _
    $region19: #{tpu_custom_call.1} parent=1 // pred_check_branch
      %51 = sbr.rel (0) target = $region21
    $region20: #{tpu_custom_call.1} parent=1 // pred_region
      %s53 = ssub.s32 256, 256
      %54 = vsyncadd [#allocation7], %s53
      %s55 = sshll.u32 [#allocation6], 4
      %s56 = int_to_ptr.vmem [resolvable:$true] %s55
      %61 = dma.hbm_to_vmem [thread:$0]  %s4, 256, %s56, [#allocation7], 64, 64, 4
    $region21: #{tpu_custom_call.1} parent=1 // pred_fallthru
      _
    // Predicated region
    $region22: #{tpu_custom_call.1} parent=1 // pred_check
      _
    $region23: #{tpu_custom_call.1} parent=1 // pred_check_branch
      %63 = sbr.rel (0) target = $region25
    $region24: #{tpu_custom_call.1} parent=1 // pred_region
      %s65 = ssub.s32 16, 16
      %66 = vsyncadd [#allocation7], %s65
      %s68 = sshll.u32 [#allocation8], 4
      %s69 = int_to_ptr.vmem [resolvable:$true] %s68
      %71 = dma.hbm_to_vmem [thread:$0]  %s5, 16, %s69, [#allocation7]
    $region25: #{tpu_custom_call.1} parent=1 // pred_fallthru
      _
    // Predicated region
    $region26: #{tpu_custom_call.1} parent=1 // pred_check
      _
    $region27: #{tpu_custom_call.1} parent=1 // pred_check_branch
      %73 = sbr.rel (0) target = $region29
    $region28: #{tpu_custom_call.1} parent=1 // pred_region
      %s75 = ssub.s32 256, 256
      %76 = vsyncadd [#allocation10], %s75
      %s77 = sshll.u32 [#allocation9], 4
      %s78 = int_to_ptr.vmem [resolvable:$true] %s77
      %83 = dma.hbm_to_vmem [thread:$0]  %s6, 256, %s78, [#allocation10], 64, 64, 4
    $region29: #{tpu_custom_call.1} parent=1 // pred_fallthru
      _
    // Predicated region
    $region30: #{tpu_custom_call.1} parent=1 // pred_check
      _
    $region31: #{tpu_custom_call.1} parent=1 // pred_check_branch
      %85 = sbr.rel (0) target = $region33
    $region32: #{tpu_custom_call.1} parent=1 // pred_region
      %s87 = ssub.s32 16, 16
      %88 = vsyncadd [#allocation10], %s87
      %s90 = sshll.u32 [#allocation11], 4
      %s91 = int_to_ptr.vmem [resolvable:$true] %s90
      %93 = dma.hbm_to_vmem [thread:$0]  %s7, 16, %s91, [#allocation10]
    $region33: #{tpu_custom_call.1} parent=1 // pred_fallthru
      _
    // Predicated region
    $region34: #{tpu_custom_call.1} parent=1 // pred_check
      _
    $region35: #{tpu_custom_call.1} parent=1 // pred_check_branch
      %95 = sbr.rel (0) target = $region37
    $region36: #{tpu_custom_call.1} parent=1 // pred_region
      %s97 = ssub.s32 256, 256
      %98 = vsyncadd [#allocation13], %s97
      %s99 = sshll.u32 [#allocation12], 4
      %s100 = int_to_ptr.vmem [resolvable:$true] %s99
      %105 = dma.hbm_to_vmem [thread:$0]  %s8, 256, %s100, [#allocation13], 64, 64, 4
    $region37: #{tpu_custom_call.1} parent=1 // pred_fallthru
      _
    // Predicated region
    $region38: #{tpu_custom_call.1} parent=1 // pred_check
      _
    $region39: #{tpu_custom_call.1} parent=1 // pred_check_branch
      %107 = sbr.rel (0) target = $region41
    $region40: #{tpu_custom_call.1} parent=1 // pred_region
      %s109 = ssub.s32 16, 16
      %110 = vsyncadd [#allocation13], %s109
      %s112 = sshll.u32 [#allocation14], 4
      %s113 = int_to_ptr.vmem [resolvable:$true] %s112
      %115 = dma.hbm_to_vmem [thread:$0]  %s9, 16, %s113, [#allocation13]
    $region41: #{tpu_custom_call.1} parent=1 // pred_fallthru
      _
    // Predicated region
    $region42: #{tpu_custom_call.1} parent=1 // pred_check
      _
    $region43: #{tpu_custom_call.1} parent=1 // pred_check_branch
      %117 = sbr.rel (0) target = $region45
    $region44: #{tpu_custom_call.1} parent=1 // pred_region
      _
    $region45: #{tpu_custom_call.1} parent=1 // pred_fallthru
      _
    // Predicated region
    $region46: #{tpu_custom_call.1} parent=1 // pred_check
      _
    $region47: #{tpu_custom_call.1} parent=1 // pred_check_branch
      %119 = sbr.rel (0) target = $region49
    $region48: #{tpu_custom_call.1} parent=1 // pred_region
      %s121 = ssub.s32 16, 16
      %122 = vsyncadd [#allocation16], %s121
      %s124 = sshll.u32 [#allocation15], 4
      %s125 = int_to_ptr.vmem [resolvable:$true] %s124
      %127 = dma.hbm_to_vmem [thread:$0]  %s11, 16, %s125, [#allocation16]
    $region49: #{tpu_custom_call.1} parent=1 // pred_fallthru
      _
    // Predicated region
    $region50: #{tpu_custom_call.1} parent=1 // pred_check
      _
    $region51: #{tpu_custom_call.1} parent=1 // pred_check_branch
      %129 = sbr.rel (0) target = $region53
    $region52: #{tpu_custom_call.1} parent=1 // pred_region
      %s131 = ssub.s32 256, 256
      %132 = vsyncadd [#allocation16], %s131
      %s133 = sshll.u32 [#allocation17], 4
      %s134 = int_to_ptr.vmem [resolvable:$true] %s133
      %139 = dma.hbm_to_vmem [thread:$0]  %s12, 256, %s134, [#allocation16], 64, 64, 4
    $region53: #{tpu_custom_call.1} parent=1 // pred_fallthru
      _
    // Predicated region
    $region54: #{tpu_custom_call.1} parent=1 // pred_check
      _
    $region55: #{tpu_custom_call.1} parent=1 // pred_check_branch
      %141 = sbr.rel (0) target = $region57
    $region56: #{tpu_custom_call.1} parent=1 // pred_region
      _
    $region57: #{tpu_custom_call.1} parent=1 // pred_fallthru
      _
    // Predicated region
    $region58: #{tpu_custom_call.1} parent=1 // pred_check
      _
    $region59: #{tpu_custom_call.1} parent=1 // pred_check_branch
      %143 = sbr.rel (0) target = $region61
    $region60: #{tpu_custom_call.1} parent=1 // pred_region
      %s145 = ssub.s32 256, 256
      %146 = vsyncadd [#allocation19], %s145
      %s147 = sshll.u32 [#allocation18], 4
      %s148 = int_to_ptr.vmem [resolvable:$true] %s147
      %153 = dma.hbm_to_vmem [thread:$0]  %s14, 256, %s148, [#allocation19], 64, 64, 4
    $region61: #{tpu_custom_call.1} parent=1 // pred_fallthru
      _
    // Predicated region
    $region62: #{tpu_custom_call.1} parent=1 // pred_check
      _
    $region63: #{tpu_custom_call.1} parent=1 // pred_check_branch
      %155 = sbr.rel (0) target = $region65
    $region64: #{tpu_custom_call.1} parent=1 // pred_region
      _
    $region65: #{tpu_custom_call.1} parent=1 // pred_fallthru
      _
    // Predicated region
    $region66: #{tpu_custom_call.1} parent=1 // pred_check
      _
    $region67: #{tpu_custom_call.1} parent=1 // pred_check_branch
      %157 = sbr.rel (0) target = $region69
    $region68: #{tpu_custom_call.1} parent=1 // pred_region
      _
    $region69: #{tpu_custom_call.1} parent=1 // pred_fallthru
      _
    // Predicated region
    $region70: #{tpu_custom_call.1} parent=1 // pred_check
      _
    $region71: #{tpu_custom_call.1} parent=1 // pred_check_branch
      %159 = sbr.rel (0) target = $region73
    $region72: #{tpu_custom_call.1} parent=1 // pred_region
      _
    $region73: #{tpu_custom_call.1} parent=1 // pred_fallthru
      _
    // Predicated region
    $region74: #{tpu_custom_call.1} parent=1 // pred_check
      _
    $region75: #{tpu_custom_call.1} parent=1 // pred_check_branch
      %161 = sbr.rel (0) target = $region77
    $region76: #{tpu_custom_call.1} parent=1 // pred_region
      _
    $region77: #{tpu_custom_call.1} parent=1 // pred_fallthru
      _
    // Predicated region
    $region78: #{tpu_custom_call.1} parent=1 // pred_check
      _
    $region79: #{tpu_custom_call.1} parent=1 // pred_check_branch
      %163 = sbr.rel (0) target = $region81
    $region80: #{tpu_custom_call.1} parent=1 // pred_region
      _
    $region81: #{tpu_custom_call.1} parent=1 // pred_fallthru
      _
    // Predicated region
    $region82: #{tpu_custom_call.1} parent=1 // pred_check
      _
    $region83: #{tpu_custom_call.1} parent=1 // pred_check_branch
      %165 = sbr.rel (0) target = $region85
    $region84: #{tpu_custom_call.1} parent=1 // pred_region
      %166 = dma.done [#allocation4], 256
    $region85: #{tpu_custom_call.1} parent=1 // pred_fallthru
      _
    // Predicated region
    $region86: #{tpu_custom_call.1} parent=1 // pred_check
      _
    $region87: #{tpu_custom_call.1} parent=1 // pred_check_branch
      %168 = sbr.rel (0) target = $region89
    $region88: #{tpu_custom_call.1} parent=1 // pred_region
      %169 = dma.done [#allocation7], 256
    $region89: #{tpu_custom_call.1} parent=1 // pred_fallthru
      _
    // Predicated region
    $region90: #{tpu_custom_call.1} parent=1 // pred_check
      _
    $region91: #{tpu_custom_call.1} parent=1 // pred_check_branch
      %171 = sbr.rel (0) target = $region93
    $region92: #{tpu_custom_call.1} parent=1 // pred_region
      %172 = dma.done [#allocation7], 16
    $region93: #{tpu_custom_call.1} parent=1 // pred_fallthru
      _
    // Predicated region
    $region94: #{tpu_custom_call.1} parent=1 // pred_check
      _
    $region95: #{tpu_custom_call.1} parent=1 // pred_check_branch
      %174 = sbr.rel (0) target = $region97
    $region96: #{tpu_custom_call.1} parent=1 // pred_region
      %175 = dma.done [#allocation10], 256
    $region97: #{tpu_custom_call.1} parent=1 // pred_fallthru
      _
    // Predicated region
    $region98: #{tpu_custom_call.1} parent=1 // pred_check
      _
    $region99: #{tpu_custom_call.1} parent=1 // pred_check_branch
      %177 = sbr.rel (0) target = $region101
    $region100: #{tpu_custom_call.1} parent=1 // pred_region
      %178 = dma.done [#allocation10], 16
    $region101: #{tpu_custom_call.1} parent=1 // pred_fallthru
      _
    // Predicated region
    $region102: #{tpu_custom_call.1} parent=1 // pred_check
      _
    $region103: #{tpu_custom_call.1} parent=1 // pred_check_branch
      %180 = sbr.rel (0) target = $region105
    $region104: #{tpu_custom_call.1} parent=1 // pred_region
      %181 = dma.done [#allocation13], 256
    $region105: #{tpu_custom_call.1} parent=1 // pred_fallthru
      _
    // Predicated region
    $region106: #{tpu_custom_call.1} parent=1 // pred_check
      _
    $region107: #{tpu_custom_call.1} parent=1 // pred_check_branch
      %183 = sbr.rel (0) target = $region109
    $region108: #{tpu_custom_call.1} parent=1 // pred_region
      %184 = dma.done [#allocation13], 16
    $region109: #{tpu_custom_call.1} parent=1 // pred_fallthru
      _
    // Predicated region
    $region110: #{tpu_custom_call.1} parent=1 // pred_check
      _
    $region111: #{tpu_custom_call.1} parent=1 // pred_check_branch
      %186 = sbr.rel (0) target = $region113
    $region112: #{tpu_custom_call.1} parent=1 // pred_region
      %187 = dma.done [#allocation16], 16
    $region113: #{tpu_custom_call.1} parent=1 // pred_fallthru
      _
    // Predicated region
    $region114: #{tpu_custom_call.1} parent=1 // pred_check
      _
    $region115: #{tpu_custom_call.1} parent=1 // pred_check_branch
      %189 = sbr.rel (0) target = $region117
    $region116: #{tpu_custom_call.1} parent=1 // pred_region
      %190 = dma.done [#allocation16], 256
    $region117: #{tpu_custom_call.1} parent=1 // pred_fallthru
      _
    // Predicated region
    $region118: #{tpu_custom_call.1} parent=1 // pred_check
      _
    $region119: #{tpu_custom_call.1} parent=1 // pred_check_branch
      %192 = sbr.rel (0) target = $region121
    $region120: #{tpu_custom_call.1} parent=1 // pred_region
      %193 = dma.done [#allocation19], 256
    $region121: #{tpu_custom_call.1} parent=1 // pred_fallthru
      _
    %v195 = vld [vmem:[%s0] sm:$0xff]
    %v196 = vld [vmem:[%s0 + $0x8] sm:$0xff]
    %v197 = vld [vmem:[%s1] sm:$0xff]
    %v198 = vld [vmem:[%s1 + $0x8] sm:$0xff]
    %v199 = vld [vmem:[%s18] sm:$0x1]
    %v200 = vld [vmem:[%s19] sm:$0x1]
    %vm201 = vcmask 261120
    %v202 = vsel %vm201, %v195, 0.0
    %203 = vadd.xlane.f32.xlu0 %v202
    %v204 = vpop.xlane.xlu0 %203
    %v205 = vsel %vm201, %v196, 0.0
    %206 = vadd.xlane.f32.xlu0 %v205
    %v207 = vpop.xlane.xlu0 %206
    %v208 = vrcp.pop 32.0
    %v209 = vmul.f32 %v204, %v208
    %v210 = vmul.f32 %v207, %v208
    %v211 = vsub.f32 %v195, %v209
    %v212 = vsub.f32 %v196, %v210
    %v213 = vmul.f32 %v211, %v211
    %v214 = vmul.f32 %v212, %v212
    %v215 = vsel %vm201, %v213, 0.0
    %216 = vadd.xlane.f32.xlu0 %v215
    %v217 = vpop.xlane.xlu0 %216
    %v218 = vsel %vm201, %v214, 0.0
    %219 = vadd.xlane.f32.xlu0 %v218
    %v220 = vpop.xlane.xlu0 %219
    %v221 = vmul.f32 %v217, 0.032258064
    %v222 = vmul.f32 %v220, 0.032258064
    %v223 = vrsqrt.pop %v221
    %v224 = vmul.f32 %v221, %v223
    %vm225 = vcmp.eq.f32.partialorder %v221, inf
    %v226 = vsel %vm225, %v221, %v224
    %vm227 = vcmp.eq.f32.partialorder %v221, 0.0
    %v228 = vand.u32 %v221, 2147483648
    %v229 = vsel %vm227, %v228, %v226
    %v230 = vrsqrt.pop %v222
    %v231 = vmul.f32 %v222, %v230
    %vm232 = vcmp.eq.f32.partialorder %v222, inf
    %v233 = vsel %vm232, %v222, %v231
    %vm234 = vcmp.eq.f32.partialorder %v222, 0.0
    %v235 = vand.u32 %v222, 2147483648
    %v236 = vsel %vm234, %v235, %v233
    %v237 = vadd.f32 %v229, 1e-06
    %v238 = vadd.f32 %v236, 1e-06
    %v239 = vrcp.pop %v237
    %v240 = vmul.f32 1.0, %v239
    %v241 = vrcp.pop %v238
    %v242 = vmul.f32 1.0, %v241
    %v243 = vmul.f32 %v211, %v240
    %v244 = vmul.f32 %v212, %v242
    %v245 = vlaneseq
    %v246 = vshrl.u32 %v245, 7
    %v247 = vsub.s32 0, %v246
    %v248 = vrot.slane %v199, %v247
    %v249 = vmul.f32 %v248, %v243
    %v250 = vmul.f32 %v248, %v244
    %v251 = vlaneseq
    %v252 = vshrl.u32 %v251, 7
    %v253 = vsub.s32 0, %v252
    %v254 = vrot.slane %v200, %v253
    %v255 = vadd.f32 %v249, %v254
    %v256 = vadd.f32 %v250, %v254
    %v257 = vpack.c.bf16 %v256, %v255
    %v258 = vld [vmem:[#allocation6] sm:$0xf]
    %v259 = vld [vmem:[#allocation6 + $0x4] sm:$0xf]
    %v260 = vld [vmem:[#allocation6 + $0x8] sm:$0xf]
    %v261 = vld [vmem:[#allocation6 + $0xc] sm:$0xf]
    %v262 = vld [vmem:[#allocation8] sm:$0x1]
    %v264 = vlaneseq
    %v265 = vshrl.u32 %v264, 7
    %v266 = vsub.s32 0, %v265
    %v267 = vrot.slane %v262, %v266
    %v273 = vunpack.c.l.b16 %v258
    %v274 = vunpack.c.l.b16 %v259
    %v275 = vunpack.c.l.b16 %v260
    %v276 = vunpack.c.l.b16 %v261
    %v277 = vpack.c.b16 %v274, %v273
    %v278 = vpack.c.b16 %v276, %v275
    %v282 = vsel %vm201, %v257, 0
    %284 = vmatprep.subr.bf16.mxu0 0
    %285 = vmatpush1.bf16.msra.mxu0 0
    %286 = vmatprep.subr.bf16.mxu0 0
    %287 = vmatpush1.bf16.msra.mxu0 0
    %288 = vmatprep.subr.bf16.mxu0 0
    %289 = vmatpush1.bf16.msra.mxu0 0
    %290 = vmatprep.subr.bf16.mxu0 0
    %291 = vmatpush1.bf16.msra.mxu0 0
    %292 = vmatprep.subr.bf16.mxu0 0
    %293 = vmatpush1.bf16.msra.mxu0 0
    %294 = vmatprep.subr.bf16.mxu0 0
    %295 = vmatpush1.bf16.msra.mxu0 0
    %296 = vmatprep.subr.bf16.mxu0 0
    %297 = vmatpush1.bf16.msra.mxu0 %v278
    %298 = vmatprep.subr.bf16.mxu0 0
    %299 = vmatpush1.bf16.msra.mxu0 %v277
    %300 = vmatprep.subr.bf16.mxu0 0
    %301 = vmatpush2.bf16.msra.mxu0 0
    %302 = vmatprep.subr.bf16.mxu0 0
    %303 = vmatpush2.bf16.msra.mxu0 0
    %304 = vmatprep.subr.bf16.mxu0 0
    %305 = vmatpush2.bf16.msra.mxu0 0
    %306 = vmatprep.subr.bf16.mxu0 0
    %307 = vmatpush2.bf16.msra.mxu0 0
    %308 = vmatprep.subr.bf16.mxu0 0
    %309 = vmatpush2.bf16.msra.mxu0 0
    %310 = vmatprep.subr.bf16.mxu0 0
    %311 = vmatpush2.bf16.msra.mxu0 0
    %312 = vmatprep.subr.bf16.mxu0 0
    %313 = vmatpush2.bf16.msra.mxu0 0
    %314 = vmatprep.subr.bf16.mxu0 0
    %315 = vmatpush2.bf16.msra.mxu0 0
    %316 = vmatprep.mubr.bf16.mxu0 0
    %317 = vmatmul.mubr.bf16.gmra.mxu0 %v282
    %v318 = vpop.f32.mrf.mxu0
    %v319 = vadd.f32 %v267, %v318
    %v320 = vpop.f32.mrf.mxu0
    %v321 = vpop.f32.mrf.mxu0
    %v322 = vadd.f32 %v267, %v321
    %v323 = vpop.f32.mrf.mxu0
    %324 = vdwg.mxu0
    %v325 = vld [vmem:[%s2] sm:$0xff]
    %vm326 = vcmp.eq.f32.partialorder %v325, 0.0
    %v327 = vpack.c.bf16 %v319, %v319
    %329 = vrot.lane.b32.xlu0 %v327, 96
    %v330 = vpop.permute.xlu0 %329
    %vm331 = vcmask 64512
    %v333 = vsel %vm331, %v327, 0
    %v336 = vsel %vm331, %v330, 0
    %338 = vmatprep.subr.bf16.mxu0 0
    %339 = vmatpush1.bf16.xpose.msra.mxu0 0
    %340 = vmatprep.subr.bf16.mxu0 0
    %341 = vmatpush1.bf16.xpose.msra.mxu0 0
    %342 = vmatprep.subr.bf16.mxu0 0
    %343 = vmatpush1.bf16.xpose.msra.mxu0 0
    %344 = vmatprep.subr.bf16.mxu0 0
    %345 = vmatpush1.bf16.xpose.msra.mxu0 0
    %346 = vmatprep.subr.bf16.mxu0 0
    %347 = vmatpush1.bf16.xpose.msra.mxu0 0
    %348 = vmatprep.subr.bf16.mxu0 0
    %349 = vmatpush1.bf16.xpose.msra.mxu0 0
    %350 = vmatprep.subr.bf16.mxu0 0
    %351 = vmatpush1.bf16.xpose.msra.mxu0 0
    %352 = vmatprep.subr.bf16.mxu0 0
    %353 = vmatpush1.bf16.xpose.msra.mxu0 %v336
    %354 = vmatprep.subr.bf16.mxu0 0
    %355 = vmatpush2.bf16.xpose.msra.mxu0 0
    %356 = vmatprep.subr.bf16.mxu0 0
    %357 = vmatpush2.bf16.xpose.msra.mxu0 0
    %358 = vmatprep.subr.bf16.mxu0 0
    %359 = vmatpush2.bf16.xpose.msra.mxu0 0
    %360 = vmatprep.subr.bf16.mxu0 0
    %361 = vmatpush2.bf16.xpose.msra.mxu0 0
    %362 = vmatprep.subr.bf16.mxu0 0
    %363 = vmatpush2.bf16.xpose.msra.mxu0 0
    %364 = vmatprep.subr.bf16.mxu0 0
    %365 = vmatpush2.bf16.xpose.msra.mxu0 0
    %366 = vmatprep.subr.bf16.mxu0 0
    %367 = vmatpush2.bf16.xpose.msra.mxu0 0
    %368 = vmatprep.subr.bf16.mxu0 0
    %369 = vmatpush2.bf16.xpose.msra.mxu0 0
    %370 = vmatprep.mubr.bf16.mxu0 0
    %371 = vmatmul.mubr.bf16.gmra.mxu0 %v333
    %v372 = vpop.f32.mrf.mxu0
    %v373 = vadd.f32 0.0, %v372
    %v374 = vpop.f32.mrf.mxu0
    %v375 = vpop.f32.mrf.mxu0
    %v376 = vpop.f32.mrf.mxu0
    %377 = vdwg.mxu0
    %v378 = vmul.f32 %v373, 0.35355338
    %v379 = vsel %vm326, -1e+09, %v378
    %v380 = vsel %vm331, %v379, -inf
    %381 = vmax.xlane.f32.xlu0 %v380
    %v382 = vpop.xlane.xlu0 %381
    %v383 = vsub.f32 %v379, %v382
    %v384 = vmul.f32 %v383, 1.442695
    %v385 = vpow.pop %v384
    %v386 = vsel %vm331, %v385, 0.0
    %387 = vadd.xlane.f32.xlu0 %v386
    %v388 = vpop.xlane.xlu0 %387
    %v389 = vrcp.pop %v388
    %v390 = vmul.f32 %v385, %v389
    %v391 = vpack.c.bf16 %v390, %v390
    %392 = vrot.lane.b32.xlu0 %v327, 64
    %v393 = vpop.permute.xlu0 %392
    %v395 = vsel %vm331, %v391, 0
    %vm397 = vcmask 1043456
    %v399 = vsel %vm397, %v393, 0
    %401 = vmatprep.subr.bf16.mxu0 0
    %402 = vmatpush1.bf16.msra.mxu0 0
    %403 = vmatprep.subr.bf16.mxu0 0
    %404 = vmatpush1.bf16.msra.mxu0 0
    %405 = vmatprep.subr.bf16.mxu0 0
    %406 = vmatpush1.bf16.msra.mxu0 0
    %407 = vmatprep.subr.bf16.mxu0 0
    %408 = vmatpush1.bf16.msra.mxu0 0
    %409 = vmatprep.subr.bf16.mxu0 0
    %410 = vmatpush1.bf16.msra.mxu0 0
    %411 = vmatprep.subr.bf16.mxu0 0
    %412 = vmatpush1.bf16.msra.mxu0 0
    %413 = vmatprep.subr.bf16.mxu0 0
    %414 = vmatpush1.bf16.msra.mxu0 0
    %415 = vmatprep.subr.bf16.mxu0 0
    %416 = vmatpush1.bf16.msra.mxu0 %v399
    %417 = vmatprep.subr.bf16.mxu0 0
    %418 = vmatpush2.bf16.msra.mxu0 0
    %419 = vmatprep.subr.bf16.mxu0 0
    %420 = vmatpush2.bf16.msra.mxu0 0
    %421 = vmatprep.subr.bf16.mxu0 0
    %422 = vmatpush2.bf16.msra.mxu0 0
    %423 = vmatprep.subr.bf16.mxu0 0
    %424 = vmatpush2.bf16.msra.mxu0 0
    %425 = vmatprep.subr.bf16.mxu0 0
    %426 = vmatpush2.bf16.msra.mxu0 0
    %427 = vmatprep.subr.bf16.mxu0 0
    %428 = vmatpush2.bf16.msra.mxu0 0
    %429 = vmatprep.subr.bf16.mxu0 0
    %430 = vmatpush2.bf16.msra.mxu0 0
    %431 = vmatprep.subr.bf16.mxu0 0
    %432 = vmatpush2.bf16.msra.mxu0 0
    %433 = vmatprep.mubr.bf16.mxu0 0
    %434 = vmatmul.mubr.bf16.gmra.mxu0 %v395
    %v435 = vpop.f32.mrf.mxu0
    %v436 = vadd.f32 0.0, %v435
    %v437 = vpop.f32.mrf.mxu0
    %v438 = vpop.f32.mrf.mxu0
    %v439 = vpop.f32.mrf.mxu0
    %440 = vdwg.mxu0
    %441 = vst.msk [vmem:[#allocation2] sm:$0xff] %vm331, %v436
    %442 = vrot.lane.b32.xlu0 %v327, 120
    %v443 = vpop.permute.xlu0 %442
    %444 = vrot.lane.b32.xlu0 %v327, 88
    %v445 = vpop.permute.xlu0 %444
    %v447 = vsel %vm331, %v443, 0
    %v450 = vsel %vm331, %v445, 0
    %452 = vmatprep.subr.bf16.mxu0 0
    %453 = vmatpush1.bf16.xpose.msra.mxu0 0
    %454 = vmatprep.subr.bf16.mxu0 0
    %455 = vmatpush1.bf16.xpose.msra.mxu0 0
    %456 = vmatprep.subr.bf16.mxu0 0
    %457 = vmatpush1.bf16.xpose.msra.mxu0 0
    %458 = vmatprep.subr.bf16.mxu0 0
    %459 = vmatpush1.bf16.xpose.msra.mxu0 0
    %460 = vmatprep.subr.bf16.mxu0 0
    %461 = vmatpush1.bf16.xpose.msra.mxu0 0
    %462 = vmatprep.subr.bf16.mxu0 0
    %463 = vmatpush1.bf16.xpose.msra.mxu0 0
    %464 = vmatprep.subr.bf16.mxu0 0
    %465 = vmatpush1.bf16.xpose.msra.mxu0 0
    %466 = vmatprep.subr.bf16.mxu0 0
    %467 = vmatpush1.bf16.xpose.msra.mxu0 %v450
    %468 = vmatprep.subr.bf16.mxu0 0
    %469 = vmatpush2.bf16.xpose.msra.mxu0 0
    %470 = vmatprep.subr.bf16.mxu0 0
    %471 = vmatpush2.bf16.xpose.msra.mxu0 0
    %472 = vmatprep.subr.bf16.mxu0 0
    %473 = vmatpush2.bf16.xpose.msra.mxu0 0
    %474 = vmatprep.subr.bf16.mxu0 0
    %475 = vmatpush2.bf16.xpose.msra.mxu0 0
    %476 = vmatprep.subr.bf16.mxu0 0
    %477 = vmatpush2.bf16.xpose.msra.mxu0 0
    %478 = vmatprep.subr.bf16.mxu0 0
    %479 = vmatpush2.bf16.xpose.msra.mxu0 0
    %480 = vmatprep.subr.bf16.mxu0 0
    %481 = vmatpush2.bf16.xpose.msra.mxu0 0
    %482 = vmatprep.subr.bf16.mxu0 0
    %483 = vmatpush2.bf16.xpose.msra.mxu0 0
    %484 = vmatprep.mubr.bf16.mxu0 0
    %485 = vmatmul.mubr.bf16.gmra.mxu0 %v447
    %v486 = vpop.f32.mrf.mxu0
    %v487 = vadd.f32 0.0, %v486
    %v488 = vpop.f32.mrf.mxu0
    %v489 = vpop.f32.mrf.mxu0
    %v490 = vpop.f32.mrf.mxu0
    %491 = vdwg.mxu0
    %v492 = vmul.f32 %v487, 0.35355338
    %v493 = vsel %vm326, -1e+09, %v492
    %v494 = vsel %vm331, %v493, -inf
    %495 = vmax.xlane.f32.xlu0 %v494
    %v496 = vpop.xlane.xlu0 %495
    %v497 = vsub.f32 %v493, %v496
    %v498 = vmul.f32 %v497, 1.442695
    %v499 = vpow.pop %v498
    %v500 = vsel %vm331, %v499, 0.0
    %501 = vadd.xlane.f32.xlu0 %v500
    %v502 = vpop.xlane.xlu0 %501
    %v503 = vrcp.pop %v502
    %v504 = vmul.f32 %v499, %v503
    %v505 = vpack.c.bf16 %v504, %v504
    %506 = vrot.lane.b32.xlu0 %v327, 56
    %v507 = vpop.permute.xlu0 %506
    %v509 = vsel %vm331, %v505, 0
    %v512 = vsel %vm397, %v507, 0
    %514 = vmatprep.subr.bf16.mxu0 0
    %515 = vmatpush1.bf16.msra.mxu0 0
    %516 = vmatprep.subr.bf16.mxu0 0
    %517 = vmatpush1.bf16.msra.mxu0 0
    %518 = vmatprep.subr.bf16.mxu0 0
    %519 = vmatpush1.bf16.msra.mxu0 0
    %520 = vmatprep.subr.bf16.mxu0 0
    %521 = vmatpush1.bf16.msra.mxu0 0
    %522 = vmatprep.subr.bf16.mxu0 0
    %523 = vmatpush1.bf16.msra.mxu0 0
    %524 = vmatprep.subr.bf16.mxu0 0
    %525 = vmatpush1.bf16.msra.mxu0 0
    %526 = vmatprep.subr.bf16.mxu0 0
    %527 = vmatpush1.bf16.msra.mxu0 0
    %528 = vmatprep.subr.bf16.mxu0 0
    %529 = vmatpush1.bf16.msra.mxu0 %v512
    %530 = vmatprep.subr.bf16.mxu0 0
    %531 = vmatpush2.bf16.msra.mxu0 0
    %532 = vmatprep.subr.bf16.mxu0 0
    %533 = vmatpush2.bf16.msra.mxu0 0
    %534 = vmatprep.subr.bf16.mxu0 0
    %535 = vmatpush2.bf16.msra.mxu0 0
    %536 = vmatprep.subr.bf16.mxu0 0
    %537 = vmatpush2.bf16.msra.mxu0 0
    %538 = vmatprep.subr.bf16.mxu0 0
    %539 = vmatpush2.bf16.msra.mxu0 0
    %540 = vmatprep.subr.bf16.mxu0 0
    %541 = vmatpush2.bf16.msra.mxu0 0
    %542 = vmatprep.subr.bf16.mxu0 0
    %543 = vmatpush2.bf16.msra.mxu0 0
    %544 = vmatprep.subr.bf16.mxu0 0
    %545 = vmatpush2.bf16.msra.mxu0 0
    %546 = vmatprep.mubr.bf16.mxu0 0
    %547 = vmatmul.mubr.bf16.gmra.mxu0 %v509
    %v548 = vpop.f32.mrf.mxu0
    %v549 = vadd.f32 0.0, %v548
    %v550 = vpop.f32.mrf.mxu0
    %v551 = vpop.f32.mrf.mxu0
    %v552 = vpop.f32.mrf.mxu0
    %553 = vdwg.mxu0
    %555 = vrot.lane.b32.xlu0 %v549, 8
    %v556 = vpop.permute.xlu0 %555
    %vm558 = vcmask 130112
    %559 = vst.msk [vmem:[#allocation2] sm:$0xff] %vm558, %v556
    %560 = vrot.lane.b32.xlu0 %v327, 112
    %v561 = vpop.permute.xlu0 %560
    %562 = vrot.lane.b32.xlu0 %v327, 80
    %v563 = vpop.permute.xlu0 %562
    %v565 = vsel %vm331, %v561, 0
    %v568 = vsel %vm331, %v563, 0
    %570 = vmatprep.subr.bf16.mxu0 0
    %571 = vmatpush1.bf16.xpose.msra.mxu0 0
    %572 = vmatprep.subr.bf16.mxu0 0
    %573 = vmatpush1.bf16.xpose.msra.mxu0 0
    %574 = vmatprep.subr.bf16.mxu0 0
    %575 = vmatpush1.bf16.xpose.msra.mxu0 0
    %576 = vmatprep.subr.bf16.mxu0 0
    %577 = vmatpush1.bf16.xpose.msra.mxu0 0
    %578 = vmatprep.subr.bf16.mxu0 0
    %579 = vmatpush1.bf16.xpose.msra.mxu0 0
    %580 = vmatprep.subr.bf16.mxu0 0
    %581 = vmatpush1.bf16.xpose.msra.mxu0 0
    %582 = vmatprep.subr.bf16.mxu0 0
    %583 = vmatpush1.bf16.xpose.msra.mxu0 0
    %584 = vmatprep.subr.bf16.mxu0 0
    %585 = vmatpush1.bf16.xpose.msra.mxu0 %v568
    %586 = vmatprep.subr.bf16.mxu0 0
    %587 = vmatpush2.bf16.xpose.msra.mxu0 0
    %588 = vmatprep.subr.bf16.mxu0 0
    %589 = vmatpush2.bf16.xpose.msra.mxu0 0
    %590 = vmatprep.subr.bf16.mxu0 0
    %591 = vmatpush2.bf16.xpose.msra.mxu0 0
    %592 = vmatprep.subr.bf16.mxu0 0
    %593 = vmatpush2.bf16.xpose.msra.mxu0 0
    %594 = vmatprep.subr.bf16.mxu0 0
    %595 = vmatpush2.bf16.xpose.msra.mxu0 0
    %596 = vmatprep.subr.bf16.mxu0 0
    %597 = vmatpush2.bf16.xpose.msra.mxu0 0
    %598 = vmatprep.subr.bf16.mxu0 0
    %599 = vmatpush2.bf16.xpose.msra.mxu0 0
    %600 = vmatprep.subr.bf16.mxu0 0
    %601 = vmatpush2.bf16.xpose.msra.mxu0 0
    %602 = vmatprep.mubr.bf16.mxu0 0
    %603 = vmatmul.mubr.bf16.gmra.mxu0 %v565
    %v604 = vpop.f32.mrf.mxu0
    %v605 = vadd.f32 0.0, %v604
    %v606 = vpop.f32.mrf.mxu0
    %v607 = vpop.f32.mrf.mxu0
    %v608 = vpop.f32.mrf.mxu0
    %609 = vdwg.mxu0
    %v610 = vmul.f32 %v605, 0.35355338
    %v611 = vsel %vm326, -1e+09, %v610
    %v612 = vsel %vm331, %v611, -inf
    %613 = vmax.xlane.f32.xlu0 %v612
    %v614 = vpop.xlane.xlu0 %613
    %v615 = vsub.f32 %v611, %v614
    %v616 = vmul.f32 %v615, 1.442695
    %v617 = vpow.pop %v616
    %v618 = vsel %vm331, %v617, 0.0
    %619 = vadd.xlane.f32.xlu0 %v618
    %v620 = vpop.xlane.xlu0 %619
    %v621 = vrcp.pop %v620
    %v622 = vmul.f32 %v617, %v621
    %v623 = vpack.c.bf16 %v622, %v622
    %624 = vrot.lane.b32.xlu0 %v327, 48
    %v625 = vpop.permute.xlu0 %624
    %v627 = vsel %vm331, %v623, 0
    %v630 = vsel %vm397, %v625, 0
    %632 = vmatprep.subr.bf16.mxu0 0
    %633 = vmatpush1.bf16.msra.mxu0 0
    %634 = vmatprep.subr.bf16.mxu0 0
    %635 = vmatpush1.bf16.msra.mxu0 0
    %636 = vmatprep.subr.bf16.mxu0 0
    %637 = vmatpush1.bf16.msra.mxu0 0
    %638 = vmatprep.subr.bf16.mxu0 0
    %639 = vmatpush1.bf16.msra.mxu0 0
    %640 = vmatprep.subr.bf16.mxu0 0
    %641 = vmatpush1.bf16.msra.mxu0 0
    %642 = vmatprep.subr.bf16.mxu0 0
    %643 = vmatpush1.bf16.msra.mxu0 0
    %644 = vmatprep.subr.bf16.mxu0 0
    %645 = vmatpush1.bf16.msra.mxu0 0
    %646 = vmatprep.subr.bf16.mxu0 0
    %647 = vmatpush1.bf16.msra.mxu0 %v630
    %648 = vmatprep.subr.bf16.mxu0 0
    %649 = vmatpush2.bf16.msra.mxu0 0
    %650 = vmatprep.subr.bf16.mxu0 0
    %651 = vmatpush2.bf16.msra.mxu0 0
    %652 = vmatprep.subr.bf16.mxu0 0
    %653 = vmatpush2.bf16.msra.mxu0 0
    %654 = vmatprep.subr.bf16.mxu0 0
    %655 = vmatpush2.bf16.msra.mxu0 0
    %656 = vmatprep.subr.bf16.mxu0 0
    %657 = vmatpush2.bf16.msra.mxu0 0
    %658 = vmatprep.subr.bf16.mxu0 0
    %659 = vmatpush2.bf16.msra.mxu0 0
    %660 = vmatprep.subr.bf16.mxu0 0
    %661 = vmatpush2.bf16.msra.mxu0 0
    %662 = vmatprep.subr.bf16.mxu0 0
    %663 = vmatpush2.bf16.msra.mxu0 0
    %664 = vmatprep.mubr.bf16.mxu0 0
    %665 = vmatmul.mubr.bf16.gmra.mxu0 %v627
    %v666 = vpop.f32.mrf.mxu0
    %v667 = vadd.f32 0.0, %v666
    %v668 = vpop.f32.mrf.mxu0
    %v669 = vpop.f32.mrf.mxu0
    %v670 = vpop.f32.mrf.mxu0
    %671 = vdwg.mxu0
    %673 = vrot.lane.b32.xlu0 %v667, 16
    %v674 = vpop.permute.xlu0 %673
    %vm676 = vcmask 195712
    %677 = vst.msk [vmem:[#allocation2] sm:$0xff] %vm676, %v674
    %678 = vrot.lane.b32.xlu0 %v327, 104
    %v679 = vpop.permute.xlu0 %678
    %680 = vrot.lane.b32.xlu0 %v327, 72
    %v681 = vpop.permute.xlu0 %680
    %v683 = vsel %vm331, %v679, 0
    %v686 = vsel %vm331, %v681, 0
    %688 = vmatprep.subr.bf16.mxu0 0
    %689 = vmatpush1.bf16.xpose.msra.mxu0 0
    %690 = vmatprep.subr.bf16.mxu0 0
    %691 = vmatpush1.bf16.xpose.msra.mxu0 0
    %692 = vmatprep.subr.bf16.mxu0 0
    %693 = vmatpush1.bf16.xpose.msra.mxu0 0
    %694 = vmatprep.subr.bf16.mxu0 0
    %695 = vmatpush1.bf16.xpose.msra.mxu0 0
    %696 = vmatprep.subr.bf16.mxu0 0
    %697 = vmatpush1.bf16.xpose.msra.mxu0 0
    %698 = vmatprep.subr.bf16.mxu0 0
    %699 = vmatpush1.bf16.xpose.msra.mxu0 0
    %700 = vmatprep.subr.bf16.mxu0 0
    %701 = vmatpush1.bf16.xpose.msra.mxu0 0
    %702 = vmatprep.subr.bf16.mxu0 0
    %703 = vmatpush1.bf16.xpose.msra.mxu0 %v686
    %704 = vmatprep.subr.bf16.mxu0 0
    %705 = vmatpush2.bf16.xpose.msra.mxu0 0
    %706 = vmatprep.subr.bf16.mxu0 0
    %707 = vmatpush2.bf16.xpose.msra.mxu0 0
    %708 = vmatprep.subr.bf16.mxu0 0
    %709 = vmatpush2.bf16.xpose.msra.mxu0 0
    %710 = vmatprep.subr.bf16.mxu0 0
    %711 = vmatpush2.bf16.xpose.msra.mxu0 0
    %712 = vmatprep.subr.bf16.mxu0 0
    %713 = vmatpush2.bf16.xpose.msra.mxu0 0
    %714 = vmatprep.subr.bf16.mxu0 0
    %715 = vmatpush2.bf16.xpose.msra.mxu0 0
    %716 = vmatprep.subr.bf16.mxu0 0
    %717 = vmatpush2.bf16.xpose.msra.mxu0 0
    %718 = vmatprep.subr.bf16.mxu0 0
    %719 = vmatpush2.bf16.xpose.msra.mxu0 0
    %720 = vmatprep.mubr.bf16.mxu0 0
    %721 = vmatmul.mubr.bf16.gmra.mxu0 %v683
    %v722 = vpop.f32.mrf.mxu0
    %v723 = vadd.f32 0.0, %v722
    %v724 = vpop.f32.mrf.mxu0
    %v725 = vpop.f32.mrf.mxu0
    %v726 = vpop.f32.mrf.mxu0
    %727 = vdwg.mxu0
    %v728 = vmul.f32 %v723, 0.35355338
    %v729 = vsel %vm326, -1e+09, %v728
    %v730 = vsel %vm331, %v729, -inf
    %731 = vmax.xlane.f32.xlu0 %v730
    %v732 = vpop.xlane.xlu0 %731
    %v733 = vsub.f32 %v729, %v732
    %v734 = vmul.f32 %v733, 1.442695
    %v735 = vpow.pop %v734
    %v736 = vsel %vm331, %v735, 0.0
    %737 = vadd.xlane.f32.xlu0 %v736
    %v738 = vpop.xlane.xlu0 %737
    %v739 = vrcp.pop %v738
    %v740 = vmul.f32 %v735, %v739
    %v741 = vpack.c.bf16 %v740, %v740
    %742 = vrot.lane.b32.xlu0 %v327, 40
    %v743 = vpop.permute.xlu0 %742
    %v745 = vsel %vm331, %v741, 0
    %v748 = vsel %vm397, %v743, 0
    %750 = vmatprep.subr.bf16.mxu0 0
    %751 = vmatpush1.bf16.msra.mxu0 0
    %752 = vmatprep.subr.bf16.mxu0 0
    %753 = vmatpush1.bf16.msra.mxu0 0
    %754 = vmatprep.subr.bf16.mxu0 0
    %755 = vmatpush1.bf16.msra.mxu0 0
    %756 = vmatprep.subr.bf16.mxu0 0
    %757 = vmatpush1.bf16.msra.mxu0 0
    %758 = vmatprep.subr.bf16.mxu0 0
    %759 = vmatpush1.bf16.msra.mxu0 0
    %760 = vmatprep.subr.bf16.mxu0 0
    %761 = vmatpush1.bf16.msra.mxu0 0
    %762 = vmatprep.subr.bf16.mxu0 0
    %763 = vmatpush1.bf16.msra.mxu0 0
    %764 = vmatprep.subr.bf16.mxu0 0
    %765 = vmatpush1.bf16.msra.mxu0 %v748
    %766 = vmatprep.subr.bf16.mxu0 0
    %767 = vmatpush2.bf16.msra.mxu0 0
    %768 = vmatprep.subr.bf16.mxu0 0
    %769 = vmatpush2.bf16.msra.mxu0 0
    %770 = vmatprep.subr.bf16.mxu0 0
    %771 = vmatpush2.bf16.msra.mxu0 0
    %772 = vmatprep.subr.bf16.mxu0 0
    %773 = vmatpush2.bf16.msra.mxu0 0
    %774 = vmatprep.subr.bf16.mxu0 0
    %775 = vmatpush2.bf16.msra.mxu0 0
    %776 = vmatprep.subr.bf16.mxu0 0
    %777 = vmatpush2.bf16.msra.mxu0 0
    %778 = vmatprep.subr.bf16.mxu0 0
    %779 = vmatpush2.bf16.msra.mxu0 0
    %780 = vmatprep.subr.bf16.mxu0 0
    %781 = vmatpush2.bf16.msra.mxu0 0
    %782 = vmatprep.mubr.bf16.mxu0 0
    %783 = vmatmul.mubr.bf16.gmra.mxu0 %v745
    %v784 = vpop.f32.mrf.mxu0
    %v785 = vadd.f32 0.0, %v784
    %v786 = vpop.f32.mrf.mxu0
    %v787 = vpop.f32.mrf.mxu0
    %v788 = vpop.f32.mrf.mxu0
    %789 = vdwg.mxu0
    %791 = vrot.lane.b32.xlu0 %v785, 24
    %v792 = vpop.permute.xlu0 %791
    %vm794 = vcmask 261312
    %795 = vst.msk [vmem:[#allocation2] sm:$0xff] %vm794, %v792
    %s796 = scalar_lea.vmem %s2, 8
    %v797 = vld [vmem:[%s796] sm:$0xff]
    %vm798 = vcmp.eq.f32.partialorder %v797, 0.0
    %v799 = vpack.c.bf16 %v322, %v322
    %801 = vrot.lane.b32.xlu0 %v799, 96
    %v802 = vpop.permute.xlu0 %801
    %v804 = vsel %vm331, %v799, 0
    %v807 = vsel %vm331, %v802, 0
    %809 = vmatprep.subr.bf16.mxu0 0
    %810 = vmatpush1.bf16.xpose.msra.mxu0 0
    %811 = vmatprep.subr.bf16.mxu0 0
    %812 = vmatpush1.bf16.xpose.msra.mxu0 0
    %813 = vmatprep.subr.bf16.mxu0 0
    %814 = vmatpush1.bf16.xpose.msra.mxu0 0
    %815 = vmatprep.subr.bf16.mxu0 0
    %816 = vmatpush1.bf16.xpose.msra.mxu0 0
    %817 = vmatprep.subr.bf16.mxu0 0
    %818 = vmatpush1.bf16.xpose.msra.mxu0 0
    %819 = vmatprep.subr.bf16.mxu0 0
    %820 = vmatpush1.bf16.xpose.msra.mxu0 0
    %821 = vmatprep.subr.bf16.mxu0 0
    %822 = vmatpush1.bf16.xpose.msra.mxu0 0
    %823 = vmatprep.subr.bf16.mxu0 0
    %824 = vmatpush1.bf16.xpose.msra.mxu0 %v807
    %825 = vmatprep.subr.bf16.mxu0 0
    %826 = vmatpush2.bf16.xpose.msra.mxu0 0
    %827 = vmatprep.subr.bf16.mxu0 0
    %828 = vmatpush2.bf16.xpose.msra.mxu0 0
    %829 = vmatprep.subr.bf16.mxu0 0
    %830 = vmatpush2.bf16.xpose.msra.mxu0 0
    %831 = vmatprep.subr.bf16.mxu0 0
    %832 = vmatpush2.bf16.xpose.msra.mxu0 0
    %833 = vmatprep.subr.bf16.mxu0 0
    %834 = vmatpush2.bf16.xpose.msra.mxu0 0
    %835 = vmatprep.subr.bf16.mxu0 0
    %836 = vmatpush2.bf16.xpose.msra.mxu0 0
    %837 = vmatprep.subr.bf16.mxu0 0
    %838 = vmatpush2.bf16.xpose.msra.mxu0 0
    %839 = vmatprep.subr.bf16.mxu0 0
    %840 = vmatpush2.bf16.xpose.msra.mxu0 0
    %841 = vmatprep.mubr.bf16.mxu0 0
    %842 = vmatmul.mubr.bf16.gmra.mxu0 %v804
    %v843 = vpop.f32.mrf.mxu0
    %v844 = vadd.f32 0.0, %v843
    %v845 = vpop.f32.mrf.mxu0
    %v846 = vpop.f32.mrf.mxu0
    %v847 = vpop.f32.mrf.mxu0
    %848 = vdwg.mxu0
    %v849 = vmul.f32 %v844, 0.35355338
    %v850 = vsel %vm798, -1e+09, %v849
    %v851 = vsel %vm331, %v850, -inf
    %852 = vmax.xlane.f32.xlu0 %v851
    %v853 = vpop.xlane.xlu0 %852
    %v854 = vsub.f32 %v850, %v853
    %v855 = vmul.f32 %v854, 1.442695
    %v856 = vpow.pop %v855
    %v857 = vsel %vm331, %v856, 0.0
    %858 = vadd.xlane.f32.xlu0 %v857
    %v859 = vpop.xlane.xlu0 %858
    %v860 = vrcp.pop %v859
    %v861 = vmul.f32 %v856, %v860
    %v862 = vpack.c.bf16 %v861, %v861
    %863 = vrot.lane.b32.xlu0 %v799, 64
    %v864 = vpop.permute.xlu0 %863
    %v866 = vsel %vm331, %v862, 0
    %v869 = vsel %vm397, %v864, 0
    %871 = vmatprep.subr.bf16.mxu0 0
    %872 = vmatpush1.bf16.msra.mxu0 0
    %873 = vmatprep.subr.bf16.mxu0 0
    %874 = vmatpush1.bf16.msra.mxu0 0
    %875 = vmatprep.subr.bf16.mxu0 0
    %876 = vmatpush1.bf16.msra.mxu0 0
    %877 = vmatprep.subr.bf16.mxu0 0
    %878 = vmatpush1.bf16.msra.mxu0 0
    %879 = vmatprep.subr.bf16.mxu0 0
    %880 = vmatpush1.bf16.msra.mxu0 0
    %881 = vmatprep.subr.bf16.mxu0 0
    %882 = vmatpush1.bf16.msra.mxu0 0
    %883 = vmatprep.subr.bf16.mxu0 0
    %884 = vmatpush1.bf16.msra.mxu0 0
    %885 = vmatprep.subr.bf16.mxu0 0
    %886 = vmatpush1.bf16.msra.mxu0 %v869
    %887 = vmatprep.subr.bf16.mxu0 0
    %888 = vmatpush2.bf16.msra.mxu0 0
    %889 = vmatprep.subr.bf16.mxu0 0
    %890 = vmatpush2.bf16.msra.mxu0 0
    %891 = vmatprep.subr.bf16.mxu0 0
    %892 = vmatpush2.bf16.msra.mxu0 0
    %893 = vmatprep.subr.bf16.mxu0 0
    %894 = vmatpush2.bf16.msra.mxu0 0
    %895 = vmatprep.subr.bf16.mxu0 0
    %896 = vmatpush2.bf16.msra.mxu0 0
    %897 = vmatprep.subr.bf16.mxu0 0
    %898 = vmatpush2.bf16.msra.mxu0 0
    %899 = vmatprep.subr.bf16.mxu0 0
    %900 = vmatpush2.bf16.msra.mxu0 0
    %901 = vmatprep.subr.bf16.mxu0 0
    %902 = vmatpush2.bf16.msra.mxu0 0
    %903 = vmatprep.mubr.bf16.mxu0 0
    %904 = vmatmul.mubr.bf16.gmra.mxu0 %v866
    %v905 = vpop.f32.mrf.mxu0
    %v906 = vadd.f32 0.0, %v905
    %v907 = vpop.f32.mrf.mxu0
    %v908 = vpop.f32.mrf.mxu0
    %v909 = vpop.f32.mrf.mxu0
    %910 = vdwg.mxu0
    %911 = vst.msk [vmem:[#allocation2 + $0x8] sm:$0xff] %vm331, %v906
    %912 = vrot.lane.b32.xlu0 %v799, 120
    %v913 = vpop.permute.xlu0 %912
    %914 = vrot.lane.b32.xlu0 %v799, 88
    %v915 = vpop.permute.xlu0 %914
    %v917 = vsel %vm331, %v913, 0
    %v920 = vsel %vm331, %v915, 0
    %922 = vmatprep.subr.bf16.mxu0 0
    %923 = vmatpush1.bf16.xpose.msra.mxu0 0
    %924 = vmatprep.subr.bf16.mxu0 0
    %925 = vmatpush1.bf16.xpose.msra.mxu0 0
    %926 = vmatprep.subr.bf16.mxu0 0
    %927 = vmatpush1.bf16.xpose.msra.mxu0 0
    %928 = vmatprep.subr.bf16.mxu0 0
    %929 = vmatpush1.bf16.xpose.msra.mxu0 0
    %930 = vmatprep.subr.bf16.mxu0 0
    %931 = vmatpush1.bf16.xpose.msra.mxu0 0
    %932 = vmatprep.subr.bf16.mxu0 0
    %933 = vmatpush1.bf16.xpose.msra.mxu0 0
    %934 = vmatprep.subr.bf16.mxu0 0
    %935 = vmatpush1.bf16.xpose.msra.mxu0 0
    %936 = vmatprep.subr.bf16.mxu0 0
    %937 = vmatpush1.bf16.xpose.msra.mxu0 %v920
    %938 = vmatprep.subr.bf16.mxu0 0
    %939 = vmatpush2.bf16.xpose.msra.mxu0 0
    %940 = vmatprep.subr.bf16.mxu0 0
    %941 = vmatpush2.bf16.xpose.msra.mxu0 0
    %942 = vmatprep.subr.bf16.mxu0 0
    %943 = vmatpush2.bf16.xpose.msra.mxu0 0
    %944 = vmatprep.subr.bf16.mxu0 0
    %945 = vmatpush2.bf16.xpose.msra.mxu0 0
    %946 = vmatprep.subr.bf16.mxu0 0
    %947 = vmatpush2.bf16.xpose.msra.mxu0 0
    %948 = vmatprep.subr.bf16.mxu0 0
    %949 = vmatpush2.bf16.xpose.msra.mxu0 0
    %950 = vmatprep.subr.bf16.mxu0 0
    %951 = vmatpush2.bf16.xpose.msra.mxu0 0
    %952 = vmatprep.subr.bf16.mxu0 0
    %953 = vmatpush2.bf16.xpose.msra.mxu0 0
    %954 = vmatprep.mubr.bf16.mxu0 0
    %955 = vmatmul.mubr.bf16.gmra.mxu0 %v917
    %v956 = vpop.f32.mrf.mxu0
    %v957 = vadd.f32 0.0, %v956
    %v958 = vpop.f32.mrf.mxu0
    %v959 = vpop.f32.mrf.mxu0
    %v960 = vpop.f32.mrf.mxu0
    %961 = vdwg.mxu0
    %v962 = vmul.f32 %v957, 0.35355338
    %v963 = vsel %vm798, -1e+09, %v962
    %v964 = vsel %vm331, %v963, -inf
    %965 = vmax.xlane.f32.xlu0 %v964
    %v966 = vpop.xlane.xlu0 %965
    %v967 = vsub.f32 %v963, %v966
    %v968 = vmul.f32 %v967, 1.442695
    %v969 = vpow.pop %v968
    %v970 = vsel %vm331, %v969, 0.0
    %971 = vadd.xlane.f32.xlu0 %v970
    %v972 = vpop.xlane.xlu0 %971
    %v973 = vrcp.pop %v972
    %v974 = vmul.f32 %v969, %v973
    %v975 = vpack.c.bf16 %v974, %v974
    %976 = vrot.lane.b32.xlu0 %v799, 56
    %v977 = vpop.permute.xlu0 %976
    %v979 = vsel %vm331, %v975, 0
    %v982 = vsel %vm397, %v977, 0
    %984 = vmatprep.subr.bf16.mxu0 0
    %985 = vmatpush1.bf16.msra.mxu0 0
    %986 = vmatprep.subr.bf16.mxu0 0
    %987 = vmatpush1.bf16.msra.mxu0 0
    %988 = vmatprep.subr.bf16.mxu0 0
    %989 = vmatpush1.bf16.msra.mxu0 0
    %990 = vmatprep.subr.bf16.mxu0 0
    %991 = vmatpush1.bf16.msra.mxu0 0
    %992 = vmatprep.subr.bf16.mxu0 0
    %993 = vmatpush1.bf16.msra.mxu0 0
    %994 = vmatprep.subr.bf16.mxu0 0
    %995 = vmatpush1.bf16.msra.mxu0 0
    %996 = vmatprep.subr.bf16.mxu0 0
    %997 = vmatpush1.bf16.msra.mxu0 0
    %998 = vmatprep.subr.bf16.mxu0 0
    %999 = vmatpush1.bf16.msra.mxu0 %v982
    %1000 = vmatprep.subr.bf16.mxu0 0
    %1001 = vmatpush2.bf16.msra.mxu0 0
    %1002 = vmatprep.subr.bf16.mxu0 0
    %1003 = vmatpush2.bf16.msra.mxu0 0
    %1004 = vmatprep.subr.bf16.mxu0 0
    %1005 = vmatpush2.bf16.msra.mxu0 0
    %1006 = vmatprep.subr.bf16.mxu0 0
    %1007 = vmatpush2.bf16.msra.mxu0 0
    %1008 = vmatprep.subr.bf16.mxu0 0
    %1009 = vmatpush2.bf16.msra.mxu0 0
    %1010 = vmatprep.subr.bf16.mxu0 0
    %1011 = vmatpush2.bf16.msra.mxu0 0
    %1012 = vmatprep.subr.bf16.mxu0 0
    %1013 = vmatpush2.bf16.msra.mxu0 0
    %1014 = vmatprep.subr.bf16.mxu0 0
    %1015 = vmatpush2.bf16.msra.mxu0 0
    %1016 = vmatprep.mubr.bf16.mxu0 0
    %1017 = vmatmul.mubr.bf16.gmra.mxu0 %v979
    %v1018 = vpop.f32.mrf.mxu0
    %v1019 = vadd.f32 0.0, %v1018
    %v1020 = vpop.f32.mrf.mxu0
    %v1021 = vpop.f32.mrf.mxu0
    %v1022 = vpop.f32.mrf.mxu0
    %1023 = vdwg.mxu0
    %1025 = vrot.lane.b32.xlu0 %v1019, 8
    %v1026 = vpop.permute.xlu0 %1025
    %1028 = vst.msk [vmem:[#allocation2 + $0x8] sm:$0xff] %vm558, %v1026
    %1029 = vrot.lane.b32.xlu0 %v799, 112
    %v1030 = vpop.permute.xlu0 %1029
    %1031 = vrot.lane.b32.xlu0 %v799, 80
    %v1032 = vpop.permute.xlu0 %1031
    %v1034 = vsel %vm331, %v1030, 0
    %v1037 = vsel %vm331, %v1032, 0
    %1039 = vmatprep.subr.bf16.mxu0 0
    %1040 = vmatpush1.bf16.xpose.msra.mxu0 0
    %1041 = vmatprep.subr.bf16.mxu0 0
    %1042 = vmatpush1.bf16.xpose.msra.mxu0 0
    %1043 = vmatprep.subr.bf16.mxu0 0
    %1044 = vmatpush1.bf16.xpose.msra.mxu0 0
    %1045 = vmatprep.subr.bf16.mxu0 0
    %1046 = vmatpush1.bf16.xpose.msra.mxu0 0
    %1047 = vmatprep.subr.bf16.mxu0 0
    %1048 = vmatpush1.bf16.xpose.msra.mxu0 0
    %1049 = vmatprep.subr.bf16.mxu0 0
    %1050 = vmatpush1.bf16.xpose.msra.mxu0 0
    %1051 = vmatprep.subr.bf16.mxu0 0
    %1052 = vmatpush1.bf16.xpose.msra.mxu0 0
    %1053 = vmatprep.subr.bf16.mxu0 0
    %1054 = vmatpush1.bf16.xpose.msra.mxu0 %v1037
    %1055 = vmatprep.subr.bf16.mxu0 0
    %1056 = vmatpush2.bf16.xpose.msra.mxu0 0
    %1057 = vmatprep.subr.bf16.mxu0 0
    %1058 = vmatpush2.bf16.xpose.msra.mxu0 0
    %1059 = vmatprep.subr.bf16.mxu0 0
    %1060 = vmatpush2.bf16.xpose.msra.mxu0 0
    %1061 = vmatprep.subr.bf16.mxu0 0
    %1062 = vmatpush2.bf16.xpose.msra.mxu0 0
    %1063 = vmatprep.subr.bf16.mxu0 0
    %1064 = vmatpush2.bf16.xpose.msra.mxu0 0
    %1065 = vmatprep.subr.bf16.mxu0 0
    %1066 = vmatpush2.bf16.xpose.msra.mxu0 0
    %1067 = vmatprep.subr.bf16.mxu0 0
    %1068 = vmatpush2.bf16.xpose.msra.mxu0 0
    %1069 = vmatprep.subr.bf16.mxu0 0
    %1070 = vmatpush2.bf16.xpose.msra.mxu0 0
    %1071 = vmatprep.mubr.bf16.mxu0 0
    %1072 = vmatmul.mubr.bf16.gmra.mxu0 %v1034
    %v1073 = vpop.f32.mrf.mxu0
    %v1074 = vadd.f32 0.0, %v1073
    %v1075 = vpop.f32.mrf.mxu0
    %v1076 = vpop.f32.mrf.mxu0
    %v1077 = vpop.f32.mrf.mxu0
    %1078 = vdwg.mxu0
    %v1079 = vmul.f32 %v1074, 0.35355338
    %v1080 = vsel %vm798, -1e+09, %v1079
    %v1081 = vsel %vm331, %v1080, -inf
    %1082 = vmax.xlane.f32.xlu0 %v1081
    %v1083 = vpop.xlane.xlu0 %1082
    %v1084 = vsub.f32 %v1080, %v1083
    %v1085 = vmul.f32 %v1084, 1.442695
    %v1086 = vpow.pop %v1085
    %v1087 = vsel %vm331, %v1086, 0.0
    %1088 = vadd.xlane.f32.xlu0 %v1087
    %v1089 = vpop.xlane.xlu0 %1088
    %v1090 = vrcp.pop %v1089
    %v1091 = vmul.f32 %v1086, %v1090
    %v1092 = vpack.c.bf16 %v1091, %v1091
    %1093 = vrot.lane.b32.xlu0 %v799, 48
    %v1094 = vpop.permute.xlu0 %1093
    %v1096 = vsel %vm331, %v1092, 0
    %v1099 = vsel %vm397, %v1094, 0
    %1101 = vmatprep.subr.bf16.mxu0 0
    %1102 = vmatpush1.bf16.msra.mxu0 0
    %1103 = vmatprep.subr.bf16.mxu0 0
    %1104 = vmatpush1.bf16.msra.mxu0 0
    %1105 = vmatprep.subr.bf16.mxu0 0
    %1106 = vmatpush1.bf16.msra.mxu0 0
    %1107 = vmatprep.subr.bf16.mxu0 0
    %1108 = vmatpush1.bf16.msra.mxu0 0
    %1109 = vmatprep.subr.bf16.mxu0 0
    %1110 = vmatpush1.bf16.msra.mxu0 0
    %1111 = vmatprep.subr.bf16.mxu0 0
    %1112 = vmatpush1.bf16.msra.mxu0 0
    %1113 = vmatprep.subr.bf16.mxu0 0
    %1114 = vmatpush1.bf16.msra.mxu0 0
    %1115 = vmatprep.subr.bf16.mxu0 0
    %1116 = vmatpush1.bf16.msra.mxu0 %v1099
    %1117 = vmatprep.subr.bf16.mxu0 0
    %1118 = vmatpush2.bf16.msra.mxu0 0
    %1119 = vmatprep.subr.bf16.mxu0 0
    %1120 = vmatpush2.bf16.msra.mxu0 0
    %1121 = vmatprep.subr.bf16.mxu0 0
    %1122 = vmatpush2.bf16.msra.mxu0 0
    %1123 = vmatprep.subr.bf16.mxu0 0
    %1124 = vmatpush2.bf16.msra.mxu0 0
    %1125 = vmatprep.subr.bf16.mxu0 0
    %1126 = vmatpush2.bf16.msra.mxu0 0
    %1127 = vmatprep.subr.bf16.mxu0 0
    %1128 = vmatpush2.bf16.msra.mxu0 0
    %1129 = vmatprep.subr.bf16.mxu0 0
    %1130 = vmatpush2.bf16.msra.mxu0 0
    %1131 = vmatprep.subr.bf16.mxu0 0
    %1132 = vmatpush2.bf16.msra.mxu0 0
    %1133 = vmatprep.mubr.bf16.mxu0 0
    %1134 = vmatmul.mubr.bf16.gmra.mxu0 %v1096
    %v1135 = vpop.f32.mrf.mxu0
    %v1136 = vadd.f32 0.0, %v1135
    %v1137 = vpop.f32.mrf.mxu0
    %v1138 = vpop.f32.mrf.mxu0
    %v1139 = vpop.f32.mrf.mxu0
    %1140 = vdwg.mxu0
    %1142 = vrot.lane.b32.xlu0 %v1136, 16
    %v1143 = vpop.permute.xlu0 %1142
    %1145 = vst.msk [vmem:[#allocation2 + $0x8] sm:$0xff] %vm676, %v1143
    %1146 = vrot.lane.b32.xlu0 %v799, 104
    %v1147 = vpop.permute.xlu0 %1146
    %1148 = vrot.lane.b32.xlu0 %v799, 72
    %v1149 = vpop.permute.xlu0 %1148
    %v1151 = vsel %vm331, %v1147, 0
    %v1154 = vsel %vm331, %v1149, 0
    %1156 = vmatprep.subr.bf16.mxu0 0
    %1157 = vmatpush1.bf16.xpose.msra.mxu0 0
    %1158 = vmatprep.subr.bf16.mxu0 0
    %1159 = vmatpush1.bf16.xpose.msra.mxu0 0
    %1160 = vmatprep.subr.bf16.mxu0 0
    %1161 = vmatpush1.bf16.xpose.msra.mxu0 0
    %1162 = vmatprep.subr.bf16.mxu0 0
    %1163 = vmatpush1.bf16.xpose.msra.mxu0 0
    %1164 = vmatprep.subr.bf16.mxu0 0
    %1165 = vmatpush1.bf16.xpose.msra.mxu0 0
    %1166 = vmatprep.subr.bf16.mxu0 0
    %1167 = vmatpush1.bf16.xpose.msra.mxu0 0
    %1168 = vmatprep.subr.bf16.mxu0 0
    %1169 = vmatpush1.bf16.xpose.msra.mxu0 0
    %1170 = vmatprep.subr.bf16.mxu0 0
    %1171 = vmatpush1.bf16.xpose.msra.mxu0 %v1154
    %1172 = vmatprep.subr.bf16.mxu0 0
    %1173 = vmatpush2.bf16.xpose.msra.mxu0 0
    %1174 = vmatprep.subr.bf16.mxu0 0
    %1175 = vmatpush2.bf16.xpose.msra.mxu0 0
    %1176 = vmatprep.subr.bf16.mxu0 0
    %1177 = vmatpush2.bf16.xpose.msra.mxu0 0
    %1178 = vmatprep.subr.bf16.mxu0 0
    %1179 = vmatpush2.bf16.xpose.msra.mxu0 0
    %1180 = vmatprep.subr.bf16.mxu0 0
    %1181 = vmatpush2.bf16.xpose.msra.mxu0 0
    %1182 = vmatprep.subr.bf16.mxu0 0
    %1183 = vmatpush2.bf16.xpose.msra.mxu0 0
    %1184 = vmatprep.subr.bf16.mxu0 0
    %1185 = vmatpush2.bf16.xpose.msra.mxu0 0
    %1186 = vmatprep.subr.bf16.mxu0 0
    %1187 = vmatpush2.bf16.xpose.msra.mxu0 0
    %1188 = vmatprep.mubr.bf16.mxu0 0
    %1189 = vmatmul.mubr.bf16.gmra.mxu0 %v1151
    %v1190 = vpop.f32.mrf.mxu0
    %v1191 = vadd.f32 0.0, %v1190
    %v1192 = vpop.f32.mrf.mxu0
    %v1193 = vpop.f32.mrf.mxu0
    %v1194 = vpop.f32.mrf.mxu0
    %1195 = vdwg.mxu0
    %v1196 = vmul.f32 %v1191, 0.35355338
    %v1197 = vsel %vm798, -1e+09, %v1196
    %v1198 = vsel %vm331, %v1197, -inf
    %1199 = vmax.xlane.f32.xlu0 %v1198
    %v1200 = vpop.xlane.xlu0 %1199
    %v1201 = vsub.f32 %v1197, %v1200
    %v1202 = vmul.f32 %v1201, 1.442695
    %v1203 = vpow.pop %v1202
    %v1204 = vsel %vm331, %v1203, 0.0
    %1205 = vadd.xlane.f32.xlu0 %v1204
    %v1206 = vpop.xlane.xlu0 %1205
    %v1207 = vrcp.pop %v1206
    %v1208 = vmul.f32 %v1203, %v1207
    %v1209 = vpack.c.bf16 %v1208, %v1208
    %1210 = vrot.lane.b32.xlu0 %v799, 40
    %v1211 = vpop.permute.xlu0 %1210
    %v1213 = vsel %vm331, %v1209, 0
    %v1216 = vsel %vm397, %v1211, 0
    %1218 = vmatprep.subr.bf16.mxu0 0
    %1219 = vmatpush1.bf16.msra.mxu0 0
    %1220 = vmatprep.subr.bf16.mxu0 0
    %1221 = vmatpush1.bf16.msra.mxu0 0
    %1222 = vmatprep.subr.bf16.mxu0 0
    %1223 = vmatpush1.bf16.msra.mxu0 0
    %1224 = vmatprep.subr.bf16.mxu0 0
    %1225 = vmatpush1.bf16.msra.mxu0 0
    %1226 = vmatprep.subr.bf16.mxu0 0
    %1227 = vmatpush1.bf16.msra.mxu0 0
    %1228 = vmatprep.subr.bf16.mxu0 0
    %1229 = vmatpush1.bf16.msra.mxu0 0
    %1230 = vmatprep.subr.bf16.mxu0 0
    %1231 = vmatpush1.bf16.msra.mxu0 0
    %1232 = vmatprep.subr.bf16.mxu0 0
    %1233 = vmatpush1.bf16.msra.mxu0 %v1216
    %1234 = vmatprep.subr.bf16.mxu0 0
    %1235 = vmatpush2.bf16.msra.mxu0 0
    %1236 = vmatprep.subr.bf16.mxu0 0
    %1237 = vmatpush2.bf16.msra.mxu0 0
    %1238 = vmatprep.subr.bf16.mxu0 0
    %1239 = vmatpush2.bf16.msra.mxu0 0
    %1240 = vmatprep.subr.bf16.mxu0 0
    %1241 = vmatpush2.bf16.msra.mxu0 0
    %1242 = vmatprep.subr.bf16.mxu0 0
    %1243 = vmatpush2.bf16.msra.mxu0 0
    %1244 = vmatprep.subr.bf16.mxu0 0
    %1245 = vmatpush2.bf16.msra.mxu0 0
    %1246 = vmatprep.subr.bf16.mxu0 0
    %1247 = vmatpush2.bf16.msra.mxu0 0
    %1248 = vmatprep.subr.bf16.mxu0 0
    %1249 = vmatpush2.bf16.msra.mxu0 0
    %1250 = vmatprep.mubr.bf16.mxu0 0
    %1251 = vmatmul.mubr.bf16.gmra.mxu0 %v1213
    %v1252 = vpop.f32.mrf.mxu0
    %v1253 = vadd.f32 0.0, %v1252
    %v1254 = vpop.f32.mrf.mxu0
    %v1255 = vpop.f32.mrf.mxu0
    %v1256 = vpop.f32.mrf.mxu0
    %1257 = vdwg.mxu0
    %1259 = vrot.lane.b32.xlu0 %v1253, 24
    %v1260 = vpop.permute.xlu0 %1259
    %1262 = vst.msk [vmem:[#allocation2 + $0x8] sm:$0xff] %vm794, %v1260
    %v1263 = vld [vmem:[#allocation2] sm:$0xff]
    %v1264 = vld [vmem:[#allocation2 + $0x8] sm:$0xff]
    %v1265 = vpack.c.bf16 %v1264, %v1263
    %v1266 = vld [vmem:[#allocation9] sm:$0xf]
    %v1267 = vld [vmem:[#allocation9 + $0x4] sm:$0xf]
    %v1268 = vld [vmem:[#allocation9 + $0x8] sm:$0xf]
    %v1269 = vld [vmem:[#allocation9 + $0xc] sm:$0xf]
    %v1270 = vld [vmem:[#allocation11] sm:$0x1]
    %v1272 = vlaneseq
    %v1273 = vshrl.u32 %v1272, 7
    %v1274 = vsub.s32 0, %v1273
    %v1275 = vrot.slane %v1270, %v1274
    %v1281 = vunpack.c.l.b16 %v1266
    %v1282 = vunpack.c.l.b16 %v1267
    %v1283 = vunpack.c.l.b16 %v1268
    %v1284 = vunpack.c.l.b16 %v1269
    %v1285 = vpack.c.b16 %v1282, %v1281
    %v1286 = vpack.c.b16 %v1284, %v1283
    %v1290 = vsel %vm201, %v1265, 0
    %1292 = vmatprep.subr.bf16.mxu0 0
    %1293 = vmatpush1.bf16.msra.mxu0 0
    %1294 = vmatprep.subr.bf16.mxu0 0
    %1295 = vmatpush1.bf16.msra.mxu0 0
    %1296 = vmatprep.subr.bf16.mxu0 0
    %1297 = vmatpush1.bf16.msra.mxu0 0
    %1298 = vmatprep.subr.bf16.mxu0 0
    %1299 = vmatpush1.bf16.msra.mxu0 0
    %1300 = vmatprep.subr.bf16.mxu0 0
    %1301 = vmatpush1.bf16.msra.mxu0 0
    %1302 = vmatprep.subr.bf16.mxu0 0
    %1303 = vmatpush1.bf16.msra.mxu0 0
    %1304 = vmatprep.subr.bf16.mxu0 0
    %1305 = vmatpush1.bf16.msra.mxu0 %v1286
    %1306 = vmatprep.subr.bf16.mxu0 0
    %1307 = vmatpush1.bf16.msra.mxu0 %v1285
    %1308 = vmatprep.subr.bf16.mxu0 0
    %1309 = vmatpush2.bf16.msra.mxu0 0
    %1310 = vmatprep.subr.bf16.mxu0 0
    %1311 = vmatpush2.bf16.msra.mxu0 0
    %1312 = vmatprep.subr.bf16.mxu0 0
    %1313 = vmatpush2.bf16.msra.mxu0 0
    %1314 = vmatprep.subr.bf16.mxu0 0
    %1315 = vmatpush2.bf16.msra.mxu0 0
    %1316 = vmatprep.subr.bf16.mxu0 0
    %1317 = vmatpush2.bf16.msra.mxu0 0
    %1318 = vmatprep.subr.bf16.mxu0 0
    %1319 = vmatpush2.bf16.msra.mxu0 0
    %1320 = vmatprep.subr.bf16.mxu0 0
    %1321 = vmatpush2.bf16.msra.mxu0 0
    %1322 = vmatprep.subr.bf16.mxu0 0
    %1323 = vmatpush2.bf16.msra.mxu0 0
    %1324 = vmatprep.mubr.bf16.mxu0 0
    %1325 = vmatmul.mubr.bf16.gmra.mxu0 %v1290
    %v1326 = vpop.f32.mrf.mxu0
    %v1327 = vadd.f32 %v1275, %v1326
    %v1328 = vpop.f32.mrf.mxu0
    %v1329 = vpop.f32.mrf.mxu0
    %v1330 = vadd.f32 %v1275, %v1329
    %v1331 = vpop.f32.mrf.mxu0
    %1332 = vdwg.mxu0
    %v1333 = vadd.f32 %v195, %v1327
    %v1334 = vadd.f32 %v196, %v1330
    %v1335 = vld [vmem:[%s18 + $0x1] sm:$0x1]
    %v1336 = vld [vmem:[%s19 + $0x1] sm:$0x1]
    %v1337 = vsel %vm201, %v1333, 0.0
    %1338 = vadd.xlane.f32.xlu0 %v1337
    %v1339 = vpop.xlane.xlu0 %1338
    %v1340 = vsel %vm201, %v1334, 0.0
    %1341 = vadd.xlane.f32.xlu0 %v1340
    %v1342 = vpop.xlane.xlu0 %1341
    %v1343 = vmul.f32 %v1339, %v208
    %v1344 = vmul.f32 %v1342, %v208
    %v1345 = vsub.f32 %v1333, %v1343
    %v1346 = vsub.f32 %v1334, %v1344
    %v1347 = vmul.f32 %v1345, %v1345
    %v1348 = vmul.f32 %v1346, %v1346
    %v1349 = vsel %vm201, %v1347, 0.0
    %1350 = vadd.xlane.f32.xlu0 %v1349
    %v1351 = vpop.xlane.xlu0 %1350
    %v1352 = vsel %vm201, %v1348, 0.0
    %1353 = vadd.xlane.f32.xlu0 %v1352
    %v1354 = vpop.xlane.xlu0 %1353
    %v1355 = vmul.f32 %v1351, 0.032258064
    %v1356 = vmul.f32 %v1354, 0.032258064
    %v1357 = vrsqrt.pop %v1355
    %v1358 = vmul.f32 %v1355, %v1357
    %vm1359 = vcmp.eq.f32.partialorder %v1355, inf
    %v1360 = vsel %vm1359, %v1355, %v1358
    %vm1361 = vcmp.eq.f32.partialorder %v1355, 0.0
    %v1362 = vand.u32 %v1355, 2147483648
    %v1363 = vsel %vm1361, %v1362, %v1360
    %v1364 = vrsqrt.pop %v1356
    %v1365 = vmul.f32 %v1356, %v1364
    %vm1366 = vcmp.eq.f32.partialorder %v1356, inf
    %v1367 = vsel %vm1366, %v1356, %v1365
    %vm1368 = vcmp.eq.f32.partialorder %v1356, 0.0
    %v1369 = vand.u32 %v1356, 2147483648
    %v1370 = vsel %vm1368, %v1369, %v1367
    %v1371 = vadd.f32 %v1363, 1e-06
    %v1372 = vadd.f32 %v1370, 1e-06
    %v1373 = vrcp.pop %v1371
    %v1374 = vmul.f32 1.0, %v1373
    %v1375 = vrcp.pop %v1372
    %v1376 = vmul.f32 1.0, %v1375
    %v1377 = vmul.f32 %v1345, %v1374
    %v1378 = vmul.f32 %v1346, %v1376
    %v1379 = vlaneseq
    %v1380 = vshrl.u32 %v1379, 7
    %v1381 = vsub.s32 0, %v1380
    %v1382 = vrot.slane %v1335, %v1381
    %v1383 = vmul.f32 %v1382, %v1377
    %v1384 = vmul.f32 %v1382, %v1378
    %v1385 = vlaneseq
    %v1386 = vshrl.u32 %v1385, 7
    %v1387 = vsub.s32 0, %v1386
    %v1388 = vrot.slane %v1336, %v1387
    %v1389 = vadd.f32 %v1383, %v1388
    %v1390 = vadd.f32 %v1384, %v1388
    %v1391 = vpack.c.bf16 %v1390, %v1389
    %v1392 = vld [vmem:[#allocation12] sm:$0xf]
    %v1393 = vld [vmem:[#allocation12 + $0x4] sm:$0xf]
    %v1394 = vld [vmem:[#allocation12 + $0x8] sm:$0xf]
    %v1395 = vld [vmem:[#allocation12 + $0xc] sm:$0xf]
    %v1396 = vld [vmem:[#allocation14] sm:$0x1]
    %v1398 = vlaneseq
    %v1399 = vshrl.u32 %v1398, 7
    %v1400 = vsub.s32 0, %v1399
    %v1401 = vrot.slane %v1396, %v1400
    %v1407 = vunpack.c.l.b16 %v1392
    %v1408 = vunpack.c.l.b16 %v1393
    %v1409 = vunpack.c.l.b16 %v1394
    %v1410 = vunpack.c.l.b16 %v1395
    %v1411 = vpack.c.b16 %v1408, %v1407
    %v1412 = vpack.c.b16 %v1410, %v1409
    %v1416 = vsel %vm201, %v1391, 0
    %1418 = vmatprep.subr.bf16.mxu0 0
    %1419 = vmatpush1.bf16.msra.mxu0 0
    %1420 = vmatprep.subr.bf16.mxu0 0
    %1421 = vmatpush1.bf16.msra.mxu0 0
    %1422 = vmatprep.subr.bf16.mxu0 0
    %1423 = vmatpush1.bf16.msra.mxu0 0
    %1424 = vmatprep.subr.bf16.mxu0 0
    %1425 = vmatpush1.bf16.msra.mxu0 0
    %1426 = vmatprep.subr.bf16.mxu0 0
    %1427 = vmatpush1.bf16.msra.mxu0 0
    %1428 = vmatprep.subr.bf16.mxu0 0
    %1429 = vmatpush1.bf16.msra.mxu0 0
    %1430 = vmatprep.subr.bf16.mxu0 0
    %1431 = vmatpush1.bf16.msra.mxu0 %v1412
    %1432 = vmatprep.subr.bf16.mxu0 0
    %1433 = vmatpush1.bf16.msra.mxu0 %v1411
    %1434 = vmatprep.subr.bf16.mxu0 0
    %1435 = vmatpush2.bf16.msra.mxu0 0
    %1436 = vmatprep.subr.bf16.mxu0 0
    %1437 = vmatpush2.bf16.msra.mxu0 0
    %1438 = vmatprep.subr.bf16.mxu0 0
    %1439 = vmatpush2.bf16.msra.mxu0 0
    %1440 = vmatprep.subr.bf16.mxu0 0
    %1441 = vmatpush2.bf16.msra.mxu0 0
    %1442 = vmatprep.subr.bf16.mxu0 0
    %1443 = vmatpush2.bf16.msra.mxu0 0
    %1444 = vmatprep.subr.bf16.mxu0 0
    %1445 = vmatpush2.bf16.msra.mxu0 0
    %1446 = vmatprep.subr.bf16.mxu0 0
    %1447 = vmatpush2.bf16.msra.mxu0 0
    %1448 = vmatprep.subr.bf16.mxu0 0
    %1449 = vmatpush2.bf16.msra.mxu0 0
    %1450 = vmatprep.mubr.bf16.mxu0 0
    %1451 = vmatmul.mubr.bf16.gmra.mxu0 %v1416
    %v1452 = vpop.f32.mrf.mxu0
    %v1453 = vadd.f32 %v1401, %v1452
    %v1454 = vpop.f32.mrf.mxu0
    %v1455 = vpop.f32.mrf.mxu0
    %v1456 = vadd.f32 %v1401, %v1455
    %v1457 = vpop.f32.mrf.mxu0
    %1458 = vdwg.mxu0
    %v1459 = vpack.c.bf16 %v198, %v197
    %v1460 = vld [vmem:[%s10] sm:$0xf]
    %v1461 = vld [vmem:[%s10 + $0x4] sm:$0xf]
    %v1462 = vld [vmem:[%s10 + $0x8] sm:$0xf]
    %v1463 = vld [vmem:[%s10 + $0xc] sm:$0xf]
    %v1464 = vld [vmem:[#allocation15] sm:$0x1]
    %v1466 = vlaneseq
    %v1467 = vshrl.u32 %v1466, 7
    %v1468 = vsub.s32 0, %v1467
    %v1469 = vrot.slane %v1464, %v1468
    %v1475 = vunpack.c.l.b16 %v1460
    %v1476 = vunpack.c.l.b16 %v1461
    %v1477 = vunpack.c.l.b16 %v1462
    %v1478 = vunpack.c.l.b16 %v1463
    %v1479 = vpack.c.b16 %v1476, %v1475
    %v1480 = vpack.c.b16 %v1478, %v1477
    %v1484 = vsel %vm201, %v1459, 0
    %1486 = vmatprep.subr.bf16.mxu0 0
    %1487 = vmatpush1.bf16.msra.mxu0 0
    %1488 = vmatprep.subr.bf16.mxu0 0
    %1489 = vmatpush1.bf16.msra.mxu0 0
    %1490 = vmatprep.subr.bf16.mxu0 0
    %1491 = vmatpush1.bf16.msra.mxu0 0
    %1492 = vmatprep.subr.bf16.mxu0 0
    %1493 = vmatpush1.bf16.msra.mxu0 0
    %1494 = vmatprep.subr.bf16.mxu0 0
    %1495 = vmatpush1.bf16.msra.mxu0 0
    %1496 = vmatprep.subr.bf16.mxu0 0
    %1497 = vmatpush1.bf16.msra.mxu0 0
    %1498 = vmatprep.subr.bf16.mxu0 0
    %1499 = vmatpush1.bf16.msra.mxu0 %v1480
    %1500 = vmatprep.subr.bf16.mxu0 0
    %1501 = vmatpush1.bf16.msra.mxu0 %v1479
    %1502 = vmatprep.subr.bf16.mxu0 0
    %1503 = vmatpush2.bf16.msra.mxu0 0
    %1504 = vmatprep.subr.bf16.mxu0 0
    %1505 = vmatpush2.bf16.msra.mxu0 0
    %1506 = vmatprep.subr.bf16.mxu0 0
    %1507 = vmatpush2.bf16.msra.mxu0 0
    %1508 = vmatprep.subr.bf16.mxu0 0
    %1509 = vmatpush2.bf16.msra.mxu0 0
    %1510 = vmatprep.subr.bf16.mxu0 0
    %1511 = vmatpush2.bf16.msra.mxu0 0
    %1512 = vmatprep.subr.bf16.mxu0 0
    %1513 = vmatpush2.bf16.msra.mxu0 0
    %1514 = vmatprep.subr.bf16.mxu0 0
    %1515 = vmatpush2.bf16.msra.mxu0 0
    %1516 = vmatprep.subr.bf16.mxu0 0
    %1517 = vmatpush2.bf16.msra.mxu0 0
    %1518 = vmatprep.mubr.bf16.mxu0 0
    %1519 = vmatmul.mubr.bf16.gmra.mxu0 %v1484
    %v1520 = vpop.f32.mrf.mxu0
    %v1521 = vadd.f32 %v1469, %v1520
    %v1522 = vpop.f32.mrf.mxu0
    %v1523 = vpop.f32.mrf.mxu0
    %v1524 = vadd.f32 %v1469, %v1523
    %v1525 = vpop.f32.mrf.mxu0
    %1526 = vdwg.mxu0
    %v1527 = vld [vmem:[#allocation3] sm:$0xff]
    %vm1528 = vcmp.eq.f32.partialorder %v1527, 0.0
    %v1529 = vpack.c.bf16 %v1453, %v1453
    %v1530 = vpack.c.bf16 %v1521, %v1521
    %v1532 = vsel %vm331, %v1529, 0
    %v1535 = vsel %vm331, %v1530, 0
    %1537 = vmatprep.subr.bf16.mxu0 0
    %1538 = vmatpush1.bf16.xpose.msra.mxu0 0
    %1539 = vmatprep.subr.bf16.mxu0 0
    %1540 = vmatpush1.bf16.xpose.msra.mxu0 0
    %1541 = vmatprep.subr.bf16.mxu0 0
    %1542 = vmatpush1.bf16.xpose.msra.mxu0 0
    %1543 = vmatprep.subr.bf16.mxu0 0
    %1544 = vmatpush1.bf16.xpose.msra.mxu0 0
    %1545 = vmatprep.subr.bf16.mxu0 0
    %1546 = vmatpush1.bf16.xpose.msra.mxu0 0
    %1547 = vmatprep.subr.bf16.mxu0 0
    %1548 = vmatpush1.bf16.xpose.msra.mxu0 0
    %1549 = vmatprep.subr.bf16.mxu0 0
    %1550 = vmatpush1.bf16.xpose.msra.mxu0 0
    %1551 = vmatprep.subr.bf16.mxu0 0
    %1552 = vmatpush1.bf16.xpose.msra.mxu0 %v1535
    %1553 = vmatprep.subr.bf16.mxu0 0
    %1554 = vmatpush2.bf16.xpose.msra.mxu0 0
    %1555 = vmatprep.subr.bf16.mxu0 0
    %1556 = vmatpush2.bf16.xpose.msra.mxu0 0
    %1557 = vmatprep.subr.bf16.mxu0 0
    %1558 = vmatpush2.bf16.xpose.msra.mxu0 0
    %1559 = vmatprep.subr.bf16.mxu0 0
    %1560 = vmatpush2.bf16.xpose.msra.mxu0 0
    %1561 = vmatprep.subr.bf16.mxu0 0
    %1562 = vmatpush2.bf16.xpose.msra.mxu0 0
    %1563 = vmatprep.subr.bf16.mxu0 0
    %1564 = vmatpush2.bf16.xpose.msra.mxu0 0
    %1565 = vmatprep.subr.bf16.mxu0 0
    %1566 = vmatpush2.bf16.xpose.msra.mxu0 0
    %1567 = vmatprep.subr.bf16.mxu0 0
    %1568 = vmatpush2.bf16.xpose.msra.mxu0 0
    %1569 = vmatprep.mubr.bf16.mxu0 0
    %1570 = vmatmul.mubr.bf16.gmra.mxu0 %v1532
    %v1571 = vpop.f32.mrf.mxu0
    %v1572 = vadd.f32 0.0, %v1571
    %v1573 = vpop.f32.mrf.mxu0
    %v1574 = vpop.f32.mrf.mxu0
    %v1575 = vpop.f32.mrf.mxu0
    %1576 = vdwg.mxu0
    %v1577 = vmul.f32 %v1572, 0.35355338
    %v1578 = vsel %vm1528, -1e+09, %v1577
    %v1579 = vsel %vm331, %v1578, -inf
    %1580 = vmax.xlane.f32.xlu0 %v1579
    %v1581 = vpop.xlane.xlu0 %1580
    %v1582 = vsub.f32 %v1578, %v1581
    %v1583 = vmul.f32 %v1582, 1.442695
    %v1584 = vpow.pop %v1583
    %v1585 = vsel %vm331, %v1584, 0.0
    %1586 = vadd.xlane.f32.xlu0 %v1585
    %v1587 = vpop.xlane.xlu0 %1586
    %v1588 = vrcp.pop %v1587
    %v1589 = vmul.f32 %v1584, %v1588
    %v1590 = vpack.c.bf16 %v1589, %v1589
    %1592 = vrot.lane.b32.xlu0 %v1530, 96
    %v1593 = vpop.permute.xlu0 %1592
    %v1595 = vsel %vm331, %v1590, 0
    %v1598 = vsel %vm397, %v1593, 0
    %1600 = vmatprep.subr.bf16.mxu0 0
    %1601 = vmatpush1.bf16.msra.mxu0 0
    %1602 = vmatprep.subr.bf16.mxu0 0
    %1603 = vmatpush1.bf16.msra.mxu0 0
    %1604 = vmatprep.subr.bf16.mxu0 0
    %1605 = vmatpush1.bf16.msra.mxu0 0
    %1606 = vmatprep.subr.bf16.mxu0 0
    %1607 = vmatpush1.bf16.msra.mxu0 0
    %1608 = vmatprep.subr.bf16.mxu0 0
    %1609 = vmatpush1.bf16.msra.mxu0 0
    %1610 = vmatprep.subr.bf16.mxu0 0
    %1611 = vmatpush1.bf16.msra.mxu0 0
    %1612 = vmatprep.subr.bf16.mxu0 0
    %1613 = vmatpush1.bf16.msra.mxu0 0
    %1614 = vmatprep.subr.bf16.mxu0 0
    %1615 = vmatpush1.bf16.msra.mxu0 %v1598
    %1616 = vmatprep.subr.bf16.mxu0 0
    %1617 = vmatpush2.bf16.msra.mxu0 0
    %1618 = vmatprep.subr.bf16.mxu0 0
    %1619 = vmatpush2.bf16.msra.mxu0 0
    %1620 = vmatprep.subr.bf16.mxu0 0
    %1621 = vmatpush2.bf16.msra.mxu0 0
    %1622 = vmatprep.subr.bf16.mxu0 0
    %1623 = vmatpush2.bf16.msra.mxu0 0
    %1624 = vmatprep.subr.bf16.mxu0 0
    %1625 = vmatpush2.bf16.msra.mxu0 0
    %1626 = vmatprep.subr.bf16.mxu0 0
    %1627 = vmatpush2.bf16.msra.mxu0 0
    %1628 = vmatprep.subr.bf16.mxu0 0
    %1629 = vmatpush2.bf16.msra.mxu0 0
    %1630 = vmatprep.subr.bf16.mxu0 0
    %1631 = vmatpush2.bf16.msra.mxu0 0
    %1632 = vmatprep.mubr.bf16.mxu0 0
    %1633 = vmatmul.mubr.bf16.gmra.mxu0 %v1595
    %v1634 = vpop.f32.mrf.mxu0
    %v1635 = vadd.f32 0.0, %v1634
    %v1636 = vpop.f32.mrf.mxu0
    %v1637 = vpop.f32.mrf.mxu0
    %v1638 = vpop.f32.mrf.mxu0
    %1639 = vdwg.mxu0
    %1640 = vst.msk [vmem:[#allocation2] sm:$0xff] %vm331, %v1635
    %1642 = vrot.lane.b32.xlu0 %v1529, 120
    %v1643 = vpop.permute.xlu0 %1642
    %1644 = vrot.lane.b32.xlu0 %v1530, 120
    %v1645 = vpop.permute.xlu0 %1644
    %v1647 = vsel %vm331, %v1643, 0
    %v1650 = vsel %vm331, %v1645, 0
    %1652 = vmatprep.subr.bf16.mxu0 0
    %1653 = vmatpush1.bf16.xpose.msra.mxu0 0
    %1654 = vmatprep.subr.bf16.mxu0 0
    %1655 = vmatpush1.bf16.xpose.msra.mxu0 0
    %1656 = vmatprep.subr.bf16.mxu0 0
    %1657 = vmatpush1.bf16.xpose.msra.mxu0 0
    %1658 = vmatprep.subr.bf16.mxu0 0
    %1659 = vmatpush1.bf16.xpose.msra.mxu0 0
    %1660 = vmatprep.subr.bf16.mxu0 0
    %1661 = vmatpush1.bf16.xpose.msra.mxu0 0
    %1662 = vmatprep.subr.bf16.mxu0 0
    %1663 = vmatpush1.bf16.xpose.msra.mxu0 0
    %1664 = vmatprep.subr.bf16.mxu0 0
    %1665 = vmatpush1.bf16.xpose.msra.mxu0 0
    %1666 = vmatprep.subr.bf16.mxu0 0
    %1667 = vmatpush1.bf16.xpose.msra.mxu0 %v1650
    %1668 = vmatprep.subr.bf16.mxu0 0
    %1669 = vmatpush2.bf16.xpose.msra.mxu0 0
    %1670 = vmatprep.subr.bf16.mxu0 0
    %1671 = vmatpush2.bf16.xpose.msra.mxu0 0
    %1672 = vmatprep.subr.bf16.mxu0 0
    %1673 = vmatpush2.bf16.xpose.msra.mxu0 0
    %1674 = vmatprep.subr.bf16.mxu0 0
    %1675 = vmatpush2.bf16.xpose.msra.mxu0 0
    %1676 = vmatprep.subr.bf16.mxu0 0
    %1677 = vmatpush2.bf16.xpose.msra.mxu0 0
    %1678 = vmatprep.subr.bf16.mxu0 0
    %1679 = vmatpush2.bf16.xpose.msra.mxu0 0
    %1680 = vmatprep.subr.bf16.mxu0 0
    %1681 = vmatpush2.bf16.xpose.msra.mxu0 0
    %1682 = vmatprep.subr.bf16.mxu0 0
    %1683 = vmatpush2.bf16.xpose.msra.mxu0 0
    %1684 = vmatprep.mubr.bf16.mxu0 0
    %1685 = vmatmul.mubr.bf16.gmra.mxu0 %v1647
    %v1686 = vpop.f32.mrf.mxu0
    %v1687 = vadd.f32 0.0, %v1686
    %v1688 = vpop.f32.mrf.mxu0
    %v1689 = vpop.f32.mrf.mxu0
    %v1690 = vpop.f32.mrf.mxu0
    %1691 = vdwg.mxu0
    %v1692 = vmul.f32 %v1687, 0.35355338
    %v1693 = vsel %vm1528, -1e+09, %v1692
    %v1694 = vsel %vm331, %v1693, -inf
    %1695 = vmax.xlane.f32.xlu0 %v1694
    %v1696 = vpop.xlane.xlu0 %1695
    %v1697 = vsub.f32 %v1693, %v1696
    %v1698 = vmul.f32 %v1697, 1.442695
    %v1699 = vpow.pop %v1698
    %v1700 = vsel %vm331, %v1699, 0.0
    %1701 = vadd.xlane.f32.xlu0 %v1700
    %v1702 = vpop.xlane.xlu0 %1701
    %v1703 = vrcp.pop %v1702
    %v1704 = vmul.f32 %v1699, %v1703
    %v1705 = vpack.c.bf16 %v1704, %v1704
    %1706 = vrot.lane.b32.xlu0 %v1530, 88
    %v1707 = vpop.permute.xlu0 %1706
    %v1709 = vsel %vm331, %v1705, 0
    %v1712 = vsel %vm397, %v1707, 0
    %1714 = vmatprep.subr.bf16.mxu0 0
    %1715 = vmatpush1.bf16.msra.mxu0 0
    %1716 = vmatprep.subr.bf16.mxu0 0
    %1717 = vmatpush1.bf16.msra.mxu0 0
    %1718 = vmatprep.subr.bf16.mxu0 0
    %1719 = vmatpush1.bf16.msra.mxu0 0
    %1720 = vmatprep.subr.bf16.mxu0 0
    %1721 = vmatpush1.bf16.msra.mxu0 0
    %1722 = vmatprep.subr.bf16.mxu0 0
    %1723 = vmatpush1.bf16.msra.mxu0 0
    %1724 = vmatprep.subr.bf16.mxu0 0
    %1725 = vmatpush1.bf16.msra.mxu0 0
    %1726 = vmatprep.subr.bf16.mxu0 0
    %1727 = vmatpush1.bf16.msra.mxu0 0
    %1728 = vmatprep.subr.bf16.mxu0 0
    %1729 = vmatpush1.bf16.msra.mxu0 %v1712
    %1730 = vmatprep.subr.bf16.mxu0 0
    %1731 = vmatpush2.bf16.msra.mxu0 0
    %1732 = vmatprep.subr.bf16.mxu0 0
    %1733 = vmatpush2.bf16.msra.mxu0 0
    %1734 = vmatprep.subr.bf16.mxu0 0
    %1735 = vmatpush2.bf16.msra.mxu0 0
    %1736 = vmatprep.subr.bf16.mxu0 0
    %1737 = vmatpush2.bf16.msra.mxu0 0
    %1738 = vmatprep.subr.bf16.mxu0 0
    %1739 = vmatpush2.bf16.msra.mxu0 0
    %1740 = vmatprep.subr.bf16.mxu0 0
    %1741 = vmatpush2.bf16.msra.mxu0 0
    %1742 = vmatprep.subr.bf16.mxu0 0
    %1743 = vmatpush2.bf16.msra.mxu0 0
    %1744 = vmatprep.subr.bf16.mxu0 0
    %1745 = vmatpush2.bf16.msra.mxu0 0
    %1746 = vmatprep.mubr.bf16.mxu0 0
    %1747 = vmatmul.mubr.bf16.gmra.mxu0 %v1709
    %v1748 = vpop.f32.mrf.mxu0
    %v1749 = vadd.f32 0.0, %v1748
    %v1750 = vpop.f32.mrf.mxu0
    %v1751 = vpop.f32.mrf.mxu0
    %v1752 = vpop.f32.mrf.mxu0
    %1753 = vdwg.mxu0
    %1755 = vrot.lane.b32.xlu0 %v1749, 8
    %v1756 = vpop.permute.xlu0 %1755
    %1758 = vst.msk [vmem:[#allocation2] sm:$0xff] %vm558, %v1756
    %1759 = vrot.lane.b32.xlu0 %v1529, 112
    %v1760 = vpop.permute.xlu0 %1759
    %1761 = vrot.lane.b32.xlu0 %v1530, 112
    %v1762 = vpop.permute.xlu0 %1761
    %v1764 = vsel %vm331, %v1760, 0
    %v1767 = vsel %vm331, %v1762, 0
    %1769 = vmatprep.subr.bf16.mxu0 0
    %1770 = vmatpush1.bf16.xpose.msra.mxu0 0
    %1771 = vmatprep.subr.bf16.mxu0 0
    %1772 = vmatpush1.bf16.xpose.msra.mxu0 0
    %1773 = vmatprep.subr.bf16.mxu0 0
    %1774 = vmatpush1.bf16.xpose.msra.mxu0 0
    %1775 = vmatprep.subr.bf16.mxu0 0
    %1776 = vmatpush1.bf16.xpose.msra.mxu0 0
    %1777 = vmatprep.subr.bf16.mxu0 0
    %1778 = vmatpush1.bf16.xpose.msra.mxu0 0
    %1779 = vmatprep.subr.bf16.mxu0 0
    %1780 = vmatpush1.bf16.xpose.msra.mxu0 0
    %1781 = vmatprep.subr.bf16.mxu0 0
    %1782 = vmatpush1.bf16.xpose.msra.mxu0 0
    %1783 = vmatprep.subr.bf16.mxu0 0
    %1784 = vmatpush1.bf16.xpose.msra.mxu0 %v1767
    %1785 = vmatprep.subr.bf16.mxu0 0
    %1786 = vmatpush2.bf16.xpose.msra.mxu0 0
    %1787 = vmatprep.subr.bf16.mxu0 0
    %1788 = vmatpush2.bf16.xpose.msra.mxu0 0
    %1789 = vmatprep.subr.bf16.mxu0 0
    %1790 = vmatpush2.bf16.xpose.msra.mxu0 0
    %1791 = vmatprep.subr.bf16.mxu0 0
    %1792 = vmatpush2.bf16.xpose.msra.mxu0 0
    %1793 = vmatprep.subr.bf16.mxu0 0
    %1794 = vmatpush2.bf16.xpose.msra.mxu0 0
    %1795 = vmatprep.subr.bf16.mxu0 0
    %1796 = vmatpush2.bf16.xpose.msra.mxu0 0
    %1797 = vmatprep.subr.bf16.mxu0 0
    %1798 = vmatpush2.bf16.xpose.msra.mxu0 0
    %1799 = vmatprep.subr.bf16.mxu0 0
    %1800 = vmatpush2.bf16.xpose.msra.mxu0 0
    %1801 = vmatprep.mubr.bf16.mxu0 0
    %1802 = vmatmul.mubr.bf16.gmra.mxu0 %v1764
    %v1803 = vpop.f32.mrf.mxu0
    %v1804 = vadd.f32 0.0, %v1803
    %v1805 = vpop.f32.mrf.mxu0
    %v1806 = vpop.f32.mrf.mxu0
    %v1807 = vpop.f32.mrf.mxu0
    %1808 = vdwg.mxu0
    %v1809 = vmul.f32 %v1804, 0.35355338
    %v1810 = vsel %vm1528, -1e+09, %v1809
    %v1811 = vsel %vm331, %v1810, -inf
    %1812 = vmax.xlane.f32.xlu0 %v1811
    %v1813 = vpop.xlane.xlu0 %1812
    %v1814 = vsub.f32 %v1810, %v1813
    %v1815 = vmul.f32 %v1814, 1.442695
    %v1816 = vpow.pop %v1815
    %v1817 = vsel %vm331, %v1816, 0.0
    %1818 = vadd.xlane.f32.xlu0 %v1817
    %v1819 = vpop.xlane.xlu0 %1818
    %v1820 = vrcp.pop %v1819
    %v1821 = vmul.f32 %v1816, %v1820
    %v1822 = vpack.c.bf16 %v1821, %v1821
    %1823 = vrot.lane.b32.xlu0 %v1530, 80
    %v1824 = vpop.permute.xlu0 %1823
    %v1826 = vsel %vm331, %v1822, 0
    %v1829 = vsel %vm397, %v1824, 0
    %1831 = vmatprep.subr.bf16.mxu0 0
    %1832 = vmatpush1.bf16.msra.mxu0 0
    %1833 = vmatprep.subr.bf16.mxu0 0
    %1834 = vmatpush1.bf16.msra.mxu0 0
    %1835 = vmatprep.subr.bf16.mxu0 0
    %1836 = vmatpush1.bf16.msra.mxu0 0
    %1837 = vmatprep.subr.bf16.mxu0 0
    %1838 = vmatpush1.bf16.msra.mxu0 0
    %1839 = vmatprep.subr.bf16.mxu0 0
    %1840 = vmatpush1.bf16.msra.mxu0 0
    %1841 = vmatprep.subr.bf16.mxu0 0
    %1842 = vmatpush1.bf16.msra.mxu0 0
    %1843 = vmatprep.subr.bf16.mxu0 0
    %1844 = vmatpush1.bf16.msra.mxu0 0
    %1845 = vmatprep.subr.bf16.mxu0 0
    %1846 = vmatpush1.bf16.msra.mxu0 %v1829
    %1847 = vmatprep.subr.bf16.mxu0 0
    %1848 = vmatpush2.bf16.msra.mxu0 0
    %1849 = vmatprep.subr.bf16.mxu0 0
    %1850 = vmatpush2.bf16.msra.mxu0 0
    %1851 = vmatprep.subr.bf16.mxu0 0
    %1852 = vmatpush2.bf16.msra.mxu0 0
    %1853 = vmatprep.subr.bf16.mxu0 0
    %1854 = vmatpush2.bf16.msra.mxu0 0
    %1855 = vmatprep.subr.bf16.mxu0 0
    %1856 = vmatpush2.bf16.msra.mxu0 0
    %1857 = vmatprep.subr.bf16.mxu0 0
    %1858 = vmatpush2.bf16.msra.mxu0 0
    %1859 = vmatprep.subr.bf16.mxu0 0
    %1860 = vmatpush2.bf16.msra.mxu0 0
    %1861 = vmatprep.subr.bf16.mxu0 0
    %1862 = vmatpush2.bf16.msra.mxu0 0
    %1863 = vmatprep.mubr.bf16.mxu0 0
    %1864 = vmatmul.mubr.bf16.gmra.mxu0 %v1826
    %v1865 = vpop.f32.mrf.mxu0
    %v1866 = vadd.f32 0.0, %v1865
    %v1867 = vpop.f32.mrf.mxu0
    %v1868 = vpop.f32.mrf.mxu0
    %v1869 = vpop.f32.mrf.mxu0
    %1870 = vdwg.mxu0
    %1872 = vrot.lane.b32.xlu0 %v1866, 16
    %v1873 = vpop.permute.xlu0 %1872
    %1875 = vst.msk [vmem:[#allocation2] sm:$0xff] %vm676, %v1873
    %1876 = vrot.lane.b32.xlu0 %v1529, 104
    %v1877 = vpop.permute.xlu0 %1876
    %1878 = vrot.lane.b32.xlu0 %v1530, 104
    %v1879 = vpop.permute.xlu0 %1878
    %v1881 = vsel %vm331, %v1877, 0
    %v1884 = vsel %vm331, %v1879, 0
    %1886 = vmatprep.subr.bf16.mxu0 0
    %1887 = vmatpush1.bf16.xpose.msra.mxu0 0
    %1888 = vmatprep.subr.bf16.mxu0 0
    %1889 = vmatpush1.bf16.xpose.msra.mxu0 0
    %1890 = vmatprep.subr.bf16.mxu0 0
    %1891 = vmatpush1.bf16.xpose.msra.mxu0 0
    %1892 = vmatprep.subr.bf16.mxu0 0
    %1893 = vmatpush1.bf16.xpose.msra.mxu0 0
    %1894 = vmatprep.subr.bf16.mxu0 0
    %1895 = vmatpush1.bf16.xpose.msra.mxu0 0
    %1896 = vmatprep.subr.bf16.mxu0 0
    %1897 = vmatpush1.bf16.xpose.msra.mxu0 0
    %1898 = vmatprep.subr.bf16.mxu0 0
    %1899 = vmatpush1.bf16.xpose.msra.mxu0 0
    %1900 = vmatprep.subr.bf16.mxu0 0
    %1901 = vmatpush1.bf16.xpose.msra.mxu0 %v1884
    %1902 = vmatprep.subr.bf16.mxu0 0
    %1903 = vmatpush2.bf16.xpose.msra.mxu0 0
    %1904 = vmatprep.subr.bf16.mxu0 0
    %1905 = vmatpush2.bf16.xpose.msra.mxu0 0
    %1906 = vmatprep.subr.bf16.mxu0 0
    %1907 = vmatpush2.bf16.xpose.msra.mxu0 0
    %1908 = vmatprep.subr.bf16.mxu0 0
    %1909 = vmatpush2.bf16.xpose.msra.mxu0 0
    %1910 = vmatprep.subr.bf16.mxu0 0
    %1911 = vmatpush2.bf16.xpose.msra.mxu0 0
    %1912 = vmatprep.subr.bf16.mxu0 0
    %1913 = vmatpush2.bf16.xpose.msra.mxu0 0
    %1914 = vmatprep.subr.bf16.mxu0 0
    %1915 = vmatpush2.bf16.xpose.msra.mxu0 0
    %1916 = vmatprep.subr.bf16.mxu0 0
    %1917 = vmatpush2.bf16.xpose.msra.mxu0 0
    %1918 = vmatprep.mubr.bf16.mxu0 0
    %1919 = vmatmul.mubr.bf16.gmra.mxu0 %v1881
    %v1920 = vpop.f32.mrf.mxu0
    %v1921 = vadd.f32 0.0, %v1920
    %v1922 = vpop.f32.mrf.mxu0
    %v1923 = vpop.f32.mrf.mxu0
    %v1924 = vpop.f32.mrf.mxu0
    %1925 = vdwg.mxu0
    %v1926 = vmul.f32 %v1921, 0.35355338
    %v1927 = vsel %vm1528, -1e+09, %v1926
    %v1928 = vsel %vm331, %v1927, -inf
    %1929 = vmax.xlane.f32.xlu0 %v1928
    %v1930 = vpop.xlane.xlu0 %1929
    %v1931 = vsub.f32 %v1927, %v1930
    %v1932 = vmul.f32 %v1931, 1.442695
    %v1933 = vpow.pop %v1932
    %v1934 = vsel %vm331, %v1933, 0.0
    %1935 = vadd.xlane.f32.xlu0 %v1934
    %v1936 = vpop.xlane.xlu0 %1935
    %v1937 = vrcp.pop %v1936
    %v1938 = vmul.f32 %v1933, %v1937
    %v1939 = vpack.c.bf16 %v1938, %v1938
    %1940 = vrot.lane.b32.xlu0 %v1530, 72
    %v1941 = vpop.permute.xlu0 %1940
    %v1943 = vsel %vm331, %v1939, 0
    %v1946 = vsel %vm397, %v1941, 0
    %1948 = vmatprep.subr.bf16.mxu0 0
    %1949 = vmatpush1.bf16.msra.mxu0 0
    %1950 = vmatprep.subr.bf16.mxu0 0
    %1951 = vmatpush1.bf16.msra.mxu0 0
    %1952 = vmatprep.subr.bf16.mxu0 0
    %1953 = vmatpush1.bf16.msra.mxu0 0
    %1954 = vmatprep.subr.bf16.mxu0 0
    %1955 = vmatpush1.bf16.msra.mxu0 0
    %1956 = vmatprep.subr.bf16.mxu0 0
    %1957 = vmatpush1.bf16.msra.mxu0 0
    %1958 = vmatprep.subr.bf16.mxu0 0
    %1959 = vmatpush1.bf16.msra.mxu0 0
    %1960 = vmatprep.subr.bf16.mxu0 0
    %1961 = vmatpush1.bf16.msra.mxu0 0
    %1962 = vmatprep.subr.bf16.mxu0 0
    %1963 = vmatpush1.bf16.msra.mxu0 %v1946
    %1964 = vmatprep.subr.bf16.mxu0 0
    %1965 = vmatpush2.bf16.msra.mxu0 0
    %1966 = vmatprep.subr.bf16.mxu0 0
    %1967 = vmatpush2.bf16.msra.mxu0 0
    %1968 = vmatprep.subr.bf16.mxu0 0
    %1969 = vmatpush2.bf16.msra.mxu0 0
    %1970 = vmatprep.subr.bf16.mxu0 0
    %1971 = vmatpush2.bf16.msra.mxu0 0
    %1972 = vmatprep.subr.bf16.mxu0 0
    %1973 = vmatpush2.bf16.msra.mxu0 0
    %1974 = vmatprep.subr.bf16.mxu0 0
    %1975 = vmatpush2.bf16.msra.mxu0 0
    %1976 = vmatprep.subr.bf16.mxu0 0
    %1977 = vmatpush2.bf16.msra.mxu0 0
    %1978 = vmatprep.subr.bf16.mxu0 0
    %1979 = vmatpush2.bf16.msra.mxu0 0
    %1980 = vmatprep.mubr.bf16.mxu0 0
    %1981 = vmatmul.mubr.bf16.gmra.mxu0 %v1943
    %v1982 = vpop.f32.mrf.mxu0
    %v1983 = vadd.f32 0.0, %v1982
    %v1984 = vpop.f32.mrf.mxu0
    %v1985 = vpop.f32.mrf.mxu0
    %v1986 = vpop.f32.mrf.mxu0
    %1987 = vdwg.mxu0
    %1989 = vrot.lane.b32.xlu0 %v1983, 24
    %v1990 = vpop.permute.xlu0 %1989
    %1992 = vst.msk [vmem:[#allocation2] sm:$0xff] %vm794, %v1990
    %s1993 = scalar_lea.vmem [#allocation3], 8
    %v1994 = vld [vmem:[%s1993] sm:$0xff]
    %vm1995 = vcmp.eq.f32.partialorder %v1994, 0.0
    %v1996 = vpack.c.bf16 %v1456, %v1456
    %v1997 = vpack.c.bf16 %v1524, %v1524
    %v1999 = vsel %vm331, %v1996, 0
    %v2002 = vsel %vm331, %v1997, 0
    %2004 = vmatprep.subr.bf16.mxu0 0
    %2005 = vmatpush1.bf16.xpose.msra.mxu0 0
    %2006 = vmatprep.subr.bf16.mxu0 0
    %2007 = vmatpush1.bf16.xpose.msra.mxu0 0
    %2008 = vmatprep.subr.bf16.mxu0 0
    %2009 = vmatpush1.bf16.xpose.msra.mxu0 0
    %2010 = vmatprep.subr.bf16.mxu0 0
    %2011 = vmatpush1.bf16.xpose.msra.mxu0 0
    %2012 = vmatprep.subr.bf16.mxu0 0
    %2013 = vmatpush1.bf16.xpose.msra.mxu0 0
    %2014 = vmatprep.subr.bf16.mxu0 0
    %2015 = vmatpush1.bf16.xpose.msra.mxu0 0
    %2016 = vmatprep.subr.bf16.mxu0 0
    %2017 = vmatpush1.bf16.xpose.msra.mxu0 0
    %2018 = vmatprep.subr.bf16.mxu0 0
    %2019 = vmatpush1.bf16.xpose.msra.mxu0 %v2002
    %2020 = vmatprep.subr.bf16.mxu0 0
    %2021 = vmatpush2.bf16.xpose.msra.mxu0 0
    %2022 = vmatprep.subr.bf16.mxu0 0
    %2023 = vmatpush2.bf16.xpose.msra.mxu0 0
    %2024 = vmatprep.subr.bf16.mxu0 0
    %2025 = vmatpush2.bf16.xpose.msra.mxu0 0
    %2026 = vmatprep.subr.bf16.mxu0 0
    %2027 = vmatpush2.bf16.xpose.msra.mxu0 0
    %2028 = vmatprep.subr.bf16.mxu0 0
    %2029 = vmatpush2.bf16.xpose.msra.mxu0 0
    %2030 = vmatprep.subr.bf16.mxu0 0
    %2031 = vmatpush2.bf16.xpose.msra.mxu0 0
    %2032 = vmatprep.subr.bf16.mxu0 0
    %2033 = vmatpush2.bf16.xpose.msra.mxu0 0
    %2034 = vmatprep.subr.bf16.mxu0 0
    %2035 = vmatpush2.bf16.xpose.msra.mxu0 0
    %2036 = vmatprep.mubr.bf16.mxu0 0
    %2037 = vmatmul.mubr.bf16.gmra.mxu0 %v1999
    %v2038 = vpop.f32.mrf.mxu0
    %v2039 = vadd.f32 0.0, %v2038
    %v2040 = vpop.f32.mrf.mxu0
    %v2041 = vpop.f32.mrf.mxu0
    %v2042 = vpop.f32.mrf.mxu0
    %2043 = vdwg.mxu0
    %v2044 = vmul.f32 %v2039, 0.35355338
    %v2045 = vsel %vm1995, -1e+09, %v2044
    %v2046 = vsel %vm331, %v2045, -inf
    %2047 = vmax.xlane.f32.xlu0 %v2046
    %v2048 = vpop.xlane.xlu0 %2047
    %v2049 = vsub.f32 %v2045, %v2048
    %v2050 = vmul.f32 %v2049, 1.442695
    %v2051 = vpow.pop %v2050
    %v2052 = vsel %vm331, %v2051, 0.0
    %2053 = vadd.xlane.f32.xlu0 %v2052
    %v2054 = vpop.xlane.xlu0 %2053
    %v2055 = vrcp.pop %v2054
    %v2056 = vmul.f32 %v2051, %v2055
    %v2057 = vpack.c.bf16 %v2056, %v2056
    %2059 = vrot.lane.b32.xlu0 %v1997, 96
    %v2060 = vpop.permute.xlu0 %2059
    %v2062 = vsel %vm331, %v2057, 0
    %v2065 = vsel %vm397, %v2060, 0
    %2067 = vmatprep.subr.bf16.mxu0 0
    %2068 = vmatpush1.bf16.msra.mxu0 0
    %2069 = vmatprep.subr.bf16.mxu0 0
    %2070 = vmatpush1.bf16.msra.mxu0 0
    %2071 = vmatprep.subr.bf16.mxu0 0
    %2072 = vmatpush1.bf16.msra.mxu0 0
    %2073 = vmatprep.subr.bf16.mxu0 0
    %2074 = vmatpush1.bf16.msra.mxu0 0
    %2075 = vmatprep.subr.bf16.mxu0 0
    %2076 = vmatpush1.bf16.msra.mxu0 0
    %2077 = vmatprep.subr.bf16.mxu0 0
    %2078 = vmatpush1.bf16.msra.mxu0 0
    %2079 = vmatprep.subr.bf16.mxu0 0
    %2080 = vmatpush1.bf16.msra.mxu0 0
    %2081 = vmatprep.subr.bf16.mxu0 0
    %2082 = vmatpush1.bf16.msra.mxu0 %v2065
    %2083 = vmatprep.subr.bf16.mxu0 0
    %2084 = vmatpush2.bf16.msra.mxu0 0
    %2085 = vmatprep.subr.bf16.mxu0 0
    %2086 = vmatpush2.bf16.msra.mxu0 0
    %2087 = vmatprep.subr.bf16.mxu0 0
    %2088 = vmatpush2.bf16.msra.mxu0 0
    %2089 = vmatprep.subr.bf16.mxu0 0
    %2090 = vmatpush2.bf16.msra.mxu0 0
    %2091 = vmatprep.subr.bf16.mxu0 0
    %2092 = vmatpush2.bf16.msra.mxu0 0
    %2093 = vmatprep.subr.bf16.mxu0 0
    %2094 = vmatpush2.bf16.msra.mxu0 0
    %2095 = vmatprep.subr.bf16.mxu0 0
    %2096 = vmatpush2.bf16.msra.mxu0 0
    %2097 = vmatprep.subr.bf16.mxu0 0
    %2098 = vmatpush2.bf16.msra.mxu0 0
    %2099 = vmatprep.mubr.bf16.mxu0 0
    %2100 = vmatmul.mubr.bf16.gmra.mxu0 %v2062
    %v2101 = vpop.f32.mrf.mxu0
    %v2102 = vadd.f32 0.0, %v2101
    %v2103 = vpop.f32.mrf.mxu0
    %v2104 = vpop.f32.mrf.mxu0
    %v2105 = vpop.f32.mrf.mxu0
    %2106 = vdwg.mxu0
    %2107 = vst.msk [vmem:[#allocation2 + $0x8] sm:$0xff] %vm331, %v2102
    %2109 = vrot.lane.b32.xlu0 %v1996, 120
    %v2110 = vpop.permute.xlu0 %2109
    %2111 = vrot.lane.b32.xlu0 %v1997, 120
    %v2112 = vpop.permute.xlu0 %2111
    %v2114 = vsel %vm331, %v2110, 0
    %v2117 = vsel %vm331, %v2112, 0
    %2119 = vmatprep.subr.bf16.mxu0 0
    %2120 = vmatpush1.bf16.xpose.msra.mxu0 0
    %2121 = vmatprep.subr.bf16.mxu0 0
    %2122 = vmatpush1.bf16.xpose.msra.mxu0 0
    %2123 = vmatprep.subr.bf16.mxu0 0
    %2124 = vmatpush1.bf16.xpose.msra.mxu0 0
    %2125 = vmatprep.subr.bf16.mxu0 0
    %2126 = vmatpush1.bf16.xpose.msra.mxu0 0
    %2127 = vmatprep.subr.bf16.mxu0 0
    %2128 = vmatpush1.bf16.xpose.msra.mxu0 0
    %2129 = vmatprep.subr.bf16.mxu0 0
    %2130 = vmatpush1.bf16.xpose.msra.mxu0 0
    %2131 = vmatprep.subr.bf16.mxu0 0
    %2132 = vmatpush1.bf16.xpose.msra.mxu0 0
    %2133 = vmatprep.subr.bf16.mxu0 0
    %2134 = vmatpush1.bf16.xpose.msra.mxu0 %v2117
    %2135 = vmatprep.subr.bf16.mxu0 0
    %2136 = vmatpush2.bf16.xpose.msra.mxu0 0
    %2137 = vmatprep.subr.bf16.mxu0 0
    %2138 = vmatpush2.bf16.xpose.msra.mxu0 0
    %2139 = vmatprep.subr.bf16.mxu0 0
    %2140 = vmatpush2.bf16.xpose.msra.mxu0 0
    %2141 = vmatprep.subr.bf16.mxu0 0
    %2142 = vmatpush2.bf16.xpose.msra.mxu0 0
    %2143 = vmatprep.subr.bf16.mxu0 0
    %2144 = vmatpush2.bf16.xpose.msra.mxu0 0
    %2145 = vmatprep.subr.bf16.mxu0 0
    %2146 = vmatpush2.bf16.xpose.msra.mxu0 0
    %2147 = vmatprep.subr.bf16.mxu0 0
    %2148 = vmatpush2.bf16.xpose.msra.mxu0 0
    %2149 = vmatprep.subr.bf16.mxu0 0
    %2150 = vmatpush2.bf16.xpose.msra.mxu0 0
    %2151 = vmatprep.mubr.bf16.mxu0 0
    %2152 = vmatmul.mubr.bf16.gmra.mxu0 %v2114
    %v2153 = vpop.f32.mrf.mxu0
    %v2154 = vadd.f32 0.0, %v2153
    %v2155 = vpop.f32.mrf.mxu0
    %v2156 = vpop.f32.mrf.mxu0
    %v2157 = vpop.f32.mrf.mxu0
    %2158 = vdwg.mxu0
    %v2159 = vmul.f32 %v2154, 0.35355338
    %v2160 = vsel %vm1995, -1e+09, %v2159
    %v2161 = vsel %vm331, %v2160, -inf
    %2162 = vmax.xlane.f32.xlu0 %v2161
    %v2163 = vpop.xlane.xlu0 %2162
    %v2164 = vsub.f32 %v2160, %v2163
    %v2165 = vmul.f32 %v2164, 1.442695
    %v2166 = vpow.pop %v2165
    %v2167 = vsel %vm331, %v2166, 0.0
    %2168 = vadd.xlane.f32.xlu0 %v2167
    %v2169 = vpop.xlane.xlu0 %2168
    %v2170 = vrcp.pop %v2169
    %v2171 = vmul.f32 %v2166, %v2170
    %v2172 = vpack.c.bf16 %v2171, %v2171
    %2173 = vrot.lane.b32.xlu0 %v1997, 88
    %v2174 = vpop.permute.xlu0 %2173
    %v2176 = vsel %vm331, %v2172, 0
    %v2179 = vsel %vm397, %v2174, 0
    %2181 = vmatprep.subr.bf16.mxu0 0
    %2182 = vmatpush1.bf16.msra.mxu0 0
    %2183 = vmatprep.subr.bf16.mxu0 0
    %2184 = vmatpush1.bf16.msra.mxu0 0
    %2185 = vmatprep.subr.bf16.mxu0 0
    %2186 = vmatpush1.bf16.msra.mxu0 0
    %2187 = vmatprep.subr.bf16.mxu0 0
    %2188 = vmatpush1.bf16.msra.mxu0 0
    %2189 = vmatprep.subr.bf16.mxu0 0
    %2190 = vmatpush1.bf16.msra.mxu0 0
    %2191 = vmatprep.subr.bf16.mxu0 0
    %2192 = vmatpush1.bf16.msra.mxu0 0
    %2193 = vmatprep.subr.bf16.mxu0 0
    %2194 = vmatpush1.bf16.msra.mxu0 0
    %2195 = vmatprep.subr.bf16.mxu0 0
    %2196 = vmatpush1.bf16.msra.mxu0 %v2179
    %2197 = vmatprep.subr.bf16.mxu0 0
    %2198 = vmatpush2.bf16.msra.mxu0 0
    %2199 = vmatprep.subr.bf16.mxu0 0
    %2200 = vmatpush2.bf16.msra.mxu0 0
    %2201 = vmatprep.subr.bf16.mxu0 0
    %2202 = vmatpush2.bf16.msra.mxu0 0
    %2203 = vmatprep.subr.bf16.mxu0 0
    %2204 = vmatpush2.bf16.msra.mxu0 0
    %2205 = vmatprep.subr.bf16.mxu0 0
    %2206 = vmatpush2.bf16.msra.mxu0 0
    %2207 = vmatprep.subr.bf16.mxu0 0
    %2208 = vmatpush2.bf16.msra.mxu0 0
    %2209 = vmatprep.subr.bf16.mxu0 0
    %2210 = vmatpush2.bf16.msra.mxu0 0
    %2211 = vmatprep.subr.bf16.mxu0 0
    %2212 = vmatpush2.bf16.msra.mxu0 0
    %2213 = vmatprep.mubr.bf16.mxu0 0
    %2214 = vmatmul.mubr.bf16.gmra.mxu0 %v2176
    %v2215 = vpop.f32.mrf.mxu0
    %v2216 = vadd.f32 0.0, %v2215
    %v2217 = vpop.f32.mrf.mxu0
    %v2218 = vpop.f32.mrf.mxu0
    %v2219 = vpop.f32.mrf.mxu0
    %2220 = vdwg.mxu0
    %2222 = vrot.lane.b32.xlu0 %v2216, 8
    %v2223 = vpop.permute.xlu0 %2222
    %2225 = vst.msk [vmem:[#allocation2 + $0x8] sm:$0xff] %vm558, %v2223
    %2226 = vrot.lane.b32.xlu0 %v1996, 112
    %v2227 = vpop.permute.xlu0 %2226
    %2228 = vrot.lane.b32.xlu0 %v1997, 112
    %v2229 = vpop.permute.xlu0 %2228
    %v2231 = vsel %vm331, %v2227, 0
    %v2234 = vsel %vm331, %v2229, 0
    %2236 = vmatprep.subr.bf16.mxu0 0
    %2237 = vmatpush1.bf16.xpose.msra.mxu0 0
    %2238 = vmatprep.subr.bf16.mxu0 0
    %2239 = vmatpush1.bf16.xpose.msra.mxu0 0
    %2240 = vmatprep.subr.bf16.mxu0 0
    %2241 = vmatpush1.bf16.xpose.msra.mxu0 0
    %2242 = vmatprep.subr.bf16.mxu0 0
    %2243 = vmatpush1.bf16.xpose.msra.mxu0 0
    %2244 = vmatprep.subr.bf16.mxu0 0
    %2245 = vmatpush1.bf16.xpose.msra.mxu0 0
    %2246 = vmatprep.subr.bf16.mxu0 0
    %2247 = vmatpush1.bf16.xpose.msra.mxu0 0
    %2248 = vmatprep.subr.bf16.mxu0 0
    %2249 = vmatpush1.bf16.xpose.msra.mxu0 0
    %2250 = vmatprep.subr.bf16.mxu0 0
    %2251 = vmatpush1.bf16.xpose.msra.mxu0 %v2234
    %2252 = vmatprep.subr.bf16.mxu0 0
    %2253 = vmatpush2.bf16.xpose.msra.mxu0 0
    %2254 = vmatprep.subr.bf16.mxu0 0
    %2255 = vmatpush2.bf16.xpose.msra.mxu0 0
    %2256 = vmatprep.subr.bf16.mxu0 0
    %2257 = vmatpush2.bf16.xpose.msra.mxu0 0
    %2258 = vmatprep.subr.bf16.mxu0 0
    %2259 = vmatpush2.bf16.xpose.msra.mxu0 0
    %2260 = vmatprep.subr.bf16.mxu0 0
    %2261 = vmatpush2.bf16.xpose.msra.mxu0 0
    %2262 = vmatprep.subr.bf16.mxu0 0
    %2263 = vmatpush2.bf16.xpose.msra.mxu0 0
    %2264 = vmatprep.subr.bf16.mxu0 0
    %2265 = vmatpush2.bf16.xpose.msra.mxu0 0
    %2266 = vmatprep.subr.bf16.mxu0 0
    %2267 = vmatpush2.bf16.xpose.msra.mxu0 0
    %2268 = vmatprep.mubr.bf16.mxu0 0
    %2269 = vmatmul.mubr.bf16.gmra.mxu0 %v2231
    %v2270 = vpop.f32.mrf.mxu0
    %v2271 = vadd.f32 0.0, %v2270
    %v2272 = vpop.f32.mrf.mxu0
    %v2273 = vpop.f32.mrf.mxu0
    %v2274 = vpop.f32.mrf.mxu0
    %2275 = vdwg.mxu0
    %v2276 = vmul.f32 %v2271, 0.35355338
    %v2277 = vsel %vm1995, -1e+09, %v2276
    %v2278 = vsel %vm331, %v2277, -inf
    %2279 = vmax.xlane.f32.xlu0 %v2278
    %v2280 = vpop.xlane.xlu0 %2279
    %v2281 = vsub.f32 %v2277, %v2280
    %v2282 = vmul.f32 %v2281, 1.442695
    %v2283 = vpow.pop %v2282
    %v2284 = vsel %vm331, %v2283, 0.0
    %2285 = vadd.xlane.f32.xlu0 %v2284
    %v2286 = vpop.xlane.xlu0 %2285
    %v2287 = vrcp.pop %v2286
    %v2288 = vmul.f32 %v2283, %v2287
    %v2289 = vpack.c.bf16 %v2288, %v2288
    %2290 = vrot.lane.b32.xlu0 %v1997, 80
    %v2291 = vpop.permute.xlu0 %2290
    %v2293 = vsel %vm331, %v2289, 0
    %v2296 = vsel %vm397, %v2291, 0
    %2298 = vmatprep.subr.bf16.mxu0 0
    %2299 = vmatpush1.bf16.msra.mxu0 0
    %2300 = vmatprep.subr.bf16.mxu0 0
    %2301 = vmatpush1.bf16.msra.mxu0 0
    %2302 = vmatprep.subr.bf16.mxu0 0
    %2303 = vmatpush1.bf16.msra.mxu0 0
    %2304 = vmatprep.subr.bf16.mxu0 0
    %2305 = vmatpush1.bf16.msra.mxu0 0
    %2306 = vmatprep.subr.bf16.mxu0 0
    %2307 = vmatpush1.bf16.msra.mxu0 0
    %2308 = vmatprep.subr.bf16.mxu0 0
    %2309 = vmatpush1.bf16.msra.mxu0 0
    %2310 = vmatprep.subr.bf16.mxu0 0
    %2311 = vmatpush1.bf16.msra.mxu0 0
    %2312 = vmatprep.subr.bf16.mxu0 0
    %2313 = vmatpush1.bf16.msra.mxu0 %v2296
    %2314 = vmatprep.subr.bf16.mxu0 0
    %2315 = vmatpush2.bf16.msra.mxu0 0
    %2316 = vmatprep.subr.bf16.mxu0 0
    %2317 = vmatpush2.bf16.msra.mxu0 0
    %2318 = vmatprep.subr.bf16.mxu0 0
    %2319 = vmatpush2.bf16.msra.mxu0 0
    %2320 = vmatprep.subr.bf16.mxu0 0
    %2321 = vmatpush2.bf16.msra.mxu0 0
    %2322 = vmatprep.subr.bf16.mxu0 0
    %2323 = vmatpush2.bf16.msra.mxu0 0
    %2324 = vmatprep.subr.bf16.mxu0 0
    %2325 = vmatpush2.bf16.msra.mxu0 0
    %2326 = vmatprep.subr.bf16.mxu0 0
    %2327 = vmatpush2.bf16.msra.mxu0 0
    %2328 = vmatprep.subr.bf16.mxu0 0
    %2329 = vmatpush2.bf16.msra.mxu0 0
    %2330 = vmatprep.mubr.bf16.mxu0 0
    %2331 = vmatmul.mubr.bf16.gmra.mxu0 %v2293
    %v2332 = vpop.f32.mrf.mxu0
    %v2333 = vadd.f32 0.0, %v2332
    %v2334 = vpop.f32.mrf.mxu0
    %v2335 = vpop.f32.mrf.mxu0
    %v2336 = vpop.f32.mrf.mxu0
    %2337 = vdwg.mxu0
    %2339 = vrot.lane.b32.xlu0 %v2333, 16
    %v2340 = vpop.permute.xlu0 %2339
    %2342 = vst.msk [vmem:[#allocation2 + $0x8] sm:$0xff] %vm676, %v2340
    %2343 = vrot.lane.b32.xlu0 %v1996, 104
    %v2344 = vpop.permute.xlu0 %2343
    %2345 = vrot.lane.b32.xlu0 %v1997, 104
    %v2346 = vpop.permute.xlu0 %2345
    %v2348 = vsel %vm331, %v2344, 0
    %v2351 = vsel %vm331, %v2346, 0
    %2353 = vmatprep.subr.bf16.mxu0 0
    %2354 = vmatpush1.bf16.xpose.msra.mxu0 0
    %2355 = vmatprep.subr.bf16.mxu0 0
    %2356 = vmatpush1.bf16.xpose.msra.mxu0 0
    %2357 = vmatprep.subr.bf16.mxu0 0
    %2358 = vmatpush1.bf16.xpose.msra.mxu0 0
    %2359 = vmatprep.subr.bf16.mxu0 0
    %2360 = vmatpush1.bf16.xpose.msra.mxu0 0
    %2361 = vmatprep.subr.bf16.mxu0 0
    %2362 = vmatpush1.bf16.xpose.msra.mxu0 0
    %2363 = vmatprep.subr.bf16.mxu0 0
    %2364 = vmatpush1.bf16.xpose.msra.mxu0 0
    %2365 = vmatprep.subr.bf16.mxu0 0
    %2366 = vmatpush1.bf16.xpose.msra.mxu0 0
    %2367 = vmatprep.subr.bf16.mxu0 0
    %2368 = vmatpush1.bf16.xpose.msra.mxu0 %v2351
    %2369 = vmatprep.subr.bf16.mxu0 0
    %2370 = vmatpush2.bf16.xpose.msra.mxu0 0
    %2371 = vmatprep.subr.bf16.mxu0 0
    %2372 = vmatpush2.bf16.xpose.msra.mxu0 0
    %2373 = vmatprep.subr.bf16.mxu0 0
    %2374 = vmatpush2.bf16.xpose.msra.mxu0 0
    %2375 = vmatprep.subr.bf16.mxu0 0
    %2376 = vmatpush2.bf16.xpose.msra.mxu0 0
    %2377 = vmatprep.subr.bf16.mxu0 0
    %2378 = vmatpush2.bf16.xpose.msra.mxu0 0
    %2379 = vmatprep.subr.bf16.mxu0 0
    %2380 = vmatpush2.bf16.xpose.msra.mxu0 0
    %2381 = vmatprep.subr.bf16.mxu0 0
    %2382 = vmatpush2.bf16.xpose.msra.mxu0 0
    %2383 = vmatprep.subr.bf16.mxu0 0
    %2384 = vmatpush2.bf16.xpose.msra.mxu0 0
    %2385 = vmatprep.mubr.bf16.mxu0 0
    %2386 = vmatmul.mubr.bf16.gmra.mxu0 %v2348
    %v2387 = vpop.f32.mrf.mxu0
    %v2388 = vadd.f32 0.0, %v2387
    %v2389 = vpop.f32.mrf.mxu0
    %v2390 = vpop.f32.mrf.mxu0
    %v2391 = vpop.f32.mrf.mxu0
    %2392 = vdwg.mxu0
    %v2393 = vmul.f32 %v2388, 0.35355338
    %v2394 = vsel %vm1995, -1e+09, %v2393
    %v2395 = vsel %vm331, %v2394, -inf
    %2396 = vmax.xlane.f32.xlu0 %v2395
    %v2397 = vpop.xlane.xlu0 %2396
    %v2398 = vsub.f32 %v2394, %v2397
    %v2399 = vmul.f32 %v2398, 1.442695
    %v2400 = vpow.pop %v2399
    %v2401 = vsel %vm331, %v2400, 0.0
    %2402 = vadd.xlane.f32.xlu0 %v2401
    %v2403 = vpop.xlane.xlu0 %2402
    %v2404 = vrcp.pop %v2403
    %v2405 = vmul.f32 %v2400, %v2404
    %v2406 = vpack.c.bf16 %v2405, %v2405
    %2407 = vrot.lane.b32.xlu0 %v1997, 72
    %v2408 = vpop.permute.xlu0 %2407
    %v2410 = vsel %vm331, %v2406, 0
    %v2413 = vsel %vm397, %v2408, 0
    %2415 = vmatprep.subr.bf16.mxu0 0
    %2416 = vmatpush1.bf16.msra.mxu0 0
    %2417 = vmatprep.subr.bf16.mxu0 0
    %2418 = vmatpush1.bf16.msra.mxu0 0
    %2419 = vmatprep.subr.bf16.mxu0 0
    %2420 = vmatpush1.bf16.msra.mxu0 0
    %2421 = vmatprep.subr.bf16.mxu0 0
    %2422 = vmatpush1.bf16.msra.mxu0 0
    %2423 = vmatprep.subr.bf16.mxu0 0
    %2424 = vmatpush1.bf16.msra.mxu0 0
    %2425 = vmatprep.subr.bf16.mxu0 0
    %2426 = vmatpush1.bf16.msra.mxu0 0
    %2427 = vmatprep.subr.bf16.mxu0 0
    %2428 = vmatpush1.bf16.msra.mxu0 0
    %2429 = vmatprep.subr.bf16.mxu0 0
    %2430 = vmatpush1.bf16.msra.mxu0 %v2413
    %2431 = vmatprep.subr.bf16.mxu0 0
    %2432 = vmatpush2.bf16.msra.mxu0 0
    %2433 = vmatprep.subr.bf16.mxu0 0
    %2434 = vmatpush2.bf16.msra.mxu0 0
    %2435 = vmatprep.subr.bf16.mxu0 0
    %2436 = vmatpush2.bf16.msra.mxu0 0
    %2437 = vmatprep.subr.bf16.mxu0 0
    %2438 = vmatpush2.bf16.msra.mxu0 0
    %2439 = vmatprep.subr.bf16.mxu0 0
    %2440 = vmatpush2.bf16.msra.mxu0 0
    %2441 = vmatprep.subr.bf16.mxu0 0
    %2442 = vmatpush2.bf16.msra.mxu0 0
    %2443 = vmatprep.subr.bf16.mxu0 0
    %2444 = vmatpush2.bf16.msra.mxu0 0
    %2445 = vmatprep.subr.bf16.mxu0 0
    %2446 = vmatpush2.bf16.msra.mxu0 0
    %2447 = vmatprep.mubr.bf16.mxu0 0
    %2448 = vmatmul.mubr.bf16.gmra.mxu0 %v2410
    %v2449 = vpop.f32.mrf.mxu0
    %v2450 = vadd.f32 0.0, %v2449
    %v2451 = vpop.f32.mrf.mxu0
    %v2452 = vpop.f32.mrf.mxu0
    %v2453 = vpop.f32.mrf.mxu0
    %2454 = vdwg.mxu0
    %2456 = vrot.lane.b32.xlu0 %v2450, 24
    %v2457 = vpop.permute.xlu0 %2456
    %2459 = vst.msk [vmem:[#allocation2 + $0x8] sm:$0xff] %vm794, %v2457
    %v2460 = vld [vmem:[#allocation2] sm:$0xff]
    %v2461 = vld [vmem:[#allocation2 + $0x8] sm:$0xff]
    %v2462 = vpack.c.bf16 %v2461, %v2460
    %v2463 = vld [vmem:[#allocation17] sm:$0xf]
    %v2464 = vld [vmem:[#allocation17 + $0x4] sm:$0xf]
    %v2465 = vld [vmem:[#allocation17 + $0x8] sm:$0xf]
    %v2466 = vld [vmem:[#allocation17 + $0xc] sm:$0xf]
    %v2467 = vld [vmem:[%s13] sm:$0x1]
    %v2469 = vlaneseq
    %v2470 = vshrl.u32 %v2469, 7
    %v2471 = vsub.s32 0, %v2470
    %v2472 = vrot.slane %v2467, %v2471
    %v2478 = vunpack.c.l.b16 %v2463
    %v2479 = vunpack.c.l.b16 %v2464
    %v2480 = vunpack.c.l.b16 %v2465
    %v2481 = vunpack.c.l.b16 %v2466
    %v2482 = vpack.c.b16 %v2479, %v2478
    %v2483 = vpack.c.b16 %v2481, %v2480
    %v2487 = vsel %vm201, %v2462, 0
    %2489 = vmatprep.subr.bf16.mxu0 0
    %2490 = vmatpush1.bf16.msra.mxu0 0
    %2491 = vmatprep.subr.bf16.mxu0 0
    %2492 = vmatpush1.bf16.msra.mxu0 0
    %2493 = vmatprep.subr.bf16.mxu0 0
    %2494 = vmatpush1.bf16.msra.mxu0 0
    %2495 = vmatprep.subr.bf16.mxu0 0
    %2496 = vmatpush1.bf16.msra.mxu0 0
    %2497 = vmatprep.subr.bf16.mxu0 0
    %2498 = vmatpush1.bf16.msra.mxu0 0
    %2499 = vmatprep.subr.bf16.mxu0 0
    %2500 = vmatpush1.bf16.msra.mxu0 0
    %2501 = vmatprep.subr.bf16.mxu0 0
    %2502 = vmatpush1.bf16.msra.mxu0 %v2483
    %2503 = vmatprep.subr.bf16.mxu0 0
    %2504 = vmatpush1.bf16.msra.mxu0 %v2482
    %2505 = vmatprep.subr.bf16.mxu0 0
    %2506 = vmatpush2.bf16.msra.mxu0 0
    %2507 = vmatprep.subr.bf16.mxu0 0
    %2508 = vmatpush2.bf16.msra.mxu0 0
    %2509 = vmatprep.subr.bf16.mxu0 0
    %2510 = vmatpush2.bf16.msra.mxu0 0
    %2511 = vmatprep.subr.bf16.mxu0 0
    %2512 = vmatpush2.bf16.msra.mxu0 0
    %2513 = vmatprep.subr.bf16.mxu0 0
    %2514 = vmatpush2.bf16.msra.mxu0 0
    %2515 = vmatprep.subr.bf16.mxu0 0
    %2516 = vmatpush2.bf16.msra.mxu0 0
    %2517 = vmatprep.subr.bf16.mxu0 0
    %2518 = vmatpush2.bf16.msra.mxu0 0
    %2519 = vmatprep.subr.bf16.mxu0 0
    %2520 = vmatpush2.bf16.msra.mxu0 0
    %2521 = vmatprep.mubr.bf16.mxu0 0
    %2522 = vmatmul.mubr.bf16.gmra.mxu0 %v2487
    %v2523 = vpop.f32.mrf.mxu0
    %v2524 = vadd.f32 %v2472, %v2523
    %v2525 = vpop.f32.mrf.mxu0
    %v2526 = vpop.f32.mrf.mxu0
    %v2527 = vadd.f32 %v2472, %v2526
    %v2528 = vpop.f32.mrf.mxu0
    %2529 = vdwg.mxu0
    %v2530 = vadd.f32 %v1333, %v2524
    %v2531 = vadd.f32 %v1334, %v2527
    %v2532 = vld [vmem:[%s18 + $0x2] sm:$0x1]
    %v2533 = vld [vmem:[%s19 + $0x2] sm:$0x1]
    %v2534 = vsel %vm201, %v2530, 0.0
    %2535 = vadd.xlane.f32.xlu0 %v2534
    %v2536 = vpop.xlane.xlu0 %2535
    %v2537 = vsel %vm201, %v2531, 0.0
    %2538 = vadd.xlane.f32.xlu0 %v2537
    %v2539 = vpop.xlane.xlu0 %2538
    %v2540 = vmul.f32 %v2536, %v208
    %v2541 = vmul.f32 %v2539, %v208
    %v2542 = vsub.f32 %v2530, %v2540
    %v2543 = vsub.f32 %v2531, %v2541
    %v2544 = vmul.f32 %v2542, %v2542
    %v2545 = vmul.f32 %v2543, %v2543
    %v2546 = vsel %vm201, %v2544, 0.0
    %2547 = vadd.xlane.f32.xlu0 %v2546
    %v2548 = vpop.xlane.xlu0 %2547
    %v2549 = vsel %vm201, %v2545, 0.0
    %2550 = vadd.xlane.f32.xlu0 %v2549
    %v2551 = vpop.xlane.xlu0 %2550
    %v2552 = vmul.f32 %v2548, 0.032258064
    %v2553 = vmul.f32 %v2551, 0.032258064
    %v2554 = vrsqrt.pop %v2552
    %v2555 = vmul.f32 %v2552, %v2554
    %vm2556 = vcmp.eq.f32.partialorder %v2552, inf
    %v2557 = vsel %vm2556, %v2552, %v2555
    %vm2558 = vcmp.eq.f32.partialorder %v2552, 0.0
    %v2559 = vand.u32 %v2552, 2147483648
    %v2560 = vsel %vm2558, %v2559, %v2557
    %v2561 = vrsqrt.pop %v2553
    %v2562 = vmul.f32 %v2553, %v2561
    %vm2563 = vcmp.eq.f32.partialorder %v2553, inf
    %v2564 = vsel %vm2563, %v2553, %v2562
    %vm2565 = vcmp.eq.f32.partialorder %v2553, 0.0
    %v2566 = vand.u32 %v2553, 2147483648
    %v2567 = vsel %vm2565, %v2566, %v2564
    %v2568 = vadd.f32 %v2560, 1e-06
    %v2569 = vadd.f32 %v2567, 1e-06
    %v2570 = vrcp.pop %v2568
    %v2571 = vmul.f32 1.0, %v2570
    %v2572 = vrcp.pop %v2569
    %v2573 = vmul.f32 1.0, %v2572
    %v2574 = vmul.f32 %v2542, %v2571
    %v2575 = vmul.f32 %v2543, %v2573
    %v2576 = vlaneseq
    %v2577 = vshrl.u32 %v2576, 7
    %v2578 = vsub.s32 0, %v2577
    %v2579 = vrot.slane %v2532, %v2578
    %v2580 = vmul.f32 %v2579, %v2574
    %v2581 = vmul.f32 %v2579, %v2575
    %v2582 = vlaneseq
    %v2583 = vshrl.u32 %v2582, 7
    %v2584 = vsub.s32 0, %v2583
    %v2585 = vrot.slane %v2533, %v2584
    %v2586 = vadd.f32 %v2580, %v2585
    %v2587 = vadd.f32 %v2581, %v2585
    %v2588 = vpack.c.bf16 %v2587, %v2586
    %v2589 = vld [vmem:[#allocation18] sm:$0xf]
    %v2590 = vld [vmem:[#allocation18 + $0x4] sm:$0xf]
    %v2591 = vld [vmem:[#allocation18 + $0x8] sm:$0xf]
    %v2592 = vld [vmem:[#allocation18 + $0xc] sm:$0xf]
    %v2593 = vld [vmem:[%s15] sm:$0x1]
    %v2595 = vlaneseq
    %v2596 = vshrl.u32 %v2595, 7
    %v2597 = vsub.s32 0, %v2596
    %v2598 = vrot.slane %v2593, %v2597
    %v2604 = vunpack.c.l.b16 %v2589
    %v2605 = vunpack.c.l.b16 %v2590
    %v2606 = vunpack.c.l.b16 %v2591
    %v2607 = vunpack.c.l.b16 %v2592
    %v2608 = vpack.c.b16 %v2605, %v2604
    %v2609 = vpack.c.b16 %v2607, %v2606
    %v2613 = vsel %vm201, %v2588, 0
    %2615 = vmatprep.subr.bf16.mxu0 0
    %2616 = vmatpush1.bf16.msra.mxu0 0
    %2617 = vmatprep.subr.bf16.mxu0 0
    %2618 = vmatpush1.bf16.msra.mxu0 0
    %2619 = vmatprep.subr.bf16.mxu0 0
    %2620 = vmatpush1.bf16.msra.mxu0 0
    %2621 = vmatprep.subr.bf16.mxu0 0
    %2622 = vmatpush1.bf16.msra.mxu0 0
    %2623 = vmatprep.subr.bf16.mxu0 0
    %2624 = vmatpush1.bf16.msra.mxu0 0
    %2625 = vmatprep.subr.bf16.mxu0 0
    %2626 = vmatpush1.bf16.msra.mxu0 0
    %2627 = vmatprep.subr.bf16.mxu0 0
    %2628 = vmatpush1.bf16.msra.mxu0 %v2609
    %2629 = vmatprep.subr.bf16.mxu0 0
    %2630 = vmatpush1.bf16.msra.mxu0 %v2608
    %2631 = vmatprep.subr.bf16.mxu0 0
    %2632 = vmatpush2.bf16.msra.mxu0 0
    %2633 = vmatprep.subr.bf16.mxu0 0
    %2634 = vmatpush2.bf16.msra.mxu0 0
    %2635 = vmatprep.subr.bf16.mxu0 0
    %2636 = vmatpush2.bf16.msra.mxu0 0
    %2637 = vmatprep.subr.bf16.mxu0 0
    %2638 = vmatpush2.bf16.msra.mxu0 0
    %2639 = vmatprep.subr.bf16.mxu0 0
    %2640 = vmatpush2.bf16.msra.mxu0 0
    %2641 = vmatprep.subr.bf16.mxu0 0
    %2642 = vmatpush2.bf16.msra.mxu0 0
    %2643 = vmatprep.subr.bf16.mxu0 0
    %2644 = vmatpush2.bf16.msra.mxu0 0
    %2645 = vmatprep.subr.bf16.mxu0 0
    %2646 = vmatpush2.bf16.msra.mxu0 0
    %2647 = vmatprep.mubr.bf16.mxu0 0
    %2648 = vmatmul.mubr.bf16.gmra.mxu0 %v2613
    %v2649 = vpop.f32.mrf.mxu0
    %v2650 = vadd.f32 %v2598, %v2649
    %v2651 = vpop.f32.mrf.mxu0
    %v2652 = vpop.f32.mrf.mxu0
    %v2653 = vadd.f32 %v2598, %v2652
    %v2654 = vpop.f32.mrf.mxu0
    %2655 = vdwg.mxu0
    %v2656 = vmax.f32 %v2650, 0.0
    %v2657 = vmax.f32 %v2653, 0.0
    %v2658 = vpack.c.bf16 %v2657, %v2656
    %v2659 = vld [vmem:[%s16] sm:$0xf]
    %v2660 = vld [vmem:[%s16 + $0x4] sm:$0xf]
    %v2661 = vld [vmem:[%s16 + $0x8] sm:$0xf]
    %v2662 = vld [vmem:[%s16 + $0xc] sm:$0xf]
    %v2663 = vld [vmem:[%s16 + $0x10] sm:$0xf]
    %v2664 = vld [vmem:[%s16 + $0x14] sm:$0xf]
    %v2665 = vld [vmem:[%s16 + $0x18] sm:$0xf]
    %v2666 = vld [vmem:[%s16 + $0x1c] sm:$0xf]
    %v2675 = vunpack.c.l.b16 %v2659
    %v2676 = vunpack.c.l.b16 %v2660
    %v2677 = vunpack.c.l.b16 %v2661
    %v2678 = vunpack.c.l.b16 %v2662
    %v2679 = vunpack.c.l.b16 %v2663
    %v2680 = vunpack.c.l.b16 %v2664
    %v2681 = vunpack.c.l.b16 %v2665
    %v2682 = vunpack.c.l.b16 %v2666
    %v2683 = vpack.c.b16 %v2676, %v2675
    %v2684 = vpack.c.b16 %v2678, %v2677
    %v2685 = vpack.c.b16 %v2680, %v2679
    %v2686 = vpack.c.b16 %v2682, %v2681
    %vm2691 = vcmask 523264
    %v2693 = vsel %vm2691, %v2658, 0
    %2695 = vmatprep.subr.bf16.mxu0 0
    %2696 = vmatpush1.bf16.msra.mxu0 0
    %2697 = vmatprep.subr.bf16.mxu0 0
    %2698 = vmatpush1.bf16.msra.mxu0 0
    %2699 = vmatprep.subr.bf16.mxu0 0
    %2700 = vmatpush1.bf16.msra.mxu0 0
    %2701 = vmatprep.subr.bf16.mxu0 0
    %2702 = vmatpush1.bf16.msra.mxu0 0
    %2703 = vmatprep.subr.bf16.mxu0 0
    %2704 = vmatpush1.bf16.msra.mxu0 %v2686
    %2705 = vmatprep.subr.bf16.mxu0 0
    %2706 = vmatpush1.bf16.msra.mxu0 %v2685
    %2707 = vmatprep.subr.bf16.mxu0 0
    %2708 = vmatpush1.bf16.msra.mxu0 %v2684
    %2709 = vmatprep.subr.bf16.mxu0 0
    %2710 = vmatpush1.bf16.msra.mxu0 %v2683
    %2711 = vmatprep.subr.bf16.mxu0 0
    %2712 = vmatpush2.bf16.msra.mxu0 0
    %2713 = vmatprep.subr.bf16.mxu0 0
    %2714 = vmatpush2.bf16.msra.mxu0 0
    %2715 = vmatprep.subr.bf16.mxu0 0
    %2716 = vmatpush2.bf16.msra.mxu0 0
    %2717 = vmatprep.subr.bf16.mxu0 0
    %2718 = vmatpush2.bf16.msra.mxu0 0
    %2719 = vmatprep.subr.bf16.mxu0 0
    %2720 = vmatpush2.bf16.msra.mxu0 0
    %2721 = vmatprep.subr.bf16.mxu0 0
    %2722 = vmatpush2.bf16.msra.mxu0 0
    %2723 = vmatprep.subr.bf16.mxu0 0
    %2724 = vmatpush2.bf16.msra.mxu0 0
    %2725 = vmatprep.subr.bf16.mxu0 0
    %2726 = vmatpush2.bf16.msra.mxu0 0
    %2727 = vmatprep.mubr.bf16.mxu0 0
    %2728 = vmatmul.mubr.bf16.gmra.mxu0 %v2693
    %v2729 = vpop.f32.mrf.mxu0
    %v2730 = vadd.f32 0.0, %v2729
    %v2731 = vpop.f32.mrf.mxu0
    %v2732 = vpop.f32.mrf.mxu0
    %v2733 = vadd.f32 0.0, %v2732
    %v2734 = vpop.f32.mrf.mxu0
    %2735 = vdwg.mxu0
    %v2736 = vadd.f32 %v2530, %v2730
    %v2737 = vadd.f32 %v2531, %v2733
    %v2738 = vld [vmem:[%s17] sm:$0x1]
    %v2740 = vlaneseq
    %v2741 = vshrl.u32 %v2740, 7
    %v2742 = vsub.s32 0, %v2741
    %v2743 = vrot.slane %v2738, %v2742
    %v2745 = vadd.f32 %v2736, %v2743
    %v2746 = vadd.f32 %v2737, %v2743
    %2747 = vst.msk [vmem:[#allocation20] sm:$0xff] %vm201, %v2745
    %2748 = vst.msk [vmem:[#allocation20 + $0x8] sm:$0xff] %vm201, %v2746
    // Predicated region
    $region122: #{tpu_custom_call.1} parent=1 // pred_check
      _
    $region123: #{tpu_custom_call.1} parent=1 // pred_check_branch
      %2750 = sbr.rel (0) target = $region125
    $region124: #{tpu_custom_call.1} parent=1 // pred_region
      %s2752 = ssub.s32 256, 256
      %2753 = vsyncadd [#allocation5], %s2752
      %s2754 = sshll.u32 [#allocation20], 4
      %s2755 = int_to_ptr.vmem [resolvable:$true] %s2754
      %2760 = dma.vmem_to_hbm [thread:$0]  %s2755, 256, %s20, [#allocation5], 128, 128, 8
    $region125: #{tpu_custom_call.1} parent=1 // pred_fallthru
      _
    // Predicated region
    $region126: #{tpu_custom_call.1} parent=1 // pred_check
      _
    $region127: #{tpu_custom_call.1} parent=1 // pred_check_branch
      %2762 = sbr.rel (0) target = $region129
    $region128: #{tpu_custom_call.1} parent=1 // pred_region
      %2763 = dma.done [#allocation5], 256
    $region129: #{tpu_custom_call.1} parent=1 // pred_fallthru
      _
    %2764 = vsyncpa [#allocation4], 1
    %2765 = vsyncpa [#allocation7], 1
    %2766 = vsyncpa [#allocation10], 1
    %2767 = vsyncpa [#allocation13], 1
    %2768 = vsyncpa [#allocation16], 1
    %2769 = vsyncpa [#allocation19], 1
    %2770 = vsyncpa [#allocation5], 1

</llo_original>
